<compile_context>
chip_gen: v5e
topology: v5e:2x2
jax: 0.10.0
libtpu: 0.0.40
codegen_flags: <defaults>
</compile_context>

<pallas_src>
import functools
import time

import jax
import jax.numpy as jnp
from jax.experimental import pallas as pl
from jax.experimental.pallas import tpu as pltpu

_LANE = 128
_VMEM_LIMIT_BYTES = 32 * 1024 * 1024   # safe on v5e/v6e (128 MiB phys) and v7x (64 MiB)
_TOTAL_BUF_BUDGET = 16 * 1024 * 1024   # 2 x (input + output) double-buffered blocks


def _sublane_granule(dtype):
    # second-minor packing granule: 8 rows (f32), 16 (bf16), 32 (int8 / fp8)
    return max(8, 32 // jnp.dtype(dtype).itemsize)


def _round_up(x, m):
    return ((x + m - 1) // m) * m


def _padded_bytes(block_shape, dtype):
    """VMEM bytes Mosaic actually allocates for one buffer of `block_shape`:
    last dim padded to 128 lanes, second-minor padded to the sublane granule."""
    item = jnp.dtype(dtype).itemsize
    granule = _sublane_granule(dtype)
    lead = 1
    for d in block_shape[:-2]:
        lead *= d
    return lead * _round_up(block_shape[-2], granule) * _round_up(block_shape[-1], _LANE) * item


def _divisor_candidates(total, step):
    """Multiples of `step` that divide `total` (descending).  Falls back to the
    full extent, which is always layout-legal as a block dim."""
    cands = [d for d in range(step, total + 1, step) if total % d == 0]
    return sorted(cands, reverse=True) if cands else [total]


def _choose_blocks(NC, HW, T, dtype, dense):
    """Pick (nc_blk, hw_blk) so that:
       - the output block minor dim (hw_blk) is a multiple of 128 -> unmasked stores,
       - 2 x (in + out) *padded* buffers fit the scoped-VMEM budget,
       - the per-step input block stays ~1 MiB-class (amortises the ~0.35 us/step
         pipeline overhead without a huge unrolled in-core relayout),
       - the grid keeps >= 8 steps whenever the problem size allows it."""
    # TODO(synk): for feature maps where H*W is not a multiple of 128 (e.g. 14x14),
    # pad HW in the wrapper so edge stores stay unmasked; such shapes currently use
    # a full-extent HW block (correct, but the tail lane-tile store is masked).
    item = jnp.dtype(dtype).itemsize
    nc_cands = _divisor_candidates(NC, _sublane_granule(dtype))
    hw_cands = _divisor_candidates(HW, _LANE)
    in_cap = (1 << 20) if dense else (2 << 20)   # padded bytes per input buffer

    best = None
    for nc_blk in nc_cands:
        for hw_blk in hw_cands:
            if dense:
                in_b = _padded_bytes((nc_blk, hw_blk * T), dtype)
            else:
                in_b = _padded_bytes((nc_blk, hw_blk, T), dtype)
            out_b = _padded_bytes((nc_blk, T, hw_blk), dtype)
            if in_b > in_cap or 2 * (in_b + out_b) > _TOTAL_BUF_BUDGET:
                continue
            steps = pl.cdiv(NC, nc_blk) * pl.cdiv(HW, hw_blk)
            nominal = nc_blk * hw_blk * T * item
            score = (min(steps, 8), nominal, hw_blk)
            if best is None or score > best[0]:
                best = (score, nc_blk, hw_blk)
    if best is None:
        # Only the always-legal smallest candidates remain; take them even if they
        # exceed the soft caps (vmem_limit_bytes still bounds the compile).
        return nc_cands[-1], hw_cands[-1]
    return best[1], best[2]


@functools.lru_cache(maxsize=None)
def _fold_call(NC, HW, T, dtype_str, dense):
    """Build (and jit) one pallas_call for the chosen layout path."""
    dtype = jnp.dtype(dtype_str)
    nc_blk, hw_blk = _choose_blocks(NC, HW, T, dtype, dense)
    # HW-block axis leads: its extent is the one we control (more likely even and
    # >= 2 -> balanced megacore split on v7x); nc-blocks iterate innermost.
    grid = (pl.cdiv(HW, hw_blk), pl.cdiv(NC, nc_blk))

    if dense:
        # Lane-dense input tile (nc_blk, hw_blk*T): padded bytes == nominal bytes.
        in_spec = pl.BlockSpec((nc_blk, hw_blk * T), lambda j, i: (i, j))

        def kernel(x_ref, o_ref):
            x = x_ref[...]                                # (nc_blk, hw_blk*T), dense lanes
            x = x.reshape(nc_blk, hw_blk, T)              # de-interleave view of the slab
            o_ref[...] = jnp.transpose(x, (0, 2, 1))      # in-VMEM relayout, one dense store
    else:
        # Known-good fallback layout: T on the lane dim (padded to 128 in VMEM).
        in_spec = pl.BlockSpec((nc_blk, hw_blk, T), lambda j, i: (i, j, 0))

        def kernel(x_ref, o_ref):
            o_ref[...] = jnp.transpose(x_ref[...], (0, 2, 1))

    out_spec = pl.BlockSpec((nc_blk, T, hw_blk), lambda j, i: (i, 0, j))
    item = jnp.dtype(dtype).itemsize

    call = pl.pallas_call(
        kernel,
        out_shape=jax.ShapeDtypeStruct((NC, T, HW), dtype),
        grid_spec=pltpu.PrefetchScalarGridSpec(
            num_scalar_prefetch=0,
            grid=grid,
            in_specs=[in_spec],
            out_specs=out_spec,
        ),
        compiler_params=pltpu.CompilerParams(
            dimension_semantics=("parallel", "parallel"),
            vmem_limit_bytes=_VMEM_LIMIT_BYTES,
        ),
        cost_estimate=pl.CostEstimate(
            flops=0,
            transcendentals=0,
            bytes_accessed=2 * NC * HW * T * item,
        ),
    )
    return jax.jit(call)


_IMPL_CACHE = {}


def _best_time_s(fn, arg, iters=3):
    # Coarse wall-clock only (perf_counter over-counts at us scale); we only need
    # a >1.5x-class comparison between the two layout paths.
    jax.block_until_ready(fn(arg))
    best = float("inf")
    for _ in range(iters):
        t0 = time.perf_counter()
        jax.block_until_ready(fn(arg))
        best = min(best, time.perf_counter() - t0)
    return best


def _select_impl(NC, HW, T, dtype):
    """Once per (shape, dtype): keep the lane-dense path only if it lowers,
    matches a pure-JAX reference bit-for-bit, and is not slower than the
    known-good padded fallback."""
    key = (NC, HW, T, str(jnp.dtype(dtype)))
    if key in _IMPL_CACHE:
        return _IMPL_CACHE[key]

    probe = (jnp.arange(NC * HW * T, dtype=jnp.float32) % 8191.0).astype(dtype)
    x_pad = probe.reshape(NC, HW, T)
    x_dense = probe.reshape(NC, HW * T)
    ref = jnp.transpose(x_pad, (0, 2, 1))

    dtype_str = str(jnp.dtype(dtype))
    timings = {}
    for name, fn, arg in (
        ("dense", _fold_call(NC, HW, T, dtype_str, True), x_dense),
        ("padded", _fold_call(NC, HW, T, dtype_str, False), x_pad),
    ):
        try:
            out = jax.block_until_ready(fn(arg))
            if bool(jnp.array_equal(out, ref)):
                timings[name] = _best_time_s(fn, arg)
        except Exception:
            # Lowering / compile failure on this path -> skip it.
            pass

    impl = min(timings, key=timings.get) if timings else "padded"
    _IMPL_CACHE[key] = impl
    return impl


def fold2d(x):
    """Pallas equivalent of Fold2d.forward / .fold: (N, C, H, W, T) -> (N, C*T, H, W)."""
    # TODO(synk): Fold2d.unfold (the inverse relayout) is not needed by forward()
    # and is not implemented here.
    N, C, H, W, T = x.shape
    NC, HW = N * C, H * W
    dtype_str = str(jnp.dtype(x.dtype))
    impl = _select_impl(NC, HW, T, x.dtype)

    if impl == "dense":
        out = _fold_call(NC, HW, T, dtype_str, True)(x.reshape(NC, HW * T))
    else:
        out = _fold_call(NC, HW, T, dtype_str, False)(x.reshape(NC, HW, T))

    # Free (contiguous) reshape back to the PyTorch output layout:
    # (N*C, T, H*W) -> (N, C*T, H, W)   (channel index = c*T + t, i.e. permute+view).
    return out.reshape(N, C * T, H, W)


if __name__ == "__main__":
    # dims = (C, H, W, T) as in Fold2d(dims=...); H*W = 256 is a multiple of 128
    # so the output stores are fully lane-dense at this small test size.
    N, C, H, W, T = 2, 4, 16, 16, 8

    key = jax.random.PRNGKey(0)
    x = jax.random.normal(key, (N, C, H, W, T), dtype=jnp.float32)

    out = jax.block_until_ready(fold2d(x))

    # Pure-JAX reference of the PyTorch forward: permute(0,1,4,2,3).view(N, C*T, H, W).
    ref = jnp.transpose(x, (0, 1, 4, 2, 3)).reshape(N, C * T, H, W)

    assert out.shape == (N, C * T, H, W), out.shape
    assert out.dtype == x.dtype
    assert jnp.array_equal(out, ref), "mismatch vs reference fold"

    print("KERNEL_OK")
</pallas_src>

<mosaic_0001>
module attributes {stable_mosaic.version = 11 : i64} {
  func.func @kernel(%arg0: i32, %arg1: i32, %arg2: memref<8x1024xf32, #tpu.memory_space<vmem>>, %arg3: memref<8x8x128xf32, #tpu.memory_space<vmem>>) attributes {dimension_semantics = [#tpu.dimension_semantics<parallel>, #tpu.dimension_semantics<parallel>], iteration_bounds = array<i64: 2, 1>, scalar_prefetch = 0 : i64, scratch_operands = 0 : i64, tpu.core_type = #tpu.core_type<tc>, window_params = [{transform_indices = @transform_0, window_bounds = array<i64: 8, 1024>}, {transform_indices = @transform_1, window_bounds = array<i64: 8, 8, 128>}]} {
    %c0 = arith.constant 0 : index
    %c0_0 = arith.constant 0 : index
    %0 = vector.load %arg2[%c0, %c0_0] : memref<8x1024xf32, #tpu.memory_space<vmem>>, vector<8x1024xf32>
    %1 = vector.shape_cast %0 : vector<8x1024xf32> to vector<8x128x8xf32>
    %2 = tpu.transpose %1, [0, 2, 1] : vector<8x128x8xf32> -> vector<8x8x128xf32>
    %c0_1 = arith.constant 0 : index
    %c0_2 = arith.constant 0 : index
    %c0_3 = arith.constant 0 : index
    %3 = vector.load %arg3[%c0_1, %c0_2, %c0_3] : memref<8x8x128xf32, #tpu.memory_space<vmem>>, vector<8x8x128xf32>
    tpu.vector_store %arg3[%c0_1, %c0_2, %c0_3], %2 {strides = array<i32>} : memref<8x8x128xf32, #tpu.memory_space<vmem>>, vector<8x8x128xf32>,
    return
  }
  func.func @transform_0(%arg0: i32, %arg1: i32) -> (i32, i32) {
    %c0_i32 = arith.constant 0 : i32
    return %arg1, %arg0 : i32, i32
  }
  func.func @transform_1(%arg0: i32, %arg1: i32) -> (i32, i32, i32) {
    %c0_i32 = arith.constant 0 : i32
    %c0_i32_0 = arith.constant 0 : i32
    return %arg1, %c0_i32, %arg0 : i32, i32, i32
  }
}

module attributes {stable_mosaic.version = 11 : i64} {
  func.func @kernel(%arg0: i32, %arg1: i32, %arg2: memref<8x128x8xf32, #tpu.memory_space<vmem>>, %arg3: memref<8x8x128xf32, #tpu.memory_space<vmem>>) attributes {dimension_semantics = [#tpu.dimension_semantics<parallel>, #tpu.dimension_semantics<parallel>], iteration_bounds = array<i64: 2, 1>, scalar_prefetch = 0 : i64, scratch_operands = 0 : i64, tpu.core_type = #tpu.core_type<tc>, window_params = [{transform_indices = @transform_0, window_bounds = array<i64: 8, 128, 8>}, {transform_indices = @transform_1, window_bounds = array<i64: 8, 8, 128>}]} {
    %c0 = arith.constant 0 : index
    %c0_0 = arith.constant 0 : index
    %c0_1 = arith.constant 0 : index
    %0 = vector.load %arg2[%c0, %c0_0, %c0_1] : memref<8x128x8xf32, #tpu.memory_space<vmem>>, vector<8x128x8xf32>
    %1 = tpu.transpose %0, [0, 2, 1] : vector<8x128x8xf32> -> vector<8x8x128xf32>
    %c0_2 = arith.constant 0 : index
    %c0_3 = arith.constant 0 : index
    %c0_4 = arith.constant 0 : index
    %2 = vector.load %arg3[%c0_2, %c0_3, %c0_4] : memref<8x8x128xf32, #tpu.memory_space<vmem>>, vector<8x8x128xf32>
    tpu.vector_store %arg3[%c0_2, %c0_3, %c0_4], %1 {strides = array<i32>} : memref<8x8x128xf32, #tpu.memory_space<vmem>>, vector<8x8x128xf32>,
    return
  }
  func.func @transform_0(%arg0: i32, %arg1: i32) -> (i32, i32, i32) {
    %c0_i32 = arith.constant 0 : i32
    %c0_i32_0 = arith.constant 0 : i32
    return %arg1, %arg0, %c0_i32 : i32, i32, i32
  }
  func.func @transform_1(%arg0: i32, %arg1: i32) -> (i32, i32, i32) {
    %c0_i32 = arith.constant 0 : i32
    %c0_i32_0 = arith.constant 0 : i32
    return %arg1, %c0_i32, %arg0 : i32, i32, i32
  }
}

</mosaic_0001>

<llo_original>
// kernel: tpu_custom_call.1
$region0: #{tpu_custom_call.1}
  #allocation0 [shape = 'u32[]', space=smem, size = 0x4, offset = 0x4, fixed_abs, tag = 'smem constant byte address 0x4 - core index']
  #allocation1 [shape = 'u32[72,128]{1,0:T(1,128)}', space=vmem, size = 0x9000, scoped, tag = 'internal scratch']
  %s0 = inlined_call_operand.hbm [shape: f32[8,2048], index: 0, kind: input, shape index: {}]
  %s1 = inlined_call_operand.hbm [shape: f32[8,8,256], index: 1, kind: output, shape index: {}]
  %s2 = sld [smem:[#allocation0]]
  $region41: #{tpu_custom_call.1} parent=0
    _
  %s4 = ssub.s32 1, %s2
  %s5 = scalar_select 0, %s4, %s2
  $region1: #{tpu_custom_call.1} parent=0
    #allocation2 [shape = 'u8[65536]{0}', space=vmem, size = 0x10000, scoped, tag = 'input window, operand 0']
    #allocation3 [shape = 's32[2]{0}', space=sflag, size = 0x8, scoped, tag = 'scoped memory for tpu_custom_call.1']
    #allocation4 [shape = 's32[2]{0}', space=sflag, size = 0x8, scoped, tag = 'scoped memory for tpu_custom_call.1']
    #allocation5 [shape = 'u8[65536]{0}', space=vmem, size = 0x10000, scoped, tag = 'output window, operand 0']
    %6 = vsyncpa [#allocation3], 0
    %s7 = scalar_lea.sflag [#allocation3], 1
    %8 = vsyncpa %s7, 0
    %9 = vsyncpa [#allocation4], 0
    %s10 = scalar_lea.sflag [#allocation4], 1
    %11 = vsyncpa %s10, 0
    loop: start=0, step=1, limit=4
    $region2: #{tpu_custom_call.1} parent=1 // loop_pre_header
      _
    $region3: #{tpu_custom_call.1} parent=1 // loop_header
      %s13 = sphi 0, %s17
      %p14 = scmp.ge.s32.totalorder %s13, 4
      %s20 = sphi 0, %s32
      %s21 = sphi 0, %s28
      %s22 = sphi 0, %s20
      %s23 = sphi 0, %s21
      %s24 = sphi 0, %s22
      %s25 = sphi 0, %s23
      %s37 = sphi 0, %s39
      %s40 = sphi 0, %s37
      %s41 = sphi 0, %s40
      %s57 = sphi 0, %s41
      %s65 = sphi 0, %s67
      %s68 = sphi 0, %s65
      %s69 = sphi 0, %s68
      %s85 = sphi 0, %s69
    $region4: #{tpu_custom_call.1} parent=1 // loop_header_branch
      %16 = sbr.rel (%p14) target = $region8
    $region5: #{tpu_custom_call.1} parent=1 // loop_body
      %s18 = ssub.s32 %s13, 1
      %s19 = ssub.s32 %s13, 2
      %s26 = sadd.s32 1, %s21
      %p27 = scmp.ge.s32.totalorder %s26, 1
      %s28 = scalar_select %p27, 0, %s26
      %s29 = sadd.s32 1, %s20
      %s30 = scalar_select %p27, %s29, %s20
      %p31 = scmp.ge.s32.totalorder %s30, 2
      %s32 = scalar_select %p31, 0, %s30
      %s33 = ssub.s32 %s21, %s28
      %s34 = ssub.s32 %s20, %s32
      %s35 = sor.u32 %s33, %s34
      %p36 = scmp.eq.s32.totalorder %s35, 0
      %s38 = sadd.s32 %s37, 1
      %s39 = scalar_select %p36, %s37, %s38
      %p42 = pneg %p36
      %p43 = scmp.eq.s32.totalorder %s13, 1
      %p44 = por %p42, %p43
      %p45 = scmp.ne.s32.totalorder %s37, %s40
      %p46 = scmp.eq.s32.totalorder %s13, 0
      %p47 = por %p45, %p46
      %p48 = scmp.ne.s32.totalorder %s37, %s40
      %p49 = scmp.eq.s32.totalorder %s18, 1
      %p50 = por %p48, %p49
      %p51 = scmp.ne.s32.totalorder %s40, %s41
      %p52 = scmp.eq.s32.totalorder %s18, 0
      %p53 = por %p51, %p52
      %p54 = scmp.ne.s32.totalorder %s40, %s41
      %p55 = scmp.eq.s32.totalorder %s19, 1
      %p56 = por %p54, %p55
      %p58 = scmp.ne.s32.totalorder %s41, %s57
      %p59 = scmp.eq.s32.totalorder %s19, 0
      %p60 = por %p58, %p59
      %s61 = ssub.s32 %s21, %s28
      %s62 = ssub.s32 %s20, %s32
      %s63 = sor.u32 %s61, %s62
      %p64 = scmp.eq.s32.totalorder %s63, 0
      %s66 = sadd.s32 %s65, 1
      %s67 = scalar_select %p64, %s65, %s66
      %p70 = pneg %p64
      %p71 = scmp.eq.s32.totalorder %s13, 1
      %p72 = por %p70, %p71
      %p73 = scmp.ne.s32.totalorder %s65, %s68
      %p74 = scmp.eq.s32.totalorder %s13, 0
      %p75 = por %p73, %p74
      %p76 = scmp.ne.s32.totalorder %s65, %s68
      %p77 = scmp.eq.s32.totalorder %s18, 1
      %p78 = por %p76, %p77
      %p79 = scmp.ne.s32.totalorder %s68, %s69
      %p80 = scmp.eq.s32.totalorder %s18, 0
      %p81 = por %p79, %p80
      %p82 = scmp.ne.s32.totalorder %s68, %s69
      %p83 = scmp.eq.s32.totalorder %s19, 1
      %p84 = por %p82, %p83
      %p86 = scmp.ne.s32.totalorder %s69, %s85
      %p87 = scmp.eq.s32.totalorder %s19, 0
      %p88 = por %p86, %p87
      %p89 = scmp.le.s32.totalorder 1, %s13
      %p90 = scmp.lt.s32.totalorder %s13, 3
      %p91 = pnand %p89, %p90
      %p92 = pneg %p91
      // Predicated region
      $region9: #{tpu_custom_call.1} parent=5 // pred_check
        _
      $region10: #{tpu_custom_call.1} parent=5 // pred_check_branch
        %94 = sbr.rel (%p91) target = $region12
      $region11: #{tpu_custom_call.1} parent=5 // pred_region
        %s95 = ssub.s32 %s13, 1
      $region12: #{tpu_custom_call.1} parent=5 // pred_fallthru
        _
      %p96 = scmp.lt.s32.totalorder %s13, 2
      // Predicated region
      $region13: #{tpu_custom_call.1} parent=5 // pred_check
        %p97 = pneg %p96
      $region14: #{tpu_custom_call.1} parent=5 // pred_check_branch
        %99 = sbr.rel (%p97) target = $region16
      $region15: #{tpu_custom_call.1} parent=5 // pred_region
        // Predicated region
        $region17: #{tpu_custom_call.1} parent=15 // pred_check
          %p100 = pneg %p47
        $region18: #{tpu_custom_call.1} parent=15 // pred_check_branch
          %102 = sbr.rel (%p100) target = $region20
        $region19: #{tpu_custom_call.1} parent=15 // pred_region
          %s103 = sand.u32 %s37, 1
          %s104 = scalar_lea.sflag [#allocation3], %s103
          %s105 = sand.u32 %s37, 1
          %s106 = smul.addr %s105, 64
          %s107 = scalar_lea.vmem [#allocation2], %s106
          %s108 = smul.u32 8, %s20
          %110 = vsyncadd %s104, 0
          %s111 = smul.addr %s21, 16
          %s112 = sadd.s32 %s108, %s111
          %s113 = smul.addr %s112, 8
          %s114 = scalar_lea.hbm %s0, %s113
          %s116 = sshll.u32 %s114, 4
          %s117 = int_to_ptr.hbm [resolvable:$true] %s116
          %s118 = sshll.u32 %s107, 4
          %s119 = int_to_ptr.vmem [resolvable:$true] %s118
          %121 = dma.hbm_to_vmem [thread:$0]  %s117, 1024, %s119, %s104
        $region20: #{tpu_custom_call.1} parent=15 // pred_fallthru
          _
      $region16: #{tpu_custom_call.1} parent=5 // pred_fallthru
        _
      %p122 = scmp.le.s32.totalorder 1, %s13
      %p123 = scmp.lt.s32.totalorder %s13, 3
      %p124 = pnand %p122, %p123
      %p125 = pneg %p124
      // Predicated region
      $region21: #{tpu_custom_call.1} parent=5 // pred_check
        _
      $region22: #{tpu_custom_call.1} parent=5 // pred_check_branch
        %127 = sbr.rel (%p124) target = $region24
      $region23: #{tpu_custom_call.1} parent=5 // pred_region
        %s128 = ssub.s32 %s13, 1
        %s129 = sand.u32 %s40, 1
        %s130 = scalar_lea.sflag [#allocation3], %s129
        %s131 = sand.u32 %s40, 1
        %s132 = smul.addr %s131, 64
        %s133 = scalar_lea.vmem [#allocation2], %s132
        // Predicated region
        $region25: #{tpu_custom_call.1} parent=23 // pred_check
          %p134 = pneg %p53
        $region26: #{tpu_custom_call.1} parent=23 // pred_check_branch
          %136 = sbr.rel (%p134) target = $region28
        $region27: #{tpu_custom_call.1} parent=23 // pred_region
          %138 = dma.done %s130, 1024
        $region28: #{tpu_custom_call.1} parent=23 // pred_fallthru
          _
        %s139 = sand.u32 %s40, 1
        %s140 = scalar_lea.sflag [#allocation3], %s139
        %s141 = sand.u32 %s40, 1
        %s142 = smul.addr %s141, 64
        %s143 = scalar_lea.vmem [#allocation2], %s142
        %p144 = pneg %p53
        %p145 = pneg %p50
        %p146 = pneg %p81
        %p147 = pneg %p78
        %s148 = sand.u32 %s68, 1
        %s149 = scalar_lea.sflag [#allocation4], %s148
        %s150 = sand.u32 %s68, 1
        %s151 = smul.addr %s150, 64
        %s152 = scalar_lea.vmem [#allocation5], %s151
        %s153 = smul.u32 8, %s22
        %s154 = smul.u32 8, %s23
        %v155 = vld [vmem:[%s133] sm:$0xff]
        %v156 = vld [vmem:[%s133 + $0x8] sm:$0xff]
        %v157 = vld [vmem:[%s133 + $0x10] sm:$0xff]
        %v158 = vld [vmem:[%s133 + $0x18] sm:$0xff]
        %v159 = vld [vmem:[%s133 + $0x20] sm:$0xff]
        %v160 = vld [vmem:[%s133 + $0x28] sm:$0xff]
        %v161 = vld [vmem:[%s133 + $0x30] sm:$0xff]
        %v162 = vld [vmem:[%s133 + $0x38] sm:$0xff]
        %164 = vrot.lane.b32.xlu0 %v155, 120
        %v165 = vpop.permute.xlu0 %164
        %167 = vrot.lane.b32.xlu0 %v155, 112
        %v168 = vpop.permute.xlu0 %167
        %170 = vrot.lane.b32.xlu0 %v155, 104
        %v171 = vpop.permute.xlu0 %170
        %173 = vrot.lane.b32.xlu0 %v155, 96
        %v174 = vpop.permute.xlu0 %173
        %176 = vrot.lane.b32.xlu0 %v155, 88
        %v177 = vpop.permute.xlu0 %176
        %179 = vrot.lane.b32.xlu0 %v155, 80
        %v180 = vpop.permute.xlu0 %179
        %182 = vrot.lane.b32.xlu0 %v155, 72
        %v183 = vpop.permute.xlu0 %182
        %185 = vrot.lane.b32.xlu0 %v155, 64
        %v186 = vpop.permute.xlu0 %185
        %188 = vrot.lane.b32.xlu0 %v155, 56
        %v189 = vpop.permute.xlu0 %188
        %191 = vrot.lane.b32.xlu0 %v155, 48
        %v192 = vpop.permute.xlu0 %191
        %194 = vrot.lane.b32.xlu0 %v155, 40
        %v195 = vpop.permute.xlu0 %194
        %197 = vrot.lane.b32.xlu0 %v155, 32
        %v198 = vpop.permute.xlu0 %197
        %200 = vrot.lane.b32.xlu0 %v155, 24
        %v201 = vpop.permute.xlu0 %200
        %203 = vrot.lane.b32.xlu0 %v155, 16
        %v204 = vpop.permute.xlu0 %203
        %206 = vrot.lane.b32.xlu0 %v155, 8
        %v207 = vpop.permute.xlu0 %206
        %210 = vrot.lane.b32.xlu0 %v156, 120
        %v211 = vpop.permute.xlu0 %210
        %213 = vrot.lane.b32.xlu0 %v156, 112
        %v214 = vpop.permute.xlu0 %213
        %216 = vrot.lane.b32.xlu0 %v156, 104
        %v217 = vpop.permute.xlu0 %216
        %219 = vrot.lane.b32.xlu0 %v156, 96
        %v220 = vpop.permute.xlu0 %219
        %222 = vrot.lane.b32.xlu0 %v156, 88
        %v223 = vpop.permute.xlu0 %222
        %225 = vrot.lane.b32.xlu0 %v156, 80
        %v226 = vpop.permute.xlu0 %225
        %228 = vrot.lane.b32.xlu0 %v156, 72
        %v229 = vpop.permute.xlu0 %228
        %231 = vrot.lane.b32.xlu0 %v156, 64
        %v232 = vpop.permute.xlu0 %231
        %234 = vrot.lane.b32.xlu0 %v156, 56
        %v235 = vpop.permute.xlu0 %234
        %237 = vrot.lane.b32.xlu0 %v156, 48
        %v238 = vpop.permute.xlu0 %237
        %240 = vrot.lane.b32.xlu0 %v156, 40
        %v241 = vpop.permute.xlu0 %240
        %243 = vrot.lane.b32.xlu0 %v156, 32
        %v244 = vpop.permute.xlu0 %243
        %246 = vrot.lane.b32.xlu0 %v156, 24
        %v247 = vpop.permute.xlu0 %246
        %249 = vrot.lane.b32.xlu0 %v156, 16
        %v250 = vpop.permute.xlu0 %249
        %252 = vrot.lane.b32.xlu0 %v156, 8
        %v253 = vpop.permute.xlu0 %252
        %256 = vrot.lane.b32.xlu0 %v157, 120
        %v257 = vpop.permute.xlu0 %256
        %259 = vrot.lane.b32.xlu0 %v157, 112
        %v260 = vpop.permute.xlu0 %259
        %262 = vrot.lane.b32.xlu0 %v157, 104
        %v263 = vpop.permute.xlu0 %262
        %265 = vrot.lane.b32.xlu0 %v157, 96
        %v266 = vpop.permute.xlu0 %265
        %268 = vrot.lane.b32.xlu0 %v157, 88
        %v269 = vpop.permute.xlu0 %268
        %271 = vrot.lane.b32.xlu0 %v157, 80
        %v272 = vpop.permute.xlu0 %271
        %274 = vrot.lane.b32.xlu0 %v157, 72
        %v275 = vpop.permute.xlu0 %274
        %277 = vrot.lane.b32.xlu0 %v157, 64
        %v278 = vpop.permute.xlu0 %277
        %280 = vrot.lane.b32.xlu0 %v157, 56
        %v281 = vpop.permute.xlu0 %280
        %283 = vrot.lane.b32.xlu0 %v157, 48
        %v284 = vpop.permute.xlu0 %283
        %286 = vrot.lane.b32.xlu0 %v157, 40
        %v287 = vpop.permute.xlu0 %286
        %289 = vrot.lane.b32.xlu0 %v157, 32
        %v290 = vpop.permute.xlu0 %289
        %292 = vrot.lane.b32.xlu0 %v157, 24
        %v293 = vpop.permute.xlu0 %292
        %295 = vrot.lane.b32.xlu0 %v157, 16
        %v296 = vpop.permute.xlu0 %295
        %298 = vrot.lane.b32.xlu0 %v157, 8
        %v299 = vpop.permute.xlu0 %298
        %302 = vrot.lane.b32.xlu0 %v158, 120
        %v303 = vpop.permute.xlu0 %302
        %305 = vrot.lane.b32.xlu0 %v158, 112
        %v306 = vpop.permute.xlu0 %305
        %308 = vrot.lane.b32.xlu0 %v158, 104
        %v309 = vpop.permute.xlu0 %308
        %311 = vrot.lane.b32.xlu0 %v158, 96
        %v312 = vpop.permute.xlu0 %311
        %314 = vrot.lane.b32.xlu0 %v158, 88
        %v315 = vpop.permute.xlu0 %314
        %317 = vrot.lane.b32.xlu0 %v158, 80
        %v318 = vpop.permute.xlu0 %317
        %320 = vrot.lane.b32.xlu0 %v158, 72
        %v321 = vpop.permute.xlu0 %320
        %323 = vrot.lane.b32.xlu0 %v158, 64
        %v324 = vpop.permute.xlu0 %323
        %326 = vrot.lane.b32.xlu0 %v158, 56
        %v327 = vpop.permute.xlu0 %326
        %329 = vrot.lane.b32.xlu0 %v158, 48
        %v330 = vpop.permute.xlu0 %329
        %332 = vrot.lane.b32.xlu0 %v158, 40
        %v333 = vpop.permute.xlu0 %332
        %335 = vrot.lane.b32.xlu0 %v158, 32
        %v336 = vpop.permute.xlu0 %335
        %338 = vrot.lane.b32.xlu0 %v158, 24
        %v339 = vpop.permute.xlu0 %338
        %341 = vrot.lane.b32.xlu0 %v158, 16
        %v342 = vpop.permute.xlu0 %341
        %344 = vrot.lane.b32.xlu0 %v158, 8
        %v345 = vpop.permute.xlu0 %344
        %348 = vrot.lane.b32.xlu0 %v159, 120
        %v349 = vpop.permute.xlu0 %348
        %351 = vrot.lane.b32.xlu0 %v159, 112
        %v352 = vpop.permute.xlu0 %351
        %354 = vrot.lane.b32.xlu0 %v159, 104
        %v355 = vpop.permute.xlu0 %354
        %357 = vrot.lane.b32.xlu0 %v159, 96
        %v358 = vpop.permute.xlu0 %357
        %360 = vrot.lane.b32.xlu0 %v159, 88
        %v361 = vpop.permute.xlu0 %360
        %363 = vrot.lane.b32.xlu0 %v159, 80
        %v364 = vpop.permute.xlu0 %363
        %366 = vrot.lane.b32.xlu0 %v159, 72
        %v367 = vpop.permute.xlu0 %366
        %369 = vrot.lane.b32.xlu0 %v159, 64
        %v370 = vpop.permute.xlu0 %369
        %372 = vrot.lane.b32.xlu0 %v159, 56
        %v373 = vpop.permute.xlu0 %372
        %375 = vrot.lane.b32.xlu0 %v159, 48
        %v376 = vpop.permute.xlu0 %375
        %378 = vrot.lane.b32.xlu0 %v159, 40
        %v379 = vpop.permute.xlu0 %378
        %381 = vrot.lane.b32.xlu0 %v159, 32
        %v382 = vpop.permute.xlu0 %381
        %384 = vrot.lane.b32.xlu0 %v159, 24
        %v385 = vpop.permute.xlu0 %384
        %387 = vrot.lane.b32.xlu0 %v159, 16
        %v388 = vpop.permute.xlu0 %387
        %390 = vrot.lane.b32.xlu0 %v159, 8
        %v391 = vpop.permute.xlu0 %390
        %394 = vrot.lane.b32.xlu0 %v160, 120
        %v395 = vpop.permute.xlu0 %394
        %397 = vrot.lane.b32.xlu0 %v160, 112
        %v398 = vpop.permute.xlu0 %397
        %400 = vrot.lane.b32.xlu0 %v160, 104
        %v401 = vpop.permute.xlu0 %400
        %403 = vrot.lane.b32.xlu0 %v160, 96
        %v404 = vpop.permute.xlu0 %403
        %406 = vrot.lane.b32.xlu0 %v160, 88
        %v407 = vpop.permute.xlu0 %406
        %409 = vrot.lane.b32.xlu0 %v160, 80
        %v410 = vpop.permute.xlu0 %409
        %412 = vrot.lane.b32.xlu0 %v160, 72
        %v413 = vpop.permute.xlu0 %412
        %415 = vrot.lane.b32.xlu0 %v160, 64
        %v416 = vpop.permute.xlu0 %415
        %418 = vrot.lane.b32.xlu0 %v160, 56
        %v419 = vpop.permute.xlu0 %418
        %421 = vrot.lane.b32.xlu0 %v160, 48
        %v422 = vpop.permute.xlu0 %421
        %424 = vrot.lane.b32.xlu0 %v160, 40
        %v425 = vpop.permute.xlu0 %424
        %427 = vrot.lane.b32.xlu0 %v160, 32
        %v428 = vpop.permute.xlu0 %427
        %430 = vrot.lane.b32.xlu0 %v160, 24
        %v431 = vpop.permute.xlu0 %430
        %433 = vrot.lane.b32.xlu0 %v160, 16
        %v434 = vpop.permute.xlu0 %433
        %436 = vrot.lane.b32.xlu0 %v160, 8
        %v437 = vpop.permute.xlu0 %436
        %440 = vrot.lane.b32.xlu0 %v161, 120
        %v441 = vpop.permute.xlu0 %440
        %443 = vrot.lane.b32.xlu0 %v161, 112
        %v444 = vpop.permute.xlu0 %443
        %446 = vrot.lane.b32.xlu0 %v161, 104
        %v447 = vpop.permute.xlu0 %446
        %449 = vrot.lane.b32.xlu0 %v161, 96
        %v450 = vpop.permute.xlu0 %449
        %452 = vrot.lane.b32.xlu0 %v161, 88
        %v453 = vpop.permute.xlu0 %452
        %455 = vrot.lane.b32.xlu0 %v161, 80
        %v456 = vpop.permute.xlu0 %455
        %458 = vrot.lane.b32.xlu0 %v161, 72
        %v459 = vpop.permute.xlu0 %458
        %461 = vrot.lane.b32.xlu0 %v161, 64
        %v462 = vpop.permute.xlu0 %461
        %464 = vrot.lane.b32.xlu0 %v161, 56
        %v465 = vpop.permute.xlu0 %464
        %467 = vrot.lane.b32.xlu0 %v161, 48
        %v468 = vpop.permute.xlu0 %467
        %470 = vrot.lane.b32.xlu0 %v161, 40
        %v471 = vpop.permute.xlu0 %470
        %473 = vrot.lane.b32.xlu0 %v161, 32
        %v474 = vpop.permute.xlu0 %473
        %476 = vrot.lane.b32.xlu0 %v161, 24
        %v477 = vpop.permute.xlu0 %476
        %479 = vrot.lane.b32.xlu0 %v161, 16
        %v480 = vpop.permute.xlu0 %479
        %482 = vrot.lane.b32.xlu0 %v161, 8
        %v483 = vpop.permute.xlu0 %482
        %486 = vrot.lane.b32.xlu0 %v162, 120
        %v487 = vpop.permute.xlu0 %486
        %489 = vrot.lane.b32.xlu0 %v162, 112
        %v490 = vpop.permute.xlu0 %489
        %492 = vrot.lane.b32.xlu0 %v162, 104
        %v493 = vpop.permute.xlu0 %492
        %495 = vrot.lane.b32.xlu0 %v162, 96
        %v496 = vpop.permute.xlu0 %495
        %498 = vrot.lane.b32.xlu0 %v162, 88
        %v499 = vpop.permute.xlu0 %498
        %501 = vrot.lane.b32.xlu0 %v162, 80
        %v502 = vpop.permute.xlu0 %501
        %504 = vrot.lane.b32.xlu0 %v162, 72
        %v505 = vpop.permute.xlu0 %504
        %507 = vrot.lane.b32.xlu0 %v162, 64
        %v508 = vpop.permute.xlu0 %507
        %510 = vrot.lane.b32.xlu0 %v162, 56
        %v511 = vpop.permute.xlu0 %510
        %513 = vrot.lane.b32.xlu0 %v162, 48
        %v514 = vpop.permute.xlu0 %513
        %516 = vrot.lane.b32.xlu0 %v162, 40
        %v517 = vpop.permute.xlu0 %516
        %519 = vrot.lane.b32.xlu0 %v162, 32
        %v520 = vpop.permute.xlu0 %519
        %522 = vrot.lane.b32.xlu0 %v162, 24
        %v523 = vpop.permute.xlu0 %522
        %525 = vrot.lane.b32.xlu0 %v162, 16
        %v526 = vpop.permute.xlu0 %525
        %528 = vrot.lane.b32.xlu0 %v162, 8
        %v529 = vpop.permute.xlu0 %528
        %v531 = vrot.slane %v168, 4
        %vm532 = vcmask 1047556
        %v533 = vsel %vm532, %v531, %v155
        %v534 = vrot.slane %v155, 4
        %v535 = vsel %vm532, %v168, %v534
        %v537 = vunpack.c.l.s4 1983009808
        %v538 = vunpack.c.0.s8 %v537
        %v539 = vperm.slane %v533, %v538
        %v541 = vunpack.c.l.s4 1983009808
        %v542 = vunpack.c.0.s8 %v541
        %v543 = vperm.slane %v535, %v542
        %v544 = vrot.slane %v171, 4
        %v545 = vsel %vm532, %v544, %v165
        %v546 = vrot.slane %v165, 4
        %v547 = vsel %vm532, %v171, %v546
        %v549 = vunpack.c.l.s4 1983009808
        %v550 = vunpack.c.0.s8 %v549
        %v551 = vperm.slane %v545, %v550
        %v553 = vunpack.c.l.s4 1983009808
        %v554 = vunpack.c.0.s8 %v553
        %v555 = vperm.slane %v547, %v554
        %v556 = vrot.slane %v180, 4
        %v557 = vsel %vm532, %v556, %v174
        %v558 = vrot.slane %v174, 4
        %v559 = vsel %vm532, %v180, %v558
        %v561 = vunpack.c.l.s4 1983009808
        %v562 = vunpack.c.0.s8 %v561
        %v563 = vperm.slane %v557, %v562
        %v565 = vunpack.c.l.s4 1983009808
        %v566 = vunpack.c.0.s8 %v565
        %v567 = vperm.slane %v559, %v566
        %v568 = vrot.slane %v183, 4
        %v569 = vsel %vm532, %v568, %v177
        %v570 = vrot.slane %v177, 4
        %v571 = vsel %vm532, %v183, %v570
        %v573 = vunpack.c.l.s4 1983009808
        %v574 = vunpack.c.0.s8 %v573
        %v575 = vperm.slane %v569, %v574
        %v577 = vunpack.c.l.s4 1983009808
        %v578 = vunpack.c.0.s8 %v577
        %v579 = vperm.slane %v571, %v578
        %v580 = vrot.slane %v551, 4
        %v581 = vsel %vm532, %v580, %v539
        %v582 = vrot.slane %v539, 4
        %v583 = vsel %vm532, %v551, %v582
        %v585 = vunpack.c.l.s4 1934713408
        %v586 = vunpack.c.0.s8 %v585
        %v587 = vperm.slane %v581, %v586
        %v589 = vunpack.c.l.s4 1934713408
        %v590 = vunpack.c.0.s8 %v589
        %v591 = vperm.slane %v583, %v590
        %v592 = vrot.slane %v555, 4
        %v593 = vsel %vm532, %v592, %v543
        %v594 = vrot.slane %v543, 4
        %v595 = vsel %vm532, %v555, %v594
        %v597 = vunpack.c.l.s4 1934713408
        %v598 = vunpack.c.0.s8 %v597
        %v599 = vperm.slane %v593, %v598
        %v601 = vunpack.c.l.s4 1934713408
        %v602 = vunpack.c.0.s8 %v601
        %v603 = vperm.slane %v595, %v602
        %v604 = vrot.slane %v575, 4
        %v605 = vsel %vm532, %v604, %v563
        %v606 = vrot.slane %v563, 4
        %v607 = vsel %vm532, %v575, %v606
        %v609 = vunpack.c.l.s4 1934713408
        %v610 = vunpack.c.0.s8 %v609
        %v611 = vperm.slane %v605, %v610
        %v613 = vunpack.c.l.s4 1934713408
        %v614 = vunpack.c.0.s8 %v613
        %v615 = vperm.slane %v607, %v614
        %v616 = vrot.slane %v579, 4
        %v617 = vsel %vm532, %v616, %v567
        %v618 = vrot.slane %v567, 4
        %v619 = vsel %vm532, %v579, %v618
        %v621 = vunpack.c.l.s4 1934713408
        %v622 = vunpack.c.0.s8 %v621
        %v623 = vperm.slane %v617, %v622
        %v625 = vunpack.c.l.s4 1934713408
        %v626 = vunpack.c.0.s8 %v625
        %v627 = vperm.slane %v619, %v626
        %v628 = vrot.slane %v611, 4
        %v629 = vsel %vm532, %v628, %v587
        %v630 = vrot.slane %v587, 4
        %v631 = vsel %vm532, %v611, %v630
        %v632 = vrot.slane %v615, 4
        %v633 = vsel %vm532, %v632, %v591
        %v634 = vrot.slane %v591, 4
        %v635 = vsel %vm532, %v615, %v634
        %v636 = vrot.slane %v623, 4
        %v637 = vsel %vm532, %v636, %v599
        %v638 = vrot.slane %v599, 4
        %v639 = vsel %vm532, %v623, %v638
        %v640 = vrot.slane %v627, 4
        %v641 = vsel %vm532, %v640, %v603
        %v642 = vrot.slane %v603, 4
        %v643 = vsel %vm532, %v627, %v642
        %v644 = vrot.slane %v192, 4
        %v645 = vsel %vm532, %v644, %v186
        %v646 = vrot.slane %v186, 4
        %v647 = vsel %vm532, %v192, %v646
        %v649 = vunpack.c.l.s4 1983009808
        %v650 = vunpack.c.0.s8 %v649
        %v651 = vperm.slane %v645, %v650
        %v653 = vunpack.c.l.s4 1983009808
        %v654 = vunpack.c.0.s8 %v653
        %v655 = vperm.slane %v647, %v654
        %v656 = vrot.slane %v195, 4
        %v657 = vsel %vm532, %v656, %v189
        %v658 = vrot.slane %v189, 4
        %v659 = vsel %vm532, %v195, %v658
        %v661 = vunpack.c.l.s4 1983009808
        %v662 = vunpack.c.0.s8 %v661
        %v663 = vperm.slane %v657, %v662
        %v665 = vunpack.c.l.s4 1983009808
        %v666 = vunpack.c.0.s8 %v665
        %v667 = vperm.slane %v659, %v666
        %v668 = vrot.slane %v204, 4
        %v669 = vsel %vm532, %v668, %v198
        %v670 = vrot.slane %v198, 4
        %v671 = vsel %vm532, %v204, %v670
        %v673 = vunpack.c.l.s4 1983009808
        %v674 = vunpack.c.0.s8 %v673
        %v675 = vperm.slane %v669, %v674
        %v677 = vunpack.c.l.s4 1983009808
        %v678 = vunpack.c.0.s8 %v677
        %v679 = vperm.slane %v671, %v678
        %v680 = vrot.slane %v207, 4
        %v681 = vsel %vm532, %v680, %v201
        %v682 = vrot.slane %v201, 4
        %v683 = vsel %vm532, %v207, %v682
        %v685 = vunpack.c.l.s4 1983009808
        %v686 = vunpack.c.0.s8 %v685
        %v687 = vperm.slane %v681, %v686
        %v689 = vunpack.c.l.s4 1983009808
        %v690 = vunpack.c.0.s8 %v689
        %v691 = vperm.slane %v683, %v690
        %v692 = vrot.slane %v663, 4
        %v693 = vsel %vm532, %v692, %v651
        %v694 = vrot.slane %v651, 4
        %v695 = vsel %vm532, %v663, %v694
        %v697 = vunpack.c.l.s4 1934713408
        %v698 = vunpack.c.0.s8 %v697
        %v699 = vperm.slane %v693, %v698
        %v701 = vunpack.c.l.s4 1934713408
        %v702 = vunpack.c.0.s8 %v701
        %v703 = vperm.slane %v695, %v702
        %v704 = vrot.slane %v667, 4
        %v705 = vsel %vm532, %v704, %v655
        %v706 = vrot.slane %v655, 4
        %v707 = vsel %vm532, %v667, %v706
        %v709 = vunpack.c.l.s4 1934713408
        %v710 = vunpack.c.0.s8 %v709
        %v711 = vperm.slane %v705, %v710
        %v713 = vunpack.c.l.s4 1934713408
        %v714 = vunpack.c.0.s8 %v713
        %v715 = vperm.slane %v707, %v714
        %v716 = vrot.slane %v687, 4
        %v717 = vsel %vm532, %v716, %v675
        %v718 = vrot.slane %v675, 4
        %v719 = vsel %vm532, %v687, %v718
        %v721 = vunpack.c.l.s4 1934713408
        %v722 = vunpack.c.0.s8 %v721
        %v723 = vperm.slane %v717, %v722
        %v725 = vunpack.c.l.s4 1934713408
        %v726 = vunpack.c.0.s8 %v725
        %v727 = vperm.slane %v719, %v726
        %v728 = vrot.slane %v691, 4
        %v729 = vsel %vm532, %v728, %v679
        %v730 = vrot.slane %v679, 4
        %v731 = vsel %vm532, %v691, %v730
        %v733 = vunpack.c.l.s4 1934713408
        %v734 = vunpack.c.0.s8 %v733
        %v735 = vperm.slane %v729, %v734
        %v737 = vunpack.c.l.s4 1934713408
        %v738 = vunpack.c.0.s8 %v737
        %v739 = vperm.slane %v731, %v738
        %v740 = vrot.slane %v723, 4
        %v741 = vsel %vm532, %v740, %v699
        %v742 = vrot.slane %v699, 4
        %v743 = vsel %vm532, %v723, %v742
        %v744 = vrot.slane %v727, 4
        %v745 = vsel %vm532, %v744, %v703
        %v746 = vrot.slane %v703, 4
        %v747 = vsel %vm532, %v727, %v746
        %v748 = vrot.slane %v735, 4
        %v749 = vsel %vm532, %v748, %v711
        %v750 = vrot.slane %v711, 4
        %v751 = vsel %vm532, %v735, %v750
        %v752 = vrot.slane %v739, 4
        %v753 = vsel %vm532, %v752, %v715
        %v754 = vrot.slane %v715, 4
        %v755 = vsel %vm532, %v739, %v754
        %v756 = vrot.slane %v214, 4
        %v757 = vsel %vm532, %v756, %v156
        %v758 = vrot.slane %v156, 4
        %v759 = vsel %vm532, %v214, %v758
        %v761 = vunpack.c.l.s4 1983009808
        %v762 = vunpack.c.0.s8 %v761
        %v763 = vperm.slane %v757, %v762
        %v765 = vunpack.c.l.s4 1983009808
        %v766 = vunpack.c.0.s8 %v765
        %v767 = vperm.slane %v759, %v766
        %v768 = vrot.slane %v217, 4
        %v769 = vsel %vm532, %v768, %v211
        %v770 = vrot.slane %v211, 4
        %v771 = vsel %vm532, %v217, %v770
        %v773 = vunpack.c.l.s4 1983009808
        %v774 = vunpack.c.0.s8 %v773
        %v775 = vperm.slane %v769, %v774
        %v777 = vunpack.c.l.s4 1983009808
        %v778 = vunpack.c.0.s8 %v777
        %v779 = vperm.slane %v771, %v778
        %v780 = vrot.slane %v226, 4
        %v781 = vsel %vm532, %v780, %v220
        %v782 = vrot.slane %v220, 4
        %v783 = vsel %vm532, %v226, %v782
        %v785 = vunpack.c.l.s4 1983009808
        %v786 = vunpack.c.0.s8 %v785
        %v787 = vperm.slane %v781, %v786
        %v789 = vunpack.c.l.s4 1983009808
        %v790 = vunpack.c.0.s8 %v789
        %v791 = vperm.slane %v783, %v790
        %v792 = vrot.slane %v229, 4
        %v793 = vsel %vm532, %v792, %v223
        %v794 = vrot.slane %v223, 4
        %v795 = vsel %vm532, %v229, %v794
        %v797 = vunpack.c.l.s4 1983009808
        %v798 = vunpack.c.0.s8 %v797
        %v799 = vperm.slane %v793, %v798
        %v801 = vunpack.c.l.s4 1983009808
        %v802 = vunpack.c.0.s8 %v801
        %v803 = vperm.slane %v795, %v802
        %v804 = vrot.slane %v775, 4
        %v805 = vsel %vm532, %v804, %v763
        %v806 = vrot.slane %v763, 4
        %v807 = vsel %vm532, %v775, %v806
        %v809 = vunpack.c.l.s4 1934713408
        %v810 = vunpack.c.0.s8 %v809
        %v811 = vperm.slane %v805, %v810
        %v813 = vunpack.c.l.s4 1934713408
        %v814 = vunpack.c.0.s8 %v813
        %v815 = vperm.slane %v807, %v814
        %v816 = vrot.slane %v779, 4
        %v817 = vsel %vm532, %v816, %v767
        %v818 = vrot.slane %v767, 4
        %v819 = vsel %vm532, %v779, %v818
        %v821 = vunpack.c.l.s4 1934713408
        %v822 = vunpack.c.0.s8 %v821
        %v823 = vperm.slane %v817, %v822
        %v825 = vunpack.c.l.s4 1934713408
        %v826 = vunpack.c.0.s8 %v825
        %v827 = vperm.slane %v819, %v826
        %v828 = vrot.slane %v799, 4
        %v829 = vsel %vm532, %v828, %v787
        %v830 = vrot.slane %v787, 4
        %v831 = vsel %vm532, %v799, %v830
        %v833 = vunpack.c.l.s4 1934713408
        %v834 = vunpack.c.0.s8 %v833
        %v835 = vperm.slane %v829, %v834
        %v837 = vunpack.c.l.s4 1934713408
        %v838 = vunpack.c.0.s8 %v837
        %v839 = vperm.slane %v831, %v838
        %v840 = vrot.slane %v803, 4
        %v841 = vsel %vm532, %v840, %v791
        %v842 = vrot.slane %v791, 4
        %v843 = vsel %vm532, %v803, %v842
        %v845 = vunpack.c.l.s4 1934713408
        %v846 = vunpack.c.0.s8 %v845
        %v847 = vperm.slane %v841, %v846
        %v849 = vunpack.c.l.s4 1934713408
        %v850 = vunpack.c.0.s8 %v849
        %v851 = vperm.slane %v843, %v850
        %v852 = vrot.slane %v835, 4
        %v853 = vsel %vm532, %v852, %v811
        %v854 = vrot.slane %v811, 4
        %v855 = vsel %vm532, %v835, %v854
        %v856 = vrot.slane %v839, 4
        %v857 = vsel %vm532, %v856, %v815
        %v858 = vrot.slane %v815, 4
        %v859 = vsel %vm532, %v839, %v858
        %v860 = vrot.slane %v847, 4
        %v861 = vsel %vm532, %v860, %v823
        %v862 = vrot.slane %v823, 4
        %v863 = vsel %vm532, %v847, %v862
        %v864 = vrot.slane %v851, 4
        %v865 = vsel %vm532, %v864, %v827
        %v866 = vrot.slane %v827, 4
        %v867 = vsel %vm532, %v851, %v866
        %v868 = vrot.slane %v238, 4
        %v869 = vsel %vm532, %v868, %v232
        %v870 = vrot.slane %v232, 4
        %v871 = vsel %vm532, %v238, %v870
        %v873 = vunpack.c.l.s4 1983009808
        %v874 = vunpack.c.0.s8 %v873
        %v875 = vperm.slane %v869, %v874
        %v877 = vunpack.c.l.s4 1983009808
        %v878 = vunpack.c.0.s8 %v877
        %v879 = vperm.slane %v871, %v878
        %v880 = vrot.slane %v241, 4
        %v881 = vsel %vm532, %v880, %v235
        %v882 = vrot.slane %v235, 4
        %v883 = vsel %vm532, %v241, %v882
        %v885 = vunpack.c.l.s4 1983009808
        %v886 = vunpack.c.0.s8 %v885
        %v887 = vperm.slane %v881, %v886
        %v889 = vunpack.c.l.s4 1983009808
        %v890 = vunpack.c.0.s8 %v889
        %v891 = vperm.slane %v883, %v890
        %v892 = vrot.slane %v250, 4
        %v893 = vsel %vm532, %v892, %v244
        %v894 = vrot.slane %v244, 4
        %v895 = vsel %vm532, %v250, %v894
        %v897 = vunpack.c.l.s4 1983009808
        %v898 = vunpack.c.0.s8 %v897
        %v899 = vperm.slane %v893, %v898
        %v901 = vunpack.c.l.s4 1983009808
        %v902 = vunpack.c.0.s8 %v901
        %v903 = vperm.slane %v895, %v902
        %v904 = vrot.slane %v253, 4
        %v905 = vsel %vm532, %v904, %v247
        %v906 = vrot.slane %v247, 4
        %v907 = vsel %vm532, %v253, %v906
        %v909 = vunpack.c.l.s4 1983009808
        %v910 = vunpack.c.0.s8 %v909
        %v911 = vperm.slane %v905, %v910
        %v913 = vunpack.c.l.s4 1983009808
        %v914 = vunpack.c.0.s8 %v913
        %v915 = vperm.slane %v907, %v914
        %v916 = vrot.slane %v887, 4
        %v917 = vsel %vm532, %v916, %v875
        %v918 = vrot.slane %v875, 4
        %v919 = vsel %vm532, %v887, %v918
        %v921 = vunpack.c.l.s4 1934713408
        %v922 = vunpack.c.0.s8 %v921
        %v923 = vperm.slane %v917, %v922
        %v925 = vunpack.c.l.s4 1934713408
        %v926 = vunpack.c.0.s8 %v925
        %v927 = vperm.slane %v919, %v926
        %v928 = vrot.slane %v891, 4
        %v929 = vsel %vm532, %v928, %v879
        %v930 = vrot.slane %v879, 4
        %v931 = vsel %vm532, %v891, %v930
        %v933 = vunpack.c.l.s4 1934713408
        %v934 = vunpack.c.0.s8 %v933
        %v935 = vperm.slane %v929, %v934
        %v937 = vunpack.c.l.s4 1934713408
        %v938 = vunpack.c.0.s8 %v937
        %v939 = vperm.slane %v931, %v938
        %v940 = vrot.slane %v911, 4
        %v941 = vsel %vm532, %v940, %v899
        %v942 = vrot.slane %v899, 4
        %v943 = vsel %vm532, %v911, %v942
        %v945 = vunpack.c.l.s4 1934713408
        %v946 = vunpack.c.0.s8 %v945
        %v947 = vperm.slane %v941, %v946
        %v949 = vunpack.c.l.s4 1934713408
        %v950 = vunpack.c.0.s8 %v949
        %v951 = vperm.slane %v943, %v950
        %v952 = vrot.slane %v915, 4
        %v953 = vsel %vm532, %v952, %v903
        %v954 = vrot.slane %v903, 4
        %v955 = vsel %vm532, %v915, %v954
        %v957 = vunpack.c.l.s4 1934713408
        %v958 = vunpack.c.0.s8 %v957
        %v959 = vperm.slane %v953, %v958
        %v961 = vunpack.c.l.s4 1934713408
        %v962 = vunpack.c.0.s8 %v961
        %v963 = vperm.slane %v955, %v962
        %v964 = vrot.slane %v947, 4
        %v965 = vsel %vm532, %v964, %v923
        %v966 = vrot.slane %v923, 4
        %v967 = vsel %vm532, %v947, %v966
        %v968 = vrot.slane %v951, 4
        %v969 = vsel %vm532, %v968, %v927
        %v970 = vrot.slane %v927, 4
        %v971 = vsel %vm532, %v951, %v970
        %v972 = vrot.slane %v959, 4
        %v973 = vsel %vm532, %v972, %v935
        %v974 = vrot.slane %v935, 4
        %v975 = vsel %vm532, %v959, %v974
        %v976 = vrot.slane %v963, 4
        %v977 = vsel %vm532, %v976, %v939
        %v978 = vrot.slane %v939, 4
        %v979 = vsel %vm532, %v963, %v978
        %v980 = vrot.slane %v260, 4
        %v981 = vsel %vm532, %v980, %v157
        %v982 = vrot.slane %v157, 4
        %v983 = vsel %vm532, %v260, %v982
        %v985 = vunpack.c.l.s4 1983009808
        %v986 = vunpack.c.0.s8 %v985
        %v987 = vperm.slane %v981, %v986
        %v989 = vunpack.c.l.s4 1983009808
        %v990 = vunpack.c.0.s8 %v989
        %v991 = vperm.slane %v983, %v990
        %v992 = vrot.slane %v263, 4
        %v993 = vsel %vm532, %v992, %v257
        %v994 = vrot.slane %v257, 4
        %v995 = vsel %vm532, %v263, %v994
        %v997 = vunpack.c.l.s4 1983009808
        %v998 = vunpack.c.0.s8 %v997
        %v999 = vperm.slane %v993, %v998
        %v1001 = vunpack.c.l.s4 1983009808
        %v1002 = vunpack.c.0.s8 %v1001
        %v1003 = vperm.slane %v995, %v1002
        %v1004 = vrot.slane %v272, 4
        %v1005 = vsel %vm532, %v1004, %v266
        %v1006 = vrot.slane %v266, 4
        %v1007 = vsel %vm532, %v272, %v1006
        %v1009 = vunpack.c.l.s4 1983009808
        %v1010 = vunpack.c.0.s8 %v1009
        %v1011 = vperm.slane %v1005, %v1010
        %v1013 = vunpack.c.l.s4 1983009808
        %v1014 = vunpack.c.0.s8 %v1013
        %v1015 = vperm.slane %v1007, %v1014
        %v1016 = vrot.slane %v275, 4
        %v1017 = vsel %vm532, %v1016, %v269
        %v1018 = vrot.slane %v269, 4
        %v1019 = vsel %vm532, %v275, %v1018
        %v1021 = vunpack.c.l.s4 1983009808
        %v1022 = vunpack.c.0.s8 %v1021
        %v1023 = vperm.slane %v1017, %v1022
        %v1025 = vunpack.c.l.s4 1983009808
        %v1026 = vunpack.c.0.s8 %v1025
        %v1027 = vperm.slane %v1019, %v1026
        %v1028 = vrot.slane %v999, 4
        %v1029 = vsel %vm532, %v1028, %v987
        %v1030 = vrot.slane %v987, 4
        %v1031 = vsel %vm532, %v999, %v1030
        %v1033 = vunpack.c.l.s4 1934713408
        %v1034 = vunpack.c.0.s8 %v1033
        %v1035 = vperm.slane %v1029, %v1034
        %v1037 = vunpack.c.l.s4 1934713408
        %v1038 = vunpack.c.0.s8 %v1037
        %v1039 = vperm.slane %v1031, %v1038
        %v1040 = vrot.slane %v1003, 4
        %v1041 = vsel %vm532, %v1040, %v991
        %v1042 = vrot.slane %v991, 4
        %v1043 = vsel %vm532, %v1003, %v1042
        %v1045 = vunpack.c.l.s4 1934713408
        %v1046 = vunpack.c.0.s8 %v1045
        %v1047 = vperm.slane %v1041, %v1046
        %v1049 = vunpack.c.l.s4 1934713408
        %v1050 = vunpack.c.0.s8 %v1049
        %v1051 = vperm.slane %v1043, %v1050
        %v1052 = vrot.slane %v1023, 4
        %v1053 = vsel %vm532, %v1052, %v1011
        %v1054 = vrot.slane %v1011, 4
        %v1055 = vsel %vm532, %v1023, %v1054
        %v1057 = vunpack.c.l.s4 1934713408
        %v1058 = vunpack.c.0.s8 %v1057
        %v1059 = vperm.slane %v1053, %v1058
        %v1061 = vunpack.c.l.s4 1934713408
        %v1062 = vunpack.c.0.s8 %v1061
        %v1063 = vperm.slane %v1055, %v1062
        %v1064 = vrot.slane %v1027, 4
        %v1065 = vsel %vm532, %v1064, %v1015
        %v1066 = vrot.slane %v1015, 4
        %v1067 = vsel %vm532, %v1027, %v1066
        %v1069 = vunpack.c.l.s4 1934713408
        %v1070 = vunpack.c.0.s8 %v1069
        %v1071 = vperm.slane %v1065, %v1070
        %v1073 = vunpack.c.l.s4 1934713408
        %v1074 = vunpack.c.0.s8 %v1073
        %v1075 = vperm.slane %v1067, %v1074
        %v1076 = vrot.slane %v1059, 4
        %v1077 = vsel %vm532, %v1076, %v1035
        %v1078 = vrot.slane %v1035, 4
        %v1079 = vsel %vm532, %v1059, %v1078
        %v1080 = vrot.slane %v1063, 4
        %v1081 = vsel %vm532, %v1080, %v1039
        %v1082 = vrot.slane %v1039, 4
        %v1083 = vsel %vm532, %v1063, %v1082
        %v1084 = vrot.slane %v1071, 4
        %v1085 = vsel %vm532, %v1084, %v1047
        %v1086 = vrot.slane %v1047, 4
        %v1087 = vsel %vm532, %v1071, %v1086
        %v1088 = vrot.slane %v1075, 4
        %v1089 = vsel %vm532, %v1088, %v1051
        %v1090 = vrot.slane %v1051, 4
        %v1091 = vsel %vm532, %v1075, %v1090
        %v1092 = vrot.slane %v284, 4
        %v1093 = vsel %vm532, %v1092, %v278
        %v1094 = vrot.slane %v278, 4
        %v1095 = vsel %vm532, %v284, %v1094
        %v1097 = vunpack.c.l.s4 1983009808
        %v1098 = vunpack.c.0.s8 %v1097
        %v1099 = vperm.slane %v1093, %v1098
        %v1101 = vunpack.c.l.s4 1983009808
        %v1102 = vunpack.c.0.s8 %v1101
        %v1103 = vperm.slane %v1095, %v1102
        %v1104 = vrot.slane %v287, 4
        %v1105 = vsel %vm532, %v1104, %v281
        %v1106 = vrot.slane %v281, 4
        %v1107 = vsel %vm532, %v287, %v1106
        %v1109 = vunpack.c.l.s4 1983009808
        %v1110 = vunpack.c.0.s8 %v1109
        %v1111 = vperm.slane %v1105, %v1110
        %v1113 = vunpack.c.l.s4 1983009808
        %v1114 = vunpack.c.0.s8 %v1113
        %v1115 = vperm.slane %v1107, %v1114
        %v1116 = vrot.slane %v296, 4
        %v1117 = vsel %vm532, %v1116, %v290
        %v1118 = vrot.slane %v290, 4
        %v1119 = vsel %vm532, %v296, %v1118
        %v1121 = vunpack.c.l.s4 1983009808
        %v1122 = vunpack.c.0.s8 %v1121
        %v1123 = vperm.slane %v1117, %v1122
        %v1125 = vunpack.c.l.s4 1983009808
        %v1126 = vunpack.c.0.s8 %v1125
        %v1127 = vperm.slane %v1119, %v1126
        %v1128 = vrot.slane %v299, 4
        %v1129 = vsel %vm532, %v1128, %v293
        %v1130 = vrot.slane %v293, 4
        %v1131 = vsel %vm532, %v299, %v1130
        %v1133 = vunpack.c.l.s4 1983009808
        %v1134 = vunpack.c.0.s8 %v1133
        %v1135 = vperm.slane %v1129, %v1134
        %v1137 = vunpack.c.l.s4 1983009808
        %v1138 = vunpack.c.0.s8 %v1137
        %v1139 = vperm.slane %v1131, %v1138
        %v1140 = vrot.slane %v1111, 4
        %v1141 = vsel %vm532, %v1140, %v1099
        %v1142 = vrot.slane %v1099, 4
        %v1143 = vsel %vm532, %v1111, %v1142
        %v1145 = vunpack.c.l.s4 1934713408
        %v1146 = vunpack.c.0.s8 %v1145
        %v1147 = vperm.slane %v1141, %v1146
        %v1149 = vunpack.c.l.s4 1934713408
        %v1150 = vunpack.c.0.s8 %v1149
        %v1151 = vperm.slane %v1143, %v1150
        %v1152 = vrot.slane %v1115, 4
        %v1153 = vsel %vm532, %v1152, %v1103
        %v1154 = vrot.slane %v1103, 4
        %v1155 = vsel %vm532, %v1115, %v1154
        %v1157 = vunpack.c.l.s4 1934713408
        %v1158 = vunpack.c.0.s8 %v1157
        %v1159 = vperm.slane %v1153, %v1158
        %v1161 = vunpack.c.l.s4 1934713408
        %v1162 = vunpack.c.0.s8 %v1161
        %v1163 = vperm.slane %v1155, %v1162
        %v1164 = vrot.slane %v1135, 4
        %v1165 = vsel %vm532, %v1164, %v1123
        %v1166 = vrot.slane %v1123, 4
        %v1167 = vsel %vm532, %v1135, %v1166
        %v1169 = vunpack.c.l.s4 1934713408
        %v1170 = vunpack.c.0.s8 %v1169
        %v1171 = vperm.slane %v1165, %v1170
        %v1173 = vunpack.c.l.s4 1934713408
        %v1174 = vunpack.c.0.s8 %v1173
        %v1175 = vperm.slane %v1167, %v1174
        %v1176 = vrot.slane %v1139, 4
        %v1177 = vsel %vm532, %v1176, %v1127
        %v1178 = vrot.slane %v1127, 4
        %v1179 = vsel %vm532, %v1139, %v1178
        %v1181 = vunpack.c.l.s4 1934713408
        %v1182 = vunpack.c.0.s8 %v1181
        %v1183 = vperm.slane %v1177, %v1182
        %v1185 = vunpack.c.l.s4 1934713408
        %v1186 = vunpack.c.0.s8 %v1185
        %v1187 = vperm.slane %v1179, %v1186
        %v1188 = vrot.slane %v1171, 4
        %v1189 = vsel %vm532, %v1188, %v1147
        %v1190 = vrot.slane %v1147, 4
        %v1191 = vsel %vm532, %v1171, %v1190
        %v1192 = vrot.slane %v1175, 4
        %v1193 = vsel %vm532, %v1192, %v1151
        %v1194 = vrot.slane %v1151, 4
        %v1195 = vsel %vm532, %v1175, %v1194
        %v1196 = vrot.slane %v1183, 4
        %v1197 = vsel %vm532, %v1196, %v1159
        %v1198 = vrot.slane %v1159, 4
        %v1199 = vsel %vm532, %v1183, %v1198
        %v1200 = vrot.slane %v1187, 4
        %v1201 = vsel %vm532, %v1200, %v1163
        %v1202 = vrot.slane %v1163, 4
        %v1203 = vsel %vm532, %v1187, %v1202
        %v1204 = vrot.slane %v306, 4
        %v1205 = vsel %vm532, %v1204, %v158
        %v1206 = vrot.slane %v158, 4
        %v1207 = vsel %vm532, %v306, %v1206
        %v1209 = vunpack.c.l.s4 1983009808
        %v1210 = vunpack.c.0.s8 %v1209
        %v1211 = vperm.slane %v1205, %v1210
        %v1213 = vunpack.c.l.s4 1983009808
        %v1214 = vunpack.c.0.s8 %v1213
        %v1215 = vperm.slane %v1207, %v1214
        %v1216 = vrot.slane %v309, 4
        %v1217 = vsel %vm532, %v1216, %v303
        %v1218 = vrot.slane %v303, 4
        %v1219 = vsel %vm532, %v309, %v1218
        %v1221 = vunpack.c.l.s4 1983009808
        %v1222 = vunpack.c.0.s8 %v1221
        %v1223 = vperm.slane %v1217, %v1222
        %v1225 = vunpack.c.l.s4 1983009808
        %v1226 = vunpack.c.0.s8 %v1225
        %v1227 = vperm.slane %v1219, %v1226
        %v1228 = vrot.slane %v318, 4
        %v1229 = vsel %vm532, %v1228, %v312
        %v1230 = vrot.slane %v312, 4
        %v1231 = vsel %vm532, %v318, %v1230
        %v1233 = vunpack.c.l.s4 1983009808
        %v1234 = vunpack.c.0.s8 %v1233
        %v1235 = vperm.slane %v1229, %v1234
        %v1237 = vunpack.c.l.s4 1983009808
        %v1238 = vunpack.c.0.s8 %v1237
        %v1239 = vperm.slane %v1231, %v1238
        %v1240 = vrot.slane %v321, 4
        %v1241 = vsel %vm532, %v1240, %v315
        %v1242 = vrot.slane %v315, 4
        %v1243 = vsel %vm532, %v321, %v1242
        %v1245 = vunpack.c.l.s4 1983009808
        %v1246 = vunpack.c.0.s8 %v1245
        %v1247 = vperm.slane %v1241, %v1246
        %v1249 = vunpack.c.l.s4 1983009808
        %v1250 = vunpack.c.0.s8 %v1249
        %v1251 = vperm.slane %v1243, %v1250
        %v1252 = vrot.slane %v1223, 4
        %v1253 = vsel %vm532, %v1252, %v1211
        %v1254 = vrot.slane %v1211, 4
        %v1255 = vsel %vm532, %v1223, %v1254
        %v1257 = vunpack.c.l.s4 1934713408
        %v1258 = vunpack.c.0.s8 %v1257
        %v1259 = vperm.slane %v1253, %v1258
        %v1261 = vunpack.c.l.s4 1934713408
        %v1262 = vunpack.c.0.s8 %v1261
        %v1263 = vperm.slane %v1255, %v1262
        %v1264 = vrot.slane %v1227, 4
        %v1265 = vsel %vm532, %v1264, %v1215
        %v1266 = vrot.slane %v1215, 4
        %v1267 = vsel %vm532, %v1227, %v1266
        %v1269 = vunpack.c.l.s4 1934713408
        %v1270 = vunpack.c.0.s8 %v1269
        %v1271 = vperm.slane %v1265, %v1270
        %v1273 = vunpack.c.l.s4 1934713408
        %v1274 = vunpack.c.0.s8 %v1273
        %v1275 = vperm.slane %v1267, %v1274
        %v1276 = vrot.slane %v1247, 4
        %v1277 = vsel %vm532, %v1276, %v1235
        %v1278 = vrot.slane %v1235, 4
        %v1279 = vsel %vm532, %v1247, %v1278
        %v1281 = vunpack.c.l.s4 1934713408
        %v1282 = vunpack.c.0.s8 %v1281
        %v1283 = vperm.slane %v1277, %v1282
        %v1285 = vunpack.c.l.s4 1934713408
        %v1286 = vunpack.c.0.s8 %v1285
        %v1287 = vperm.slane %v1279, %v1286
        %v1288 = vrot.slane %v1251, 4
        %v1289 = vsel %vm532, %v1288, %v1239
        %v1290 = vrot.slane %v1239, 4
        %v1291 = vsel %vm532, %v1251, %v1290
        %v1293 = vunpack.c.l.s4 1934713408
        %v1294 = vunpack.c.0.s8 %v1293
        %v1295 = vperm.slane %v1289, %v1294
        %v1297 = vunpack.c.l.s4 1934713408
        %v1298 = vunpack.c.0.s8 %v1297
        %v1299 = vperm.slane %v1291, %v1298
        %v1300 = vrot.slane %v1283, 4
        %v1301 = vsel %vm532, %v1300, %v1259
        %v1302 = vrot.slane %v1259, 4
        %v1303 = vsel %vm532, %v1283, %v1302
        %v1304 = vrot.slane %v1287, 4
        %v1305 = vsel %vm532, %v1304, %v1263
        %v1306 = vrot.slane %v1263, 4
        %v1307 = vsel %vm532, %v1287, %v1306
        %v1308 = vrot.slane %v1295, 4
        %v1309 = vsel %vm532, %v1308, %v1271
        %v1310 = vrot.slane %v1271, 4
        %v1311 = vsel %vm532, %v1295, %v1310
        %v1312 = vrot.slane %v1299, 4
        %v1313 = vsel %vm532, %v1312, %v1275
        %v1314 = vrot.slane %v1275, 4
        %v1315 = vsel %vm532, %v1299, %v1314
        %v1316 = vrot.slane %v330, 4
        %v1317 = vsel %vm532, %v1316, %v324
        %v1318 = vrot.slane %v324, 4
        %v1319 = vsel %vm532, %v330, %v1318
        %v1321 = vunpack.c.l.s4 1983009808
        %v1322 = vunpack.c.0.s8 %v1321
        %v1323 = vperm.slane %v1317, %v1322
        %v1325 = vunpack.c.l.s4 1983009808
        %v1326 = vunpack.c.0.s8 %v1325
        %v1327 = vperm.slane %v1319, %v1326
        %v1328 = vrot.slane %v333, 4
        %v1329 = vsel %vm532, %v1328, %v327
        %v1330 = vrot.slane %v327, 4
        %v1331 = vsel %vm532, %v333, %v1330
        %v1333 = vunpack.c.l.s4 1983009808
        %v1334 = vunpack.c.0.s8 %v1333
        %v1335 = vperm.slane %v1329, %v1334
        %v1337 = vunpack.c.l.s4 1983009808
        %v1338 = vunpack.c.0.s8 %v1337
        %v1339 = vperm.slane %v1331, %v1338
        %v1340 = vrot.slane %v342, 4
        %v1341 = vsel %vm532, %v1340, %v336
        %v1342 = vrot.slane %v336, 4
        %v1343 = vsel %vm532, %v342, %v1342
        %v1345 = vunpack.c.l.s4 1983009808
        %v1346 = vunpack.c.0.s8 %v1345
        %v1347 = vperm.slane %v1341, %v1346
        %v1349 = vunpack.c.l.s4 1983009808
        %v1350 = vunpack.c.0.s8 %v1349
        %v1351 = vperm.slane %v1343, %v1350
        %v1352 = vrot.slane %v345, 4
        %v1353 = vsel %vm532, %v1352, %v339
        %v1354 = vrot.slane %v339, 4
        %v1355 = vsel %vm532, %v345, %v1354
        %v1357 = vunpack.c.l.s4 1983009808
        %v1358 = vunpack.c.0.s8 %v1357
        %v1359 = vperm.slane %v1353, %v1358
        %v1361 = vunpack.c.l.s4 1983009808
        %v1362 = vunpack.c.0.s8 %v1361
        %v1363 = vperm.slane %v1355, %v1362
        %v1364 = vrot.slane %v1335, 4
        %v1365 = vsel %vm532, %v1364, %v1323
        %v1366 = vrot.slane %v1323, 4
        %v1367 = vsel %vm532, %v1335, %v1366
        %v1369 = vunpack.c.l.s4 1934713408
        %v1370 = vunpack.c.0.s8 %v1369
        %v1371 = vperm.slane %v1365, %v1370
        %v1373 = vunpack.c.l.s4 1934713408
        %v1374 = vunpack.c.0.s8 %v1373
        %v1375 = vperm.slane %v1367, %v1374
        %v1376 = vrot.slane %v1339, 4
        %v1377 = vsel %vm532, %v1376, %v1327
        %v1378 = vrot.slane %v1327, 4
        %v1379 = vsel %vm532, %v1339, %v1378
        %v1381 = vunpack.c.l.s4 1934713408
        %v1382 = vunpack.c.0.s8 %v1381
        %v1383 = vperm.slane %v1377, %v1382
        %v1385 = vunpack.c.l.s4 1934713408
        %v1386 = vunpack.c.0.s8 %v1385
        %v1387 = vperm.slane %v1379, %v1386
        %v1388 = vrot.slane %v1359, 4
        %v1389 = vsel %vm532, %v1388, %v1347
        %v1390 = vrot.slane %v1347, 4
        %v1391 = vsel %vm532, %v1359, %v1390
        %v1393 = vunpack.c.l.s4 1934713408
        %v1394 = vunpack.c.0.s8 %v1393
        %v1395 = vperm.slane %v1389, %v1394
        %v1397 = vunpack.c.l.s4 1934713408
        %v1398 = vunpack.c.0.s8 %v1397
        %v1399 = vperm.slane %v1391, %v1398
        %v1400 = vrot.slane %v1363, 4
        %v1401 = vsel %vm532, %v1400, %v1351
        %v1402 = vrot.slane %v1351, 4
        %v1403 = vsel %vm532, %v1363, %v1402
        %v1405 = vunpack.c.l.s4 1934713408
        %v1406 = vunpack.c.0.s8 %v1405
        %v1407 = vperm.slane %v1401, %v1406
        %v1409 = vunpack.c.l.s4 1934713408
        %v1410 = vunpack.c.0.s8 %v1409
        %v1411 = vperm.slane %v1403, %v1410
        %v1412 = vrot.slane %v1395, 4
        %v1413 = vsel %vm532, %v1412, %v1371
        %v1414 = vrot.slane %v1371, 4
        %v1415 = vsel %vm532, %v1395, %v1414
        %v1416 = vrot.slane %v1399, 4
        %v1417 = vsel %vm532, %v1416, %v1375
        %v1418 = vrot.slane %v1375, 4
        %v1419 = vsel %vm532, %v1399, %v1418
        %v1420 = vrot.slane %v1407, 4
        %v1421 = vsel %vm532, %v1420, %v1383
        %v1422 = vrot.slane %v1383, 4
        %v1423 = vsel %vm532, %v1407, %v1422
        %v1424 = vrot.slane %v1411, 4
        %v1425 = vsel %vm532, %v1424, %v1387
        %v1426 = vrot.slane %v1387, 4
        %v1427 = vsel %vm532, %v1411, %v1426
        %v1428 = vrot.slane %v352, 4
        %v1429 = vsel %vm532, %v1428, %v159
        %v1430 = vrot.slane %v159, 4
        %v1431 = vsel %vm532, %v352, %v1430
        %v1433 = vunpack.c.l.s4 1983009808
        %v1434 = vunpack.c.0.s8 %v1433
        %v1435 = vperm.slane %v1429, %v1434
        %v1437 = vunpack.c.l.s4 1983009808
        %v1438 = vunpack.c.0.s8 %v1437
        %v1439 = vperm.slane %v1431, %v1438
        %v1440 = vrot.slane %v355, 4
        %v1441 = vsel %vm532, %v1440, %v349
        %v1442 = vrot.slane %v349, 4
        %v1443 = vsel %vm532, %v355, %v1442
        %v1445 = vunpack.c.l.s4 1983009808
        %v1446 = vunpack.c.0.s8 %v1445
        %v1447 = vperm.slane %v1441, %v1446
        %v1449 = vunpack.c.l.s4 1983009808
        %v1450 = vunpack.c.0.s8 %v1449
        %v1451 = vperm.slane %v1443, %v1450
        %v1452 = vrot.slane %v364, 4
        %v1453 = vsel %vm532, %v1452, %v358
        %v1454 = vrot.slane %v358, 4
        %v1455 = vsel %vm532, %v364, %v1454
        %v1457 = vunpack.c.l.s4 1983009808
        %v1458 = vunpack.c.0.s8 %v1457
        %v1459 = vperm.slane %v1453, %v1458
        %v1461 = vunpack.c.l.s4 1983009808
        %v1462 = vunpack.c.0.s8 %v1461
        %v1463 = vperm.slane %v1455, %v1462
        %v1464 = vrot.slane %v367, 4
        %v1465 = vsel %vm532, %v1464, %v361
        %v1466 = vrot.slane %v361, 4
        %v1467 = vsel %vm532, %v367, %v1466
        %v1469 = vunpack.c.l.s4 1983009808
        %v1470 = vunpack.c.0.s8 %v1469
        %v1471 = vperm.slane %v1465, %v1470
        %v1473 = vunpack.c.l.s4 1983009808
        %v1474 = vunpack.c.0.s8 %v1473
        %v1475 = vperm.slane %v1467, %v1474
        %v1476 = vrot.slane %v1447, 4
        %v1477 = vsel %vm532, %v1476, %v1435
        %v1478 = vrot.slane %v1435, 4
        %v1479 = vsel %vm532, %v1447, %v1478
        %v1481 = vunpack.c.l.s4 1934713408
        %v1482 = vunpack.c.0.s8 %v1481
        %v1483 = vperm.slane %v1477, %v1482
        %v1485 = vunpack.c.l.s4 1934713408
        %v1486 = vunpack.c.0.s8 %v1485
        %v1487 = vperm.slane %v1479, %v1486
        %v1488 = vrot.slane %v1451, 4
        %v1489 = vsel %vm532, %v1488, %v1439
        %v1490 = vrot.slane %v1439, 4
        %v1491 = vsel %vm532, %v1451, %v1490
        %v1493 = vunpack.c.l.s4 1934713408
        %v1494 = vunpack.c.0.s8 %v1493
        %v1495 = vperm.slane %v1489, %v1494
        %v1497 = vunpack.c.l.s4 1934713408
        %v1498 = vunpack.c.0.s8 %v1497
        %v1499 = vperm.slane %v1491, %v1498
        %v1500 = vrot.slane %v1471, 4
        %v1501 = vsel %vm532, %v1500, %v1459
        %v1502 = vrot.slane %v1459, 4
        %v1503 = vsel %vm532, %v1471, %v1502
        %v1505 = vunpack.c.l.s4 1934713408
        %v1506 = vunpack.c.0.s8 %v1505
        %v1507 = vperm.slane %v1501, %v1506
        %v1509 = vunpack.c.l.s4 1934713408
        %v1510 = vunpack.c.0.s8 %v1509
        %v1511 = vperm.slane %v1503, %v1510
        %v1512 = vrot.slane %v1475, 4
        %v1513 = vsel %vm532, %v1512, %v1463
        %v1514 = vrot.slane %v1463, 4
        %v1515 = vsel %vm532, %v1475, %v1514
        %v1517 = vunpack.c.l.s4 1934713408
        %v1518 = vunpack.c.0.s8 %v1517
        %v1519 = vperm.slane %v1513, %v1518
        %v1521 = vunpack.c.l.s4 1934713408
        %v1522 = vunpack.c.0.s8 %v1521
        %v1523 = vperm.slane %v1515, %v1522
        %v1524 = vrot.slane %v1507, 4
        %v1525 = vsel %vm532, %v1524, %v1483
        %v1526 = vrot.slane %v1483, 4
        %v1527 = vsel %vm532, %v1507, %v1526
        %v1528 = vrot.slane %v1511, 4
        %v1529 = vsel %vm532, %v1528, %v1487
        %v1530 = vrot.slane %v1487, 4
        %v1531 = vsel %vm532, %v1511, %v1530
        %v1532 = vrot.slane %v1519, 4
        %v1533 = vsel %vm532, %v1532, %v1495
        %v1534 = vrot.slane %v1495, 4
        %v1535 = vsel %vm532, %v1519, %v1534
        %v1536 = vrot.slane %v1523, 4
        %v1537 = vsel %vm532, %v1536, %v1499
        %v1538 = vrot.slane %v1499, 4
        %v1539 = vsel %vm532, %v1523, %v1538
        %v1540 = vrot.slane %v376, 4
        %v1541 = vsel %vm532, %v1540, %v370
        %v1542 = vrot.slane %v370, 4
        %v1543 = vsel %vm532, %v376, %v1542
        %v1545 = vunpack.c.l.s4 1983009808
        %v1546 = vunpack.c.0.s8 %v1545
        %v1547 = vperm.slane %v1541, %v1546
        %v1549 = vunpack.c.l.s4 1983009808
        %v1550 = vunpack.c.0.s8 %v1549
        %v1551 = vperm.slane %v1543, %v1550
        %v1552 = vrot.slane %v379, 4
        %v1553 = vsel %vm532, %v1552, %v373
        %v1554 = vrot.slane %v373, 4
        %v1555 = vsel %vm532, %v379, %v1554
        %v1557 = vunpack.c.l.s4 1983009808
        %v1558 = vunpack.c.0.s8 %v1557
        %v1559 = vperm.slane %v1553, %v1558
        %v1561 = vunpack.c.l.s4 1983009808
        %v1562 = vunpack.c.0.s8 %v1561
        %v1563 = vperm.slane %v1555, %v1562
        %v1564 = vrot.slane %v388, 4
        %v1565 = vsel %vm532, %v1564, %v382
        %v1566 = vrot.slane %v382, 4
        %v1567 = vsel %vm532, %v388, %v1566
        %v1569 = vunpack.c.l.s4 1983009808
        %v1570 = vunpack.c.0.s8 %v1569
        %v1571 = vperm.slane %v1565, %v1570
        %v1573 = vunpack.c.l.s4 1983009808
        %v1574 = vunpack.c.0.s8 %v1573
        %v1575 = vperm.slane %v1567, %v1574
        %v1576 = vrot.slane %v391, 4
        %v1577 = vsel %vm532, %v1576, %v385
        %v1578 = vrot.slane %v385, 4
        %v1579 = vsel %vm532, %v391, %v1578
        %v1581 = vunpack.c.l.s4 1983009808
        %v1582 = vunpack.c.0.s8 %v1581
        %v1583 = vperm.slane %v1577, %v1582
        %v1585 = vunpack.c.l.s4 1983009808
        %v1586 = vunpack.c.0.s8 %v1585
        %v1587 = vperm.slane %v1579, %v1586
        %v1588 = vrot.slane %v1559, 4
        %v1589 = vsel %vm532, %v1588, %v1547
        %v1590 = vrot.slane %v1547, 4
        %v1591 = vsel %vm532, %v1559, %v1590
        %v1593 = vunpack.c.l.s4 1934713408
        %v1594 = vunpack.c.0.s8 %v1593
        %v1595 = vperm.slane %v1589, %v1594
        %v1597 = vunpack.c.l.s4 1934713408
        %v1598 = vunpack.c.0.s8 %v1597
        %v1599 = vperm.slane %v1591, %v1598
        %v1600 = vrot.slane %v1563, 4
        %v1601 = vsel %vm532, %v1600, %v1551
        %v1602 = vrot.slane %v1551, 4
        %v1603 = vsel %vm532, %v1563, %v1602
        %v1605 = vunpack.c.l.s4 1934713408
        %v1606 = vunpack.c.0.s8 %v1605
        %v1607 = vperm.slane %v1601, %v1606
        %v1609 = vunpack.c.l.s4 1934713408
        %v1610 = vunpack.c.0.s8 %v1609
        %v1611 = vperm.slane %v1603, %v1610
        %v1612 = vrot.slane %v1583, 4
        %v1613 = vsel %vm532, %v1612, %v1571
        %v1614 = vrot.slane %v1571, 4
        %v1615 = vsel %vm532, %v1583, %v1614
        %v1617 = vunpack.c.l.s4 1934713408
        %v1618 = vunpack.c.0.s8 %v1617
        %v1619 = vperm.slane %v1613, %v1618
        %v1621 = vunpack.c.l.s4 1934713408
        %v1622 = vunpack.c.0.s8 %v1621
        %v1623 = vperm.slane %v1615, %v1622
        %v1624 = vrot.slane %v1587, 4
        %v1625 = vsel %vm532, %v1624, %v1575
        %v1626 = vrot.slane %v1575, 4
        %v1627 = vsel %vm532, %v1587, %v1626
        %v1629 = vunpack.c.l.s4 1934713408
        %v1630 = vunpack.c.0.s8 %v1629
        %v1631 = vperm.slane %v1625, %v1630
        %v1633 = vunpack.c.l.s4 1934713408
        %v1634 = vunpack.c.0.s8 %v1633
        %v1635 = vperm.slane %v1627, %v1634
        %v1636 = vrot.slane %v1619, 4
        %v1637 = vsel %vm532, %v1636, %v1595
        %v1638 = vrot.slane %v1595, 4
        %v1639 = vsel %vm532, %v1619, %v1638
        %v1640 = vrot.slane %v1623, 4
        %v1641 = vsel %vm532, %v1640, %v1599
        %v1642 = vrot.slane %v1599, 4
        %v1643 = vsel %vm532, %v1623, %v1642
        %v1644 = vrot.slane %v1631, 4
        %v1645 = vsel %vm532, %v1644, %v1607
        %v1646 = vrot.slane %v1607, 4
        %v1647 = vsel %vm532, %v1631, %v1646
        %v1648 = vrot.slane %v1635, 4
        %v1649 = vsel %vm532, %v1648, %v1611
        %v1650 = vrot.slane %v1611, 4
        %v1651 = vsel %vm532, %v1635, %v1650
        %v1652 = vrot.slane %v398, 4
        %v1653 = vsel %vm532, %v1652, %v160
        %v1654 = vrot.slane %v160, 4
        %v1655 = vsel %vm532, %v398, %v1654
        %v1657 = vunpack.c.l.s4 1983009808
        %v1658 = vunpack.c.0.s8 %v1657
        %v1659 = vperm.slane %v1653, %v1658
        %v1661 = vunpack.c.l.s4 1983009808
        %v1662 = vunpack.c.0.s8 %v1661
        %v1663 = vperm.slane %v1655, %v1662
        %v1664 = vrot.slane %v401, 4
        %v1665 = vsel %vm532, %v1664, %v395
        %v1666 = vrot.slane %v395, 4
        %v1667 = vsel %vm532, %v401, %v1666
        %v1669 = vunpack.c.l.s4 1983009808
        %v1670 = vunpack.c.0.s8 %v1669
        %v1671 = vperm.slane %v1665, %v1670
        %v1673 = vunpack.c.l.s4 1983009808
        %v1674 = vunpack.c.0.s8 %v1673
        %v1675 = vperm.slane %v1667, %v1674
        %v1676 = vrot.slane %v410, 4
        %v1677 = vsel %vm532, %v1676, %v404
        %v1678 = vrot.slane %v404, 4
        %v1679 = vsel %vm532, %v410, %v1678
        %v1681 = vunpack.c.l.s4 1983009808
        %v1682 = vunpack.c.0.s8 %v1681
        %v1683 = vperm.slane %v1677, %v1682
        %v1685 = vunpack.c.l.s4 1983009808
        %v1686 = vunpack.c.0.s8 %v1685
        %v1687 = vperm.slane %v1679, %v1686
        %v1688 = vrot.slane %v413, 4
        %v1689 = vsel %vm532, %v1688, %v407
        %v1690 = vrot.slane %v407, 4
        %v1691 = vsel %vm532, %v413, %v1690
        %v1693 = vunpack.c.l.s4 1983009808
        %v1694 = vunpack.c.0.s8 %v1693
        %v1695 = vperm.slane %v1689, %v1694
        %v1697 = vunpack.c.l.s4 1983009808
        %v1698 = vunpack.c.0.s8 %v1697
        %v1699 = vperm.slane %v1691, %v1698
        %v1700 = vrot.slane %v1671, 4
        %v1701 = vsel %vm532, %v1700, %v1659
        %v1702 = vrot.slane %v1659, 4
        %v1703 = vsel %vm532, %v1671, %v1702
        %v1705 = vunpack.c.l.s4 1934713408
        %v1706 = vunpack.c.0.s8 %v1705
        %v1707 = vperm.slane %v1701, %v1706
        %v1709 = vunpack.c.l.s4 1934713408
        %v1710 = vunpack.c.0.s8 %v1709
        %v1711 = vperm.slane %v1703, %v1710
        %v1712 = vrot.slane %v1675, 4
        %v1713 = vsel %vm532, %v1712, %v1663
        %v1714 = vrot.slane %v1663, 4
        %v1715 = vsel %vm532, %v1675, %v1714
        %v1717 = vunpack.c.l.s4 1934713408
        %v1718 = vunpack.c.0.s8 %v1717
        %v1719 = vperm.slane %v1713, %v1718
        %v1721 = vunpack.c.l.s4 1934713408
        %v1722 = vunpack.c.0.s8 %v1721
        %v1723 = vperm.slane %v1715, %v1722
        %v1724 = vrot.slane %v1695, 4
        %v1725 = vsel %vm532, %v1724, %v1683
        %v1726 = vrot.slane %v1683, 4
        %v1727 = vsel %vm532, %v1695, %v1726
        %v1729 = vunpack.c.l.s4 1934713408
        %v1730 = vunpack.c.0.s8 %v1729
        %v1731 = vperm.slane %v1725, %v1730
        %v1733 = vunpack.c.l.s4 1934713408
        %v1734 = vunpack.c.0.s8 %v1733
        %v1735 = vperm.slane %v1727, %v1734
        %v1736 = vrot.slane %v1699, 4
        %v1737 = vsel %vm532, %v1736, %v1687
        %v1738 = vrot.slane %v1687, 4
        %v1739 = vsel %vm532, %v1699, %v1738
        %v1741 = vunpack.c.l.s4 1934713408
        %v1742 = vunpack.c.0.s8 %v1741
        %v1743 = vperm.slane %v1737, %v1742
        %v1745 = vunpack.c.l.s4 1934713408
        %v1746 = vunpack.c.0.s8 %v1745
        %v1747 = vperm.slane %v1739, %v1746
        %v1748 = vrot.slane %v1731, 4
        %v1749 = vsel %vm532, %v1748, %v1707
        %v1750 = vrot.slane %v1707, 4
        %v1751 = vsel %vm532, %v1731, %v1750
        %v1752 = vrot.slane %v1735, 4
        %v1753 = vsel %vm532, %v1752, %v1711
        %v1754 = vrot.slane %v1711, 4
        %v1755 = vsel %vm532, %v1735, %v1754
        %v1756 = vrot.slane %v1743, 4
        %v1757 = vsel %vm532, %v1756, %v1719
        %v1758 = vrot.slane %v1719, 4
        %v1759 = vsel %vm532, %v1743, %v1758
        %v1760 = vrot.slane %v1747, 4
        %v1761 = vsel %vm532, %v1760, %v1723
        %v1762 = vrot.slane %v1723, 4
        %v1763 = vsel %vm532, %v1747, %v1762
        %v1764 = vrot.slane %v422, 4
        %v1765 = vsel %vm532, %v1764, %v416
        %v1766 = vrot.slane %v416, 4
        %v1767 = vsel %vm532, %v422, %v1766
        %v1769 = vunpack.c.l.s4 1983009808
        %v1770 = vunpack.c.0.s8 %v1769
        %v1771 = vperm.slane %v1765, %v1770
        %v1773 = vunpack.c.l.s4 1983009808
        %v1774 = vunpack.c.0.s8 %v1773
        %v1775 = vperm.slane %v1767, %v1774
        %v1776 = vrot.slane %v425, 4
        %v1777 = vsel %vm532, %v1776, %v419
        %v1778 = vrot.slane %v419, 4
        %v1779 = vsel %vm532, %v425, %v1778
        %v1781 = vunpack.c.l.s4 1983009808
        %v1782 = vunpack.c.0.s8 %v1781
        %v1783 = vperm.slane %v1777, %v1782
        %v1785 = vunpack.c.l.s4 1983009808
        %v1786 = vunpack.c.0.s8 %v1785
        %v1787 = vperm.slane %v1779, %v1786
        %v1788 = vrot.slane %v434, 4
        %v1789 = vsel %vm532, %v1788, %v428
        %v1790 = vrot.slane %v428, 4
        %v1791 = vsel %vm532, %v434, %v1790
        %v1793 = vunpack.c.l.s4 1983009808
        %v1794 = vunpack.c.0.s8 %v1793
        %v1795 = vperm.slane %v1789, %v1794
        %v1797 = vunpack.c.l.s4 1983009808
        %v1798 = vunpack.c.0.s8 %v1797
        %v1799 = vperm.slane %v1791, %v1798
        %v1800 = vrot.slane %v437, 4
        %v1801 = vsel %vm532, %v1800, %v431
        %v1802 = vrot.slane %v431, 4
        %v1803 = vsel %vm532, %v437, %v1802
        %v1805 = vunpack.c.l.s4 1983009808
        %v1806 = vunpack.c.0.s8 %v1805
        %v1807 = vperm.slane %v1801, %v1806
        %v1809 = vunpack.c.l.s4 1983009808
        %v1810 = vunpack.c.0.s8 %v1809
        %v1811 = vperm.slane %v1803, %v1810
        %v1812 = vrot.slane %v1783, 4
        %v1813 = vsel %vm532, %v1812, %v1771
        %v1814 = vrot.slane %v1771, 4
        %v1815 = vsel %vm532, %v1783, %v1814
        %v1817 = vunpack.c.l.s4 1934713408
        %v1818 = vunpack.c.0.s8 %v1817
        %v1819 = vperm.slane %v1813, %v1818
        %v1821 = vunpack.c.l.s4 1934713408
        %v1822 = vunpack.c.0.s8 %v1821
        %v1823 = vperm.slane %v1815, %v1822
        %v1824 = vrot.slane %v1787, 4
        %v1825 = vsel %vm532, %v1824, %v1775
        %v1826 = vrot.slane %v1775, 4
        %v1827 = vsel %vm532, %v1787, %v1826
        %v1829 = vunpack.c.l.s4 1934713408
        %v1830 = vunpack.c.0.s8 %v1829
        %v1831 = vperm.slane %v1825, %v1830
        %v1833 = vunpack.c.l.s4 1934713408
        %v1834 = vunpack.c.0.s8 %v1833
        %v1835 = vperm.slane %v1827, %v1834
        %v1836 = vrot.slane %v1807, 4
        %v1837 = vsel %vm532, %v1836, %v1795
        %v1838 = vrot.slane %v1795, 4
        %v1839 = vsel %vm532, %v1807, %v1838
        %v1841 = vunpack.c.l.s4 1934713408
        %v1842 = vunpack.c.0.s8 %v1841
        %v1843 = vperm.slane %v1837, %v1842
        %v1845 = vunpack.c.l.s4 1934713408
        %v1846 = vunpack.c.0.s8 %v1845
        %v1847 = vperm.slane %v1839, %v1846
        %v1848 = vrot.slane %v1811, 4
        %v1849 = vsel %vm532, %v1848, %v1799
        %v1850 = vrot.slane %v1799, 4
        %v1851 = vsel %vm532, %v1811, %v1850
        %v1853 = vunpack.c.l.s4 1934713408
        %v1854 = vunpack.c.0.s8 %v1853
        %v1855 = vperm.slane %v1849, %v1854
        %v1857 = vunpack.c.l.s4 1934713408
        %v1858 = vunpack.c.0.s8 %v1857
        %v1859 = vperm.slane %v1851, %v1858
        %v1860 = vrot.slane %v1843, 4
        %v1861 = vsel %vm532, %v1860, %v1819
        %v1862 = vrot.slane %v1819, 4
        %v1863 = vsel %vm532, %v1843, %v1862
        %v1864 = vrot.slane %v1847, 4
        %v1865 = vsel %vm532, %v1864, %v1823
        %v1866 = vrot.slane %v1823, 4
        %v1867 = vsel %vm532, %v1847, %v1866
        %v1868 = vrot.slane %v1855, 4
        %v1869 = vsel %vm532, %v1868, %v1831
        %v1870 = vrot.slane %v1831, 4
        %v1871 = vsel %vm532, %v1855, %v1870
        %v1872 = vrot.slane %v1859, 4
        %v1873 = vsel %vm532, %v1872, %v1835
        %v1874 = vrot.slane %v1835, 4
        %v1875 = vsel %vm532, %v1859, %v1874
        %v1876 = vrot.slane %v444, 4
        %v1877 = vsel %vm532, %v1876, %v161
        %v1878 = vrot.slane %v161, 4
        %v1879 = vsel %vm532, %v444, %v1878
        %v1881 = vunpack.c.l.s4 1983009808
        %v1882 = vunpack.c.0.s8 %v1881
        %v1883 = vperm.slane %v1877, %v1882
        %v1885 = vunpack.c.l.s4 1983009808
        %v1886 = vunpack.c.0.s8 %v1885
        %v1887 = vperm.slane %v1879, %v1886
        %v1888 = vrot.slane %v447, 4
        %v1889 = vsel %vm532, %v1888, %v441
        %v1890 = vrot.slane %v441, 4
        %v1891 = vsel %vm532, %v447, %v1890
        %v1893 = vunpack.c.l.s4 1983009808
        %v1894 = vunpack.c.0.s8 %v1893
        %v1895 = vperm.slane %v1889, %v1894
        %v1897 = vunpack.c.l.s4 1983009808
        %v1898 = vunpack.c.0.s8 %v1897
        %v1899 = vperm.slane %v1891, %v1898
        %v1900 = vrot.slane %v456, 4
        %v1901 = vsel %vm532, %v1900, %v450
        %v1902 = vrot.slane %v450, 4
        %v1903 = vsel %vm532, %v456, %v1902
        %v1905 = vunpack.c.l.s4 1983009808
        %v1906 = vunpack.c.0.s8 %v1905
        %v1907 = vperm.slane %v1901, %v1906
        %v1909 = vunpack.c.l.s4 1983009808
        %v1910 = vunpack.c.0.s8 %v1909
        %v1911 = vperm.slane %v1903, %v1910
        %v1912 = vrot.slane %v459, 4
        %v1913 = vsel %vm532, %v1912, %v453
        %v1914 = vrot.slane %v453, 4
        %v1915 = vsel %vm532, %v459, %v1914
        %v1917 = vunpack.c.l.s4 1983009808
        %v1918 = vunpack.c.0.s8 %v1917
        %v1919 = vperm.slane %v1913, %v1918
        %v1921 = vunpack.c.l.s4 1983009808
        %v1922 = vunpack.c.0.s8 %v1921
        %v1923 = vperm.slane %v1915, %v1922
        %v1924 = vrot.slane %v1895, 4
        %v1925 = vsel %vm532, %v1924, %v1883
        %v1926 = vrot.slane %v1883, 4
        %v1927 = vsel %vm532, %v1895, %v1926
        %v1929 = vunpack.c.l.s4 1934713408
        %v1930 = vunpack.c.0.s8 %v1929
        %v1931 = vperm.slane %v1925, %v1930
        %v1933 = vunpack.c.l.s4 1934713408
        %v1934 = vunpack.c.0.s8 %v1933
        %v1935 = vperm.slane %v1927, %v1934
        %v1936 = vrot.slane %v1899, 4
        %v1937 = vsel %vm532, %v1936, %v1887
        %v1938 = vrot.slane %v1887, 4
        %v1939 = vsel %vm532, %v1899, %v1938
        %v1941 = vunpack.c.l.s4 1934713408
        %v1942 = vunpack.c.0.s8 %v1941
        %v1943 = vperm.slane %v1937, %v1942
        %v1945 = vunpack.c.l.s4 1934713408
        %v1946 = vunpack.c.0.s8 %v1945
        %v1947 = vperm.slane %v1939, %v1946
        %v1948 = vrot.slane %v1919, 4
        %v1949 = vsel %vm532, %v1948, %v1907
        %v1950 = vrot.slane %v1907, 4
        %v1951 = vsel %vm532, %v1919, %v1950
        %v1953 = vunpack.c.l.s4 1934713408
        %v1954 = vunpack.c.0.s8 %v1953
        %v1955 = vperm.slane %v1949, %v1954
        %v1957 = vunpack.c.l.s4 1934713408
        %v1958 = vunpack.c.0.s8 %v1957
        %v1959 = vperm.slane %v1951, %v1958
        %v1960 = vrot.slane %v1923, 4
        %v1961 = vsel %vm532, %v1960, %v1911
        %v1962 = vrot.slane %v1911, 4
        %v1963 = vsel %vm532, %v1923, %v1962
        %v1965 = vunpack.c.l.s4 1934713408
        %v1966 = vunpack.c.0.s8 %v1965
        %v1967 = vperm.slane %v1961, %v1966
        %v1969 = vunpack.c.l.s4 1934713408
        %v1970 = vunpack.c.0.s8 %v1969
        %v1971 = vperm.slane %v1963, %v1970
        %v1972 = vrot.slane %v1955, 4
        %v1973 = vsel %vm532, %v1972, %v1931
        %v1974 = vrot.slane %v1931, 4
        %v1975 = vsel %vm532, %v1955, %v1974
        %v1976 = vrot.slane %v1959, 4
        %v1977 = vsel %vm532, %v1976, %v1935
        %v1978 = vrot.slane %v1935, 4
        %v1979 = vsel %vm532, %v1959, %v1978
        %v1980 = vrot.slane %v1967, 4
        %v1981 = vsel %vm532, %v1980, %v1943
        %v1982 = vrot.slane %v1943, 4
        %v1983 = vsel %vm532, %v1967, %v1982
        %v1984 = vrot.slane %v1971, 4
        %v1985 = vsel %vm532, %v1984, %v1947
        %v1986 = vrot.slane %v1947, 4
        %v1987 = vsel %vm532, %v1971, %v1986
        %v1988 = vrot.slane %v468, 4
        %v1989 = vsel %vm532, %v1988, %v462
        %v1990 = vrot.slane %v462, 4
        %v1991 = vsel %vm532, %v468, %v1990
        %v1993 = vunpack.c.l.s4 1983009808
        %v1994 = vunpack.c.0.s8 %v1993
        %v1995 = vperm.slane %v1989, %v1994
        %v1997 = vunpack.c.l.s4 1983009808
        %v1998 = vunpack.c.0.s8 %v1997
        %v1999 = vperm.slane %v1991, %v1998
        %v2000 = vrot.slane %v471, 4
        %v2001 = vsel %vm532, %v2000, %v465
        %v2002 = vrot.slane %v465, 4
        %v2003 = vsel %vm532, %v471, %v2002
        %v2005 = vunpack.c.l.s4 1983009808
        %v2006 = vunpack.c.0.s8 %v2005
        %v2007 = vperm.slane %v2001, %v2006
        %v2009 = vunpack.c.l.s4 1983009808
        %v2010 = vunpack.c.0.s8 %v2009
        %v2011 = vperm.slane %v2003, %v2010
        %v2012 = vrot.slane %v480, 4
        %v2013 = vsel %vm532, %v2012, %v474
        %v2014 = vrot.slane %v474, 4
        %v2015 = vsel %vm532, %v480, %v2014
        %v2017 = vunpack.c.l.s4 1983009808
        %v2018 = vunpack.c.0.s8 %v2017
        %v2019 = vperm.slane %v2013, %v2018
        %v2021 = vunpack.c.l.s4 1983009808
        %v2022 = vunpack.c.0.s8 %v2021
        %v2023 = vperm.slane %v2015, %v2022
        %v2024 = vrot.slane %v483, 4
        %v2025 = vsel %vm532, %v2024, %v477
        %v2026 = vrot.slane %v477, 4
        %v2027 = vsel %vm532, %v483, %v2026
        %v2029 = vunpack.c.l.s4 1983009808
        %v2030 = vunpack.c.0.s8 %v2029
        %v2031 = vperm.slane %v2025, %v2030
        %v2033 = vunpack.c.l.s4 1983009808
        %v2034 = vunpack.c.0.s8 %v2033
        %v2035 = vperm.slane %v2027, %v2034
        %v2036 = vrot.slane %v2007, 4
        %v2037 = vsel %vm532, %v2036, %v1995
        %v2038 = vrot.slane %v1995, 4
        %v2039 = vsel %vm532, %v2007, %v2038
        %v2041 = vunpack.c.l.s4 1934713408
        %v2042 = vunpack.c.0.s8 %v2041
        %v2043 = vperm.slane %v2037, %v2042
        %v2045 = vunpack.c.l.s4 1934713408
        %v2046 = vunpack.c.0.s8 %v2045
        %v2047 = vperm.slane %v2039, %v2046
        %v2048 = vrot.slane %v2011, 4
        %v2049 = vsel %vm532, %v2048, %v1999
        %v2050 = vrot.slane %v1999, 4
        %v2051 = vsel %vm532, %v2011, %v2050
        %v2053 = vunpack.c.l.s4 1934713408
        %v2054 = vunpack.c.0.s8 %v2053
        %v2055 = vperm.slane %v2049, %v2054
        %v2057 = vunpack.c.l.s4 1934713408
        %v2058 = vunpack.c.0.s8 %v2057
        %v2059 = vperm.slane %v2051, %v2058
        %v2060 = vrot.slane %v2031, 4
        %v2061 = vsel %vm532, %v2060, %v2019
        %v2062 = vrot.slane %v2019, 4
        %v2063 = vsel %vm532, %v2031, %v2062
        %v2065 = vunpack.c.l.s4 1934713408
        %v2066 = vunpack.c.0.s8 %v2065
        %v2067 = vperm.slane %v2061, %v2066
        %v2069 = vunpack.c.l.s4 1934713408
        %v2070 = vunpack.c.0.s8 %v2069
        %v2071 = vperm.slane %v2063, %v2070
        %v2072 = vrot.slane %v2035, 4
        %v2073 = vsel %vm532, %v2072, %v2023
        %v2074 = vrot.slane %v2023, 4
        %v2075 = vsel %vm532, %v2035, %v2074
        %v2077 = vunpack.c.l.s4 1934713408
        %v2078 = vunpack.c.0.s8 %v2077
        %v2079 = vperm.slane %v2073, %v2078
        %v2081 = vunpack.c.l.s4 1934713408
        %v2082 = vunpack.c.0.s8 %v2081
        %v2083 = vperm.slane %v2075, %v2082
        %v2084 = vrot.slane %v2067, 4
        %v2085 = vsel %vm532, %v2084, %v2043
        %v2086 = vrot.slane %v2043, 4
        %v2087 = vsel %vm532, %v2067, %v2086
        %v2088 = vrot.slane %v2071, 4
        %v2089 = vsel %vm532, %v2088, %v2047
        %v2090 = vrot.slane %v2047, 4
        %v2091 = vsel %vm532, %v2071, %v2090
        %v2092 = vrot.slane %v2079, 4
        %v2093 = vsel %vm532, %v2092, %v2055
        %v2094 = vrot.slane %v2055, 4
        %v2095 = vsel %vm532, %v2079, %v2094
        %v2096 = vrot.slane %v2083, 4
        %v2097 = vsel %vm532, %v2096, %v2059
        %v2098 = vrot.slane %v2059, 4
        %v2099 = vsel %vm532, %v2083, %v2098
        %v2100 = vrot.slane %v490, 4
        %v2101 = vsel %vm532, %v2100, %v162
        %v2102 = vrot.slane %v162, 4
        %v2103 = vsel %vm532, %v490, %v2102
        %v2105 = vunpack.c.l.s4 1983009808
        %v2106 = vunpack.c.0.s8 %v2105
        %v2107 = vperm.slane %v2101, %v2106
        %v2109 = vunpack.c.l.s4 1983009808
        %v2110 = vunpack.c.0.s8 %v2109
        %v2111 = vperm.slane %v2103, %v2110
        %v2112 = vrot.slane %v493, 4
        %v2113 = vsel %vm532, %v2112, %v487
        %v2114 = vrot.slane %v487, 4
        %v2115 = vsel %vm532, %v493, %v2114
        %v2117 = vunpack.c.l.s4 1983009808
        %v2118 = vunpack.c.0.s8 %v2117
        %v2119 = vperm.slane %v2113, %v2118
        %v2121 = vunpack.c.l.s4 1983009808
        %v2122 = vunpack.c.0.s8 %v2121
        %v2123 = vperm.slane %v2115, %v2122
        %v2124 = vrot.slane %v502, 4
        %v2125 = vsel %vm532, %v2124, %v496
        %v2126 = vrot.slane %v496, 4
        %v2127 = vsel %vm532, %v502, %v2126
        %v2129 = vunpack.c.l.s4 1983009808
        %v2130 = vunpack.c.0.s8 %v2129
        %v2131 = vperm.slane %v2125, %v2130
        %v2133 = vunpack.c.l.s4 1983009808
        %v2134 = vunpack.c.0.s8 %v2133
        %v2135 = vperm.slane %v2127, %v2134
        %v2136 = vrot.slane %v505, 4
        %v2137 = vsel %vm532, %v2136, %v499
        %v2138 = vrot.slane %v499, 4
        %v2139 = vsel %vm532, %v505, %v2138
        %v2141 = vunpack.c.l.s4 1983009808
        %v2142 = vunpack.c.0.s8 %v2141
        %v2143 = vperm.slane %v2137, %v2142
        %v2145 = vunpack.c.l.s4 1983009808
        %v2146 = vunpack.c.0.s8 %v2145
        %v2147 = vperm.slane %v2139, %v2146
        %v2148 = vrot.slane %v2119, 4
        %v2149 = vsel %vm532, %v2148, %v2107
        %v2150 = vrot.slane %v2107, 4
        %v2151 = vsel %vm532, %v2119, %v2150
        %v2153 = vunpack.c.l.s4 1934713408
        %v2154 = vunpack.c.0.s8 %v2153
        %v2155 = vperm.slane %v2149, %v2154
        %v2157 = vunpack.c.l.s4 1934713408
        %v2158 = vunpack.c.0.s8 %v2157
        %v2159 = vperm.slane %v2151, %v2158
        %v2160 = vrot.slane %v2123, 4
        %v2161 = vsel %vm532, %v2160, %v2111
        %v2162 = vrot.slane %v2111, 4
        %v2163 = vsel %vm532, %v2123, %v2162
        %v2165 = vunpack.c.l.s4 1934713408
        %v2166 = vunpack.c.0.s8 %v2165
        %v2167 = vperm.slane %v2161, %v2166
        %v2169 = vunpack.c.l.s4 1934713408
        %v2170 = vunpack.c.0.s8 %v2169
        %v2171 = vperm.slane %v2163, %v2170
        %v2172 = vrot.slane %v2143, 4
        %v2173 = vsel %vm532, %v2172, %v2131
        %v2174 = vrot.slane %v2131, 4
        %v2175 = vsel %vm532, %v2143, %v2174
        %v2177 = vunpack.c.l.s4 1934713408
        %v2178 = vunpack.c.0.s8 %v2177
        %v2179 = vperm.slane %v2173, %v2178
        %v2181 = vunpack.c.l.s4 1934713408
        %v2182 = vunpack.c.0.s8 %v2181
        %v2183 = vperm.slane %v2175, %v2182
        %v2184 = vrot.slane %v2147, 4
        %v2185 = vsel %vm532, %v2184, %v2135
        %v2186 = vrot.slane %v2135, 4
        %v2187 = vsel %vm532, %v2147, %v2186
        %v2189 = vunpack.c.l.s4 1934713408
        %v2190 = vunpack.c.0.s8 %v2189
        %v2191 = vperm.slane %v2185, %v2190
        %v2193 = vunpack.c.l.s4 1934713408
        %v2194 = vunpack.c.0.s8 %v2193
        %v2195 = vperm.slane %v2187, %v2194
        %v2196 = vrot.slane %v2179, 4
        %v2197 = vsel %vm532, %v2196, %v2155
        %v2198 = vrot.slane %v2155, 4
        %v2199 = vsel %vm532, %v2179, %v2198
        %v2200 = vrot.slane %v2183, 4
        %v2201 = vsel %vm532, %v2200, %v2159
        %v2202 = vrot.slane %v2159, 4
        %v2203 = vsel %vm532, %v2183, %v2202
        %v2204 = vrot.slane %v2191, 4
        %v2205 = vsel %vm532, %v2204, %v2167
        %v2206 = vrot.slane %v2167, 4
        %v2207 = vsel %vm532, %v2191, %v2206
        %v2208 = vrot.slane %v2195, 4
        %v2209 = vsel %vm532, %v2208, %v2171
        %v2210 = vrot.slane %v2171, 4
        %v2211 = vsel %vm532, %v2195, %v2210
        %v2212 = vrot.slane %v514, 4
        %v2213 = vsel %vm532, %v2212, %v508
        %v2214 = vrot.slane %v508, 4
        %v2215 = vsel %vm532, %v514, %v2214
        %v2217 = vunpack.c.l.s4 1983009808
        %v2218 = vunpack.c.0.s8 %v2217
        %v2219 = vperm.slane %v2213, %v2218
        %v2221 = vunpack.c.l.s4 1983009808
        %v2222 = vunpack.c.0.s8 %v2221
        %v2223 = vperm.slane %v2215, %v2222
        %v2224 = vrot.slane %v517, 4
        %v2225 = vsel %vm532, %v2224, %v511
        %v2226 = vrot.slane %v511, 4
        %v2227 = vsel %vm532, %v517, %v2226
        %v2229 = vunpack.c.l.s4 1983009808
        %v2230 = vunpack.c.0.s8 %v2229
        %v2231 = vperm.slane %v2225, %v2230
        %v2233 = vunpack.c.l.s4 1983009808
        %v2234 = vunpack.c.0.s8 %v2233
        %v2235 = vperm.slane %v2227, %v2234
        %v2236 = vrot.slane %v526, 4
        %v2237 = vsel %vm532, %v2236, %v520
        %v2238 = vrot.slane %v520, 4
        %v2239 = vsel %vm532, %v526, %v2238
        %v2241 = vunpack.c.l.s4 1983009808
        %v2242 = vunpack.c.0.s8 %v2241
        %v2243 = vperm.slane %v2237, %v2242
        %v2245 = vunpack.c.l.s4 1983009808
        %v2246 = vunpack.c.0.s8 %v2245
        %v2247 = vperm.slane %v2239, %v2246
        %v2248 = vrot.slane %v529, 4
        %v2249 = vsel %vm532, %v2248, %v523
        %v2250 = vrot.slane %v523, 4
        %v2251 = vsel %vm532, %v529, %v2250
        %v2253 = vunpack.c.l.s4 1983009808
        %v2254 = vunpack.c.0.s8 %v2253
        %v2255 = vperm.slane %v2249, %v2254
        %v2257 = vunpack.c.l.s4 1983009808
        %v2258 = vunpack.c.0.s8 %v2257
        %v2259 = vperm.slane %v2251, %v2258
        %v2260 = vrot.slane %v2231, 4
        %v2261 = vsel %vm532, %v2260, %v2219
        %v2262 = vrot.slane %v2219, 4
        %v2263 = vsel %vm532, %v2231, %v2262
        %v2265 = vunpack.c.l.s4 1934713408
        %v2266 = vunpack.c.0.s8 %v2265
        %v2267 = vperm.slane %v2261, %v2266
        %v2269 = vunpack.c.l.s4 1934713408
        %v2270 = vunpack.c.0.s8 %v2269
        %v2271 = vperm.slane %v2263, %v2270
        %v2272 = vrot.slane %v2235, 4
        %v2273 = vsel %vm532, %v2272, %v2223
        %v2274 = vrot.slane %v2223, 4
        %v2275 = vsel %vm532, %v2235, %v2274
        %v2277 = vunpack.c.l.s4 1934713408
        %v2278 = vunpack.c.0.s8 %v2277
        %v2279 = vperm.slane %v2273, %v2278
        %v2281 = vunpack.c.l.s4 1934713408
        %v2282 = vunpack.c.0.s8 %v2281
        %v2283 = vperm.slane %v2275, %v2282
        %v2284 = vrot.slane %v2255, 4
        %v2285 = vsel %vm532, %v2284, %v2243
        %v2286 = vrot.slane %v2243, 4
        %v2287 = vsel %vm532, %v2255, %v2286
        %v2289 = vunpack.c.l.s4 1934713408
        %v2290 = vunpack.c.0.s8 %v2289
        %v2291 = vperm.slane %v2285, %v2290
        %v2293 = vunpack.c.l.s4 1934713408
        %v2294 = vunpack.c.0.s8 %v2293
        %v2295 = vperm.slane %v2287, %v2294
        %v2296 = vrot.slane %v2259, 4
        %v2297 = vsel %vm532, %v2296, %v2247
        %v2298 = vrot.slane %v2247, 4
        %v2299 = vsel %vm532, %v2259, %v2298
        %v2301 = vunpack.c.l.s4 1934713408
        %v2302 = vunpack.c.0.s8 %v2301
        %v2303 = vperm.slane %v2297, %v2302
        %v2305 = vunpack.c.l.s4 1934713408
        %v2306 = vunpack.c.0.s8 %v2305
        %v2307 = vperm.slane %v2299, %v2306
        %v2308 = vrot.slane %v2291, 4
        %v2309 = vsel %vm532, %v2308, %v2267
        %v2310 = vrot.slane %v2267, 4
        %v2311 = vsel %vm532, %v2291, %v2310
        %v2312 = vrot.slane %v2295, 4
        %v2313 = vsel %vm532, %v2312, %v2271
        %v2314 = vrot.slane %v2271, 4
        %v2315 = vsel %vm532, %v2295, %v2314
        %v2316 = vrot.slane %v2303, 4
        %v2317 = vsel %vm532, %v2316, %v2279
        %v2318 = vrot.slane %v2279, 4
        %v2319 = vsel %vm532, %v2303, %v2318
        %v2320 = vrot.slane %v2307, 4
        %v2321 = vsel %vm532, %v2320, %v2283
        %v2322 = vrot.slane %v2283, 4
        %v2323 = vsel %vm532, %v2307, %v2322
        %2324 = vxpose.xlu0.b32.start [1/16] %v629, 128
        %2325 = vxpose.xlu0.b32.cont [2/16] %v741, 128
        %2326 = vxpose.xlu0.b32.cont [3/16] %v853, 128
        %2327 = vxpose.xlu0.b32.cont [4/16] %v965, 128
        %2328 = vxpose.xlu0.b32.cont [5/16] %v1077, 128
        %2329 = vxpose.xlu0.b32.cont [6/16] %v1189, 128
        %2330 = vxpose.xlu0.b32.cont [7/16] %v1301, 128
        %2331 = vxpose.xlu0.b32.cont [8/16] %v1413, 128
        %2332 = vxpose.xlu0.b32.cont [9/16] %v1525, 128
        %2333 = vxpose.xlu0.b32.cont [10/16] %v1637, 128
        %2334 = vxpose.xlu0.b32.cont [11/16] %v1749, 128
        %2335 = vxpose.xlu0.b32.cont [12/16] %v1861, 128
        %2336 = vxpose.xlu0.b32.cont [13/16] %v1973, 128
        %2337 = vxpose.xlu0.b32.cont [14/16] %v2085, 128
        %2338 = vxpose.xlu0.b32.cont [15/16] %v2197, 128
        %2339 = vxpose.xlu0.b32.end [16/16] %v2309, 128
        %v2340 = vpop.trf.xlu0
        %v2341 = vpop.trf.xlu0
        %v2342 = vpop.trf.xlu0
        %v2343 = vpop.trf.xlu0
        %v2344 = vpop.trf.xlu0
        %v2345 = vpop.trf.xlu0
        %v2346 = vpop.trf.xlu0
        %v2347 = vpop.trf.xlu0
        %v2348 = vpop.trf.xlu0
        %v2349 = vpop.trf.xlu0
        %v2350 = vpop.trf.xlu0
        %v2351 = vpop.trf.xlu0
        %v2352 = vpop.trf.xlu0
        %v2353 = vpop.trf.xlu0
        %v2354 = vpop.trf.xlu0
        %v2355 = vpop.trf.xlu0
        %2356 = vxpose.xlu0.b32.start [1/16] %v631, 128
        %2357 = vxpose.xlu0.b32.cont [2/16] %v743, 128
        %2358 = vxpose.xlu0.b32.cont [3/16] %v855, 128
        %2359 = vxpose.xlu0.b32.cont [4/16] %v967, 128
        %2360 = vxpose.xlu0.b32.cont [5/16] %v1079, 128
        %2361 = vxpose.xlu0.b32.cont [6/16] %v1191, 128
        %2362 = vxpose.xlu0.b32.cont [7/16] %v1303, 128
        %2363 = vxpose.xlu0.b32.cont [8/16] %v1415, 128
        %2364 = vxpose.xlu0.b32.cont [9/16] %v1527, 128
        %2365 = vxpose.xlu0.b32.cont [10/16] %v1639, 128
        %2366 = vxpose.xlu0.b32.cont [11/16] %v1751, 128
        %2367 = vxpose.xlu0.b32.cont [12/16] %v1863, 128
        %2368 = vxpose.xlu0.b32.cont [13/16] %v1975, 128
        %2369 = vxpose.xlu0.b32.cont [14/16] %v2087, 128
        %2370 = vxpose.xlu0.b32.cont [15/16] %v2199, 128
        %2371 = vxpose.xlu0.b32.end [16/16] %v2311, 128
        %v2372 = vpop.trf.xlu0
        %v2373 = vpop.trf.xlu0
        %v2374 = vpop.trf.xlu0
        %v2375 = vpop.trf.xlu0
        %v2376 = vpop.trf.xlu0
        %v2377 = vpop.trf.xlu0
        %v2378 = vpop.trf.xlu0
        %v2379 = vpop.trf.xlu0
        %v2380 = vpop.trf.xlu0
        %v2381 = vpop.trf.xlu0
        %v2382 = vpop.trf.xlu0
        %v2383 = vpop.trf.xlu0
        %v2384 = vpop.trf.xlu0
        %v2385 = vpop.trf.xlu0
        %v2386 = vpop.trf.xlu0
        %v2387 = vpop.trf.xlu0
        %2388 = vxpose.xlu0.b32.start [1/16] %v633, 128
        %2389 = vxpose.xlu0.b32.cont [2/16] %v745, 128
        %2390 = vxpose.xlu0.b32.cont [3/16] %v857, 128
        %2391 = vxpose.xlu0.b32.cont [4/16] %v969, 128
        %2392 = vxpose.xlu0.b32.cont [5/16] %v1081, 128
        %2393 = vxpose.xlu0.b32.cont [6/16] %v1193, 128
        %2394 = vxpose.xlu0.b32.cont [7/16] %v1305, 128
        %2395 = vxpose.xlu0.b32.cont [8/16] %v1417, 128
        %2396 = vxpose.xlu0.b32.cont [9/16] %v1529, 128
        %2397 = vxpose.xlu0.b32.cont [10/16] %v1641, 128
        %2398 = vxpose.xlu0.b32.cont [11/16] %v1753, 128
        %2399 = vxpose.xlu0.b32.cont [12/16] %v1865, 128
        %2400 = vxpose.xlu0.b32.cont [13/16] %v1977, 128
        %2401 = vxpose.xlu0.b32.cont [14/16] %v2089, 128
        %2402 = vxpose.xlu0.b32.cont [15/16] %v2201, 128
        %2403 = vxpose.xlu0.b32.end [16/16] %v2313, 128
        %v2404 = vpop.trf.xlu0
        %v2405 = vpop.trf.xlu0
        %v2406 = vpop.trf.xlu0
        %v2407 = vpop.trf.xlu0
        %v2408 = vpop.trf.xlu0
        %v2409 = vpop.trf.xlu0
        %v2410 = vpop.trf.xlu0
        %v2411 = vpop.trf.xlu0
        %v2412 = vpop.trf.xlu0
        %v2413 = vpop.trf.xlu0
        %v2414 = vpop.trf.xlu0
        %v2415 = vpop.trf.xlu0
        %v2416 = vpop.trf.xlu0
        %v2417 = vpop.trf.xlu0
        %v2418 = vpop.trf.xlu0
        %v2419 = vpop.trf.xlu0
        %2420 = vxpose.xlu0.b32.start [1/16] %v635, 128
        %2421 = vxpose.xlu0.b32.cont [2/16] %v747, 128
        %2422 = vxpose.xlu0.b32.cont [3/16] %v859, 128
        %2423 = vxpose.xlu0.b32.cont [4/16] %v971, 128
        %2424 = vxpose.xlu0.b32.cont [5/16] %v1083, 128
        %2425 = vxpose.xlu0.b32.cont [6/16] %v1195, 128
        %2426 = vxpose.xlu0.b32.cont [7/16] %v1307, 128
        %2427 = vxpose.xlu0.b32.cont [8/16] %v1419, 128
        %2428 = vxpose.xlu0.b32.cont [9/16] %v1531, 128
        %2429 = vxpose.xlu0.b32.cont [10/16] %v1643, 128
        %2430 = vxpose.xlu0.b32.cont [11/16] %v1755, 128
        %2431 = vxpose.xlu0.b32.cont [12/16] %v1867, 128
        %2432 = vxpose.xlu0.b32.cont [13/16] %v1979, 128
        %2433 = vxpose.xlu0.b32.cont [14/16] %v2091, 128
        %2434 = vxpose.xlu0.b32.cont [15/16] %v2203, 128
        %2435 = vxpose.xlu0.b32.end [16/16] %v2315, 128
        %v2436 = vpop.trf.xlu0
        %v2437 = vpop.trf.xlu0
        %v2438 = vpop.trf.xlu0
        %v2439 = vpop.trf.xlu0
        %v2440 = vpop.trf.xlu0
        %v2441 = vpop.trf.xlu0
        %v2442 = vpop.trf.xlu0
        %v2443 = vpop.trf.xlu0
        %v2444 = vpop.trf.xlu0
        %v2445 = vpop.trf.xlu0
        %v2446 = vpop.trf.xlu0
        %v2447 = vpop.trf.xlu0
        %v2448 = vpop.trf.xlu0
        %v2449 = vpop.trf.xlu0
        %v2450 = vpop.trf.xlu0
        %v2451 = vpop.trf.xlu0
        %2452 = vxpose.xlu0.b32.start [1/16] %v637, 128
        %2453 = vxpose.xlu0.b32.cont [2/16] %v749, 128
        %2454 = vxpose.xlu0.b32.cont [3/16] %v861, 128
        %2455 = vxpose.xlu0.b32.cont [4/16] %v973, 128
        %2456 = vxpose.xlu0.b32.cont [5/16] %v1085, 128
        %2457 = vxpose.xlu0.b32.cont [6/16] %v1197, 128
        %2458 = vxpose.xlu0.b32.cont [7/16] %v1309, 128
        %2459 = vxpose.xlu0.b32.cont [8/16] %v1421, 128
        %2460 = vxpose.xlu0.b32.cont [9/16] %v1533, 128
        %2461 = vxpose.xlu0.b32.cont [10/16] %v1645, 128
        %2462 = vxpose.xlu0.b32.cont [11/16] %v1757, 128
        %2463 = vxpose.xlu0.b32.cont [12/16] %v1869, 128
        %2464 = vxpose.xlu0.b32.cont [13/16] %v1981, 128
        %2465 = vxpose.xlu0.b32.cont [14/16] %v2093, 128
        %2466 = vxpose.xlu0.b32.cont [15/16] %v2205, 128
        %2467 = vxpose.xlu0.b32.end [16/16] %v2317, 128
        %v2468 = vpop.trf.xlu0
        %v2469 = vpop.trf.xlu0
        %v2470 = vpop.trf.xlu0
        %v2471 = vpop.trf.xlu0
        %v2472 = vpop.trf.xlu0
        %v2473 = vpop.trf.xlu0
        %v2474 = vpop.trf.xlu0
        %v2475 = vpop.trf.xlu0
        %v2476 = vpop.trf.xlu0
        %v2477 = vpop.trf.xlu0
        %v2478 = vpop.trf.xlu0
        %v2479 = vpop.trf.xlu0
        %v2480 = vpop.trf.xlu0
        %v2481 = vpop.trf.xlu0
        %v2482 = vpop.trf.xlu0
        %v2483 = vpop.trf.xlu0
        %2484 = vxpose.xlu0.b32.start [1/16] %v639, 128
        %2485 = vxpose.xlu0.b32.cont [2/16] %v751, 128
        %2486 = vxpose.xlu0.b32.cont [3/16] %v863, 128
        %2487 = vxpose.xlu0.b32.cont [4/16] %v975, 128
        %2488 = vxpose.xlu0.b32.cont [5/16] %v1087, 128
        %2489 = vxpose.xlu0.b32.cont [6/16] %v1199, 128
        %2490 = vxpose.xlu0.b32.cont [7/16] %v1311, 128
        %2491 = vxpose.xlu0.b32.cont [8/16] %v1423, 128
        %2492 = vxpose.xlu0.b32.cont [9/16] %v1535, 128
        %2493 = vxpose.xlu0.b32.cont [10/16] %v1647, 128
        %2494 = vxpose.xlu0.b32.cont [11/16] %v1759, 128
        %2495 = vxpose.xlu0.b32.cont [12/16] %v1871, 128
        %2496 = vxpose.xlu0.b32.cont [13/16] %v1983, 128
        %2497 = vxpose.xlu0.b32.cont [14/16] %v2095, 128
        %2498 = vxpose.xlu0.b32.cont [15/16] %v2207, 128
        %2499 = vxpose.xlu0.b32.end [16/16] %v2319, 128
        %v2500 = vpop.trf.xlu0
        %v2501 = vpop.trf.xlu0
        %v2502 = vpop.trf.xlu0
        %v2503 = vpop.trf.xlu0
        %v2504 = vpop.trf.xlu0
        %v2505 = vpop.trf.xlu0
        %v2506 = vpop.trf.xlu0
        %v2507 = vpop.trf.xlu0
        %v2508 = vpop.trf.xlu0
        %v2509 = vpop.trf.xlu0
        %v2510 = vpop.trf.xlu0
        %v2511 = vpop.trf.xlu0
        %v2512 = vpop.trf.xlu0
        %v2513 = vpop.trf.xlu0
        %v2514 = vpop.trf.xlu0
        %v2515 = vpop.trf.xlu0
        %2516 = vxpose.xlu0.b32.start [1/16] %v641, 128
        %2517 = vxpose.xlu0.b32.cont [2/16] %v753, 128
        %2518 = vxpose.xlu0.b32.cont [3/16] %v865, 128
        %2519 = vxpose.xlu0.b32.cont [4/16] %v977, 128
        %2520 = vxpose.xlu0.b32.cont [5/16] %v1089, 128
        %2521 = vxpose.xlu0.b32.cont [6/16] %v1201, 128
        %2522 = vxpose.xlu0.b32.cont [7/16] %v1313, 128
        %2523 = vxpose.xlu0.b32.cont [8/16] %v1425, 128
        %2524 = vxpose.xlu0.b32.cont [9/16] %v1537, 128
        %2525 = vxpose.xlu0.b32.cont [10/16] %v1649, 128
        %2526 = vxpose.xlu0.b32.cont [11/16] %v1761, 128
        %2527 = vxpose.xlu0.b32.cont [12/16] %v1873, 128
        %2528 = vxpose.xlu0.b32.cont [13/16] %v1985, 128
        %2529 = vxpose.xlu0.b32.cont [14/16] %v2097, 128
        %2530 = vxpose.xlu0.b32.cont [15/16] %v2209, 128
        %2531 = vxpose.xlu0.b32.end [16/16] %v2321, 128
        %v2532 = vpop.trf.xlu0
        %v2533 = vpop.trf.xlu0
        %v2534 = vpop.trf.xlu0
        %v2535 = vpop.trf.xlu0
        %v2536 = vpop.trf.xlu0
        %v2537 = vpop.trf.xlu0
        %v2538 = vpop.trf.xlu0
        %v2539 = vpop.trf.xlu0
        %v2540 = vpop.trf.xlu0
        %v2541 = vpop.trf.xlu0
        %v2542 = vpop.trf.xlu0
        %v2543 = vpop.trf.xlu0
        %v2544 = vpop.trf.xlu0
        %v2545 = vpop.trf.xlu0
        %v2546 = vpop.trf.xlu0
        %v2547 = vpop.trf.xlu0
        %2548 = vxpose.xlu0.b32.start [1/16] %v643, 128
        %2549 = vxpose.xlu0.b32.cont [2/16] %v755, 128
        %2550 = vxpose.xlu0.b32.cont [3/16] %v867, 128
        %2551 = vxpose.xlu0.b32.cont [4/16] %v979, 128
        %2552 = vxpose.xlu0.b32.cont [5/16] %v1091, 128
        %2553 = vxpose.xlu0.b32.cont [6/16] %v1203, 128
        %2554 = vxpose.xlu0.b32.cont [7/16] %v1315, 128
        %2555 = vxpose.xlu0.b32.cont [8/16] %v1427, 128
        %2556 = vxpose.xlu0.b32.cont [9/16] %v1539, 128
        %2557 = vxpose.xlu0.b32.cont [10/16] %v1651, 128
        %2558 = vxpose.xlu0.b32.cont [11/16] %v1763, 128
        %2559 = vxpose.xlu0.b32.cont [12/16] %v1875, 128
        %2560 = vxpose.xlu0.b32.cont [13/16] %v1987, 128
        %2561 = vxpose.xlu0.b32.cont [14/16] %v2099, 128
        %2562 = vxpose.xlu0.b32.cont [15/16] %v2211, 128
        %2563 = vxpose.xlu0.b32.end [16/16] %v2323, 128
        %v2564 = vpop.trf.xlu0
        %v2565 = vpop.trf.xlu0
        %v2566 = vpop.trf.xlu0
        %v2567 = vpop.trf.xlu0
        %v2568 = vpop.trf.xlu0
        %v2569 = vpop.trf.xlu0
        %v2570 = vpop.trf.xlu0
        %v2571 = vpop.trf.xlu0
        %v2572 = vpop.trf.xlu0
        %v2573 = vpop.trf.xlu0
        %v2574 = vpop.trf.xlu0
        %v2575 = vpop.trf.xlu0
        %v2576 = vpop.trf.xlu0
        %v2577 = vpop.trf.xlu0
        %v2578 = vpop.trf.xlu0
        %v2579 = vpop.trf.xlu0
        %2580 = vst [vmem:[%s152] sm:$0xff] %v2340
        %2581 = vst [vmem:[%s152 + $0x8] sm:$0xff] %v2372
        %2582 = vst [vmem:[%s152 + $0x10] sm:$0xff] %v2404
        %2583 = vst [vmem:[%s152 + $0x18] sm:$0xff] %v2436
        %2584 = vst [vmem:[%s152 + $0x20] sm:$0xff] %v2468
        %2585 = vst [vmem:[%s152 + $0x28] sm:$0xff] %v2500
        %2586 = vst [vmem:[%s152 + $0x30] sm:$0xff] %v2532
        %2587 = vst [vmem:[%s152 + $0x38] sm:$0xff] %v2564
        %s2588 = sand.u32 %s68, 1
        %s2589 = scalar_lea.sflag [#allocation4], %s2588
        %s2590 = sand.u32 %s68, 1
        %s2591 = smul.addr %s2590, 64
        %s2592 = scalar_lea.vmem [#allocation5], %s2591
        // Predicated region
        $region29: #{tpu_custom_call.1} parent=23 // pred_check
          %p2593 = pneg %p78
        $region30: #{tpu_custom_call.1} parent=23 // pred_check_branch
          %2595 = sbr.rel (%p2593) target = $region32
        $region31: #{tpu_custom_call.1} parent=23 // pred_region
          %s2596 = smul.u32 8, %s23
          %2598 = vsyncadd %s2589, 0
          %s2599 = smul.addr %s2596, 2
          %s2600 = sadd.s32 %s22, %s2599
          %s2601 = smul.addr %s2600, 8
          %s2602 = scalar_lea.hbm %s1, %s2601
          %s2603 = sshll.u32 %s2592, 4
          %s2604 = int_to_ptr.vmem [resolvable:$true] %s2603
          %s2605 = sshll.u32 %s2602, 4
          %s2606 = int_to_ptr.hbm [resolvable:$true] %s2605
          %2611 = dma.vmem_to_hbm [thread:$0]  %s2604, 1024, %s2606, %s2589, 128, 256, 8
        $region32: #{tpu_custom_call.1} parent=23 // pred_fallthru
          _
      $region24: #{tpu_custom_call.1} parent=5 // pred_fallthru
        _
      %p2612 = scmp.le.s32.totalorder 2, %s13
      // Predicated region
      $region33: #{tpu_custom_call.1} parent=5 // pred_check
        %p2613 = pneg %p2612
      $region34: #{tpu_custom_call.1} parent=5 // pred_check_branch
        %2615 = sbr.rel (%p2613) target = $region36
      $region35: #{tpu_custom_call.1} parent=5 // pred_region
        %s2616 = ssub.s32 %s13, 2
        // Predicated region
        $region37: #{tpu_custom_call.1} parent=35 // pred_check
          %p2617 = pneg %p84
        $region38: #{tpu_custom_call.1} parent=35 // pred_check_branch
          %2619 = sbr.rel (%p2617) target = $region40
        $region39: #{tpu_custom_call.1} parent=35 // pred_region
          %s2620 = sand.u32 %s69, 1
          %s2621 = scalar_lea.sflag [#allocation4], %s2620
          %s2622 = sand.u32 %s69, 1
          %s2623 = smul.addr %s2622, 64
          %s2624 = scalar_lea.vmem [#allocation5], %s2623
          %2626 = dma.done %s2621, 1024
        $region40: #{tpu_custom_call.1} parent=35 // pred_fallthru
          _
      $region36: #{tpu_custom_call.1} parent=5 // pred_fallthru
        _
    $region6: #{tpu_custom_call.1} parent=1 // loop_footer
      %s17 = sadd.s32 1, %s13
    $region7: #{tpu_custom_call.1} parent=1 // loop_footer_branch
      %12 = sbr.rel target = $region3
    $region8: #{tpu_custom_call.1} parent=1 // loop_exit
      _
    %2627 = vsyncpa [#allocation3], 1
    %s2628 = scalar_lea.sflag [#allocation3], 1
    %2629 = vsyncpa %s2628, 1
    %2630 = vsyncpa [#allocation4], 1
    %s2631 = scalar_lea.sflag [#allocation4], 1
    %2632 = vsyncpa %s2631, 1

// kernel: tpu_custom_call.1
$region0: #{tpu_custom_call.1}
  #allocation0 [shape = 'u32[]', space=smem, size = 0x4, offset = 0x4, fixed_abs, tag = 'smem constant byte address 0x4 - core index']
  #allocation1 [shape = 'u32[72,128]{1,0:T(1,128)}', space=vmem, size = 0x9000, scoped, tag = 'internal scratch']
  %s0 = inlined_call_operand.vmem [shape: f32[8,256,8], index: 0, kind: input, shape index: {}]
  %s1 = inlined_call_operand.hbm [shape: f32[8,8,256], index: 1, kind: output, shape index: {}]
  %s2 = sld [smem:[#allocation0]]
  $region75: #{tpu_custom_call.1} parent=0
    _
  %s4 = ssub.s32 1, %s2
  %s5 = scalar_select 0, %s4, %s2
  $region1: #{tpu_custom_call.1} parent=0
    #allocation2 [shape = 'u8[1048576]{0}', space=vmem, size = 0x100000, scoped, tag = 'input window, operand 0']
    #allocation3 [shape = 'u8[65536]{0}', space=vmem, size = 0x10000, scoped, tag = 'output window, operand 0']
    #allocation4 [shape = 's32[2]{0}', space=sflag, size = 0x8, scoped, tag = 'scoped memory for tpu_custom_call.1']
    %6 = vsyncpa [#allocation4], 0
    %s7 = scalar_lea.sflag [#allocation4], 1
    %8 = vsyncpa %s7, 0
    loop: start=0, step=1, limit=4
    $region2: #{tpu_custom_call.1} parent=1 // loop_pre_header
      _
    $region3: #{tpu_custom_call.1} parent=1 // loop_header
      %s10 = sphi 0, %s14
      %p11 = scmp.ge.s32.totalorder %s10, 4
      %s17 = sphi 0, %s29
      %s18 = sphi 0, %s25
      %s19 = sphi 0, %s17
      %s20 = sphi 0, %s18
      %s21 = sphi 0, %s19
      %s22 = sphi 0, %s20
      %s34 = sphi 0, %s36
      %s37 = sphi 0, %s34
      %s38 = sphi 0, %s37
      %s54 = sphi 0, %s38
      %s62 = sphi 0, %s64
      %s65 = sphi 0, %s62
      %s66 = sphi 0, %s65
      %s82 = sphi 0, %s66
    $region4: #{tpu_custom_call.1} parent=1 // loop_header_branch
      %13 = sbr.rel (%p11) target = $region8
    $region5: #{tpu_custom_call.1} parent=1 // loop_body
      %s15 = ssub.s32 %s10, 1
      %s16 = ssub.s32 %s10, 2
      %s23 = sadd.s32 1, %s18
      %p24 = scmp.ge.s32.totalorder %s23, 1
      %s25 = scalar_select %p24, 0, %s23
      %s26 = sadd.s32 1, %s17
      %s27 = scalar_select %p24, %s26, %s17
      %p28 = scmp.ge.s32.totalorder %s27, 2
      %s29 = scalar_select %p28, 0, %s27
      %s30 = ssub.s32 %s18, %s25
      %s31 = ssub.s32 %s17, %s29
      %s32 = sor.u32 %s30, %s31
      %p33 = scmp.eq.s32.totalorder %s32, 0
      %s35 = sadd.s32 %s34, 1
      %s36 = scalar_select %p33, %s34, %s35
      %p39 = pneg %p33
      %p40 = scmp.eq.s32.totalorder %s10, 1
      %p41 = por %p39, %p40
      %p42 = scmp.ne.s32.totalorder %s34, %s37
      %p43 = scmp.eq.s32.totalorder %s10, 0
      %p44 = por %p42, %p43
      %p45 = scmp.ne.s32.totalorder %s34, %s37
      %p46 = scmp.eq.s32.totalorder %s15, 1
      %p47 = por %p45, %p46
      %p48 = scmp.ne.s32.totalorder %s37, %s38
      %p49 = scmp.eq.s32.totalorder %s15, 0
      %p50 = por %p48, %p49
      %p51 = scmp.ne.s32.totalorder %s37, %s38
      %p52 = scmp.eq.s32.totalorder %s16, 1
      %p53 = por %p51, %p52
      %p55 = scmp.ne.s32.totalorder %s38, %s54
      %p56 = scmp.eq.s32.totalorder %s16, 0
      %p57 = por %p55, %p56
      %s58 = ssub.s32 %s18, %s25
      %s59 = ssub.s32 %s17, %s29
      %s60 = sor.u32 %s58, %s59
      %p61 = scmp.eq.s32.totalorder %s60, 0
      %s63 = sadd.s32 %s62, 1
      %s64 = scalar_select %p61, %s62, %s63
      %p67 = pneg %p61
      %p68 = scmp.eq.s32.totalorder %s10, 1
      %p69 = por %p67, %p68
      %p70 = scmp.ne.s32.totalorder %s62, %s65
      %p71 = scmp.eq.s32.totalorder %s10, 0
      %p72 = por %p70, %p71
      %p73 = scmp.ne.s32.totalorder %s62, %s65
      %p74 = scmp.eq.s32.totalorder %s15, 1
      %p75 = por %p73, %p74
      %p76 = scmp.ne.s32.totalorder %s65, %s66
      %p77 = scmp.eq.s32.totalorder %s15, 0
      %p78 = por %p76, %p77
      %p79 = scmp.ne.s32.totalorder %s65, %s66
      %p80 = scmp.eq.s32.totalorder %s16, 1
      %p81 = por %p79, %p80
      %p83 = scmp.ne.s32.totalorder %s66, %s82
      %p84 = scmp.eq.s32.totalorder %s16, 0
      %p85 = por %p83, %p84
      %p86 = scmp.le.s32.totalorder 1, %s10
      %p87 = scmp.lt.s32.totalorder %s10, 3
      %p88 = pnand %p86, %p87
      %p89 = pneg %p88
      // Predicated region
      $region9: #{tpu_custom_call.1} parent=5 // pred_check
        _
      $region10: #{tpu_custom_call.1} parent=5 // pred_check_branch
        %91 = sbr.rel (%p88) target = $region12
      $region11: #{tpu_custom_call.1} parent=5 // pred_region
        %s92 = ssub.s32 %s10, 1
      $region12: #{tpu_custom_call.1} parent=5 // pred_fallthru
        _
      %p93 = scmp.lt.s32.totalorder %s10, 2
      // Predicated region
      $region13: #{tpu_custom_call.1} parent=5 // pred_check
        %p94 = pneg %p93
      $region14: #{tpu_custom_call.1} parent=5 // pred_check_branch
        %96 = sbr.rel (%p94) target = $region16
      $region15: #{tpu_custom_call.1} parent=5 // pred_region
        // Predicated region
        $region17: #{tpu_custom_call.1} parent=15 // pred_check
          %p97 = pneg %p44
        $region18: #{tpu_custom_call.1} parent=15 // pred_check_branch
          %99 = sbr.rel (%p97) target = $region20
        $region19: #{tpu_custom_call.1} parent=15 // pred_region
          %s100 = sand.u32 %s34, 1
          %s101 = sand.u32 %s34, 1
          %s102 = smul.addr %s101, 1024
          %s103 = scalar_lea.vmem [#allocation2], %s102
          %s104 = smul.u32 8, %s18
          %s105 = smul.u32 16, %s17
          %s106 = smul.addr %s104, 32
          %s107 = sadd.s32 %s105, %s106
          %s108 = smul.addr %s107, 8
          %s109 = scalar_lea.vmem %s0, %s108
          // Predicated region
          $region21: #{tpu_custom_call.1} parent=19 // pred_check
            _
          $region22: #{tpu_custom_call.1} parent=19 // pred_check_branch
            %111 = sbr.rel (0) target = $region24
          $region23: #{tpu_custom_call.1} parent=19 // pred_region
            // Predicated region
            $region25: #{tpu_custom_call.1} parent=23 // pred_check
              _
            $region26: #{tpu_custom_call.1} parent=23 // pred_check_branch
              %113 = sbr.rel (0) target = $region28
            $region27: #{tpu_custom_call.1} parent=23 // pred_region
              // Predicated region
              $region40: #{tpu_custom_call.1} parent=27 // pred_check
                _
              $region41: #{tpu_custom_call.1} parent=27 // pred_check_branch
                %383 = sbr.rel (0) target = $region43
              $region42: #{tpu_custom_call.1} parent=27 // pred_region
                loop: start=0, step=1, limit=1
                $region44: #{tpu_custom_call.1} parent=42 // loop_pre_header
                  _
                $region45: #{tpu_custom_call.1} parent=42 // loop_header
                  %s385 = sphi 0, %s389
                  %p386 = scmp.ge.s32.totalorder %s385, 1
                  %s390 = sphi %s109, %s109
                  %s391 = sphi %s103, %s103
                $region46: #{tpu_custom_call.1} parent=42 // loop_header_branch
                  %388 = sbr.rel (%p386) target = $region50
                $region47: #{tpu_custom_call.1} parent=42 // loop_body
                  %v392 = vld [vmem:[%s390] sm:$0xff]
                  %393 = vst [vmem:[%s391] sm:$0xff] %v392
                  %v394 = vld [vmem:[%s390 + $0x8] sm:$0xff]
                  %395 = vst [vmem:[%s391 + $0x8] sm:$0xff] %v394
                  %v396 = vld [vmem:[%s390 + $0x10] sm:$0xff]
                  %397 = vst [vmem:[%s391 + $0x10] sm:$0xff] %v396
                  %v398 = vld [vmem:[%s390 + $0x18] sm:$0xff]
                  %399 = vst [vmem:[%s391 + $0x18] sm:$0xff] %v398
                  %v400 = vld [vmem:[%s390 + $0x20] sm:$0xff]
                  %401 = vst [vmem:[%s391 + $0x20] sm:$0xff] %v400
                  %v402 = vld [vmem:[%s390 + $0x28] sm:$0xff]
                  %403 = vst [vmem:[%s391 + $0x28] sm:$0xff] %v402
                  %v404 = vld [vmem:[%s390 + $0x30] sm:$0xff]
                  %405 = vst [vmem:[%s391 + $0x30] sm:$0xff] %v404
                  %v406 = vld [vmem:[%s390 + $0x38] sm:$0xff]
                  %407 = vst [vmem:[%s391 + $0x38] sm:$0xff] %v406
                  %v408 = vld [vmem:[%s390 + $0x40] sm:$0xff]
                  %409 = vst [vmem:[%s391 + $0x40] sm:$0xff] %v408
                  %v410 = vld [vmem:[%s390 + $0x48] sm:$0xff]
                  %411 = vst [vmem:[%s391 + $0x48] sm:$0xff] %v410
                  %v412 = vld [vmem:[%s390 + $0x50] sm:$0xff]
                  %413 = vst [vmem:[%s391 + $0x50] sm:$0xff] %v412
                  %v414 = vld [vmem:[%s390 + $0x58] sm:$0xff]
                  %415 = vst [vmem:[%s391 + $0x58] sm:$0xff] %v414
                  %v416 = vld [vmem:[%s390 + $0x60] sm:$0xff]
                  %417 = vst [vmem:[%s391 + $0x60] sm:$0xff] %v416
                  %v418 = vld [vmem:[%s390 + $0x68] sm:$0xff]
                  %419 = vst [vmem:[%s391 + $0x68] sm:$0xff] %v418
                  %v420 = vld [vmem:[%s390 + $0x70] sm:$0xff]
                  %421 = vst [vmem:[%s391 + $0x70] sm:$0xff] %v420
                  %v422 = vld [vmem:[%s390 + $0x78] sm:$0xff]
                  %423 = vst [vmem:[%s391 + $0x78] sm:$0xff] %v422
                  %v424 = vld [vmem:[%s390 + $0x100] sm:$0xff]
                  %425 = vst [vmem:[%s391 + $0x80] sm:$0xff] %v424
                  %v426 = vld [vmem:[%s390 + $0x108] sm:$0xff]
                  %427 = vst [vmem:[%s391 + $0x88] sm:$0xff] %v426
                  %v428 = vld [vmem:[%s390 + $0x110] sm:$0xff]
                  %429 = vst [vmem:[%s391 + $0x90] sm:$0xff] %v428
                  %v430 = vld [vmem:[%s390 + $0x118] sm:$0xff]
                  %431 = vst [vmem:[%s391 + $0x98] sm:$0xff] %v430
                  %v432 = vld [vmem:[%s390 + $0x120] sm:$0xff]
                  %433 = vst [vmem:[%s391 + $0xa0] sm:$0xff] %v432
                  %v434 = vld [vmem:[%s390 + $0x128] sm:$0xff]
                  %435 = vst [vmem:[%s391 + $0xa8] sm:$0xff] %v434
                  %v436 = vld [vmem:[%s390 + $0x130] sm:$0xff]
                  %437 = vst [vmem:[%s391 + $0xb0] sm:$0xff] %v436
                  %v438 = vld [vmem:[%s390 + $0x138] sm:$0xff]
                  %439 = vst [vmem:[%s391 + $0xb8] sm:$0xff] %v438
                  %v440 = vld [vmem:[%s390 + $0x140] sm:$0xff]
                  %441 = vst [vmem:[%s391 + $0xc0] sm:$0xff] %v440
                  %v442 = vld [vmem:[%s390 + $0x148] sm:$0xff]
                  %443 = vst [vmem:[%s391 + $0xc8] sm:$0xff] %v442
                  %v444 = vld [vmem:[%s390 + $0x150] sm:$0xff]
                  %445 = vst [vmem:[%s391 + $0xd0] sm:$0xff] %v444
                  %v446 = vld [vmem:[%s390 + $0x158] sm:$0xff]
                  %447 = vst [vmem:[%s391 + $0xd8] sm:$0xff] %v446
                  %v448 = vld [vmem:[%s390 + $0x160] sm:$0xff]
                  %449 = vst [vmem:[%s391 + $0xe0] sm:$0xff] %v448
                  %v450 = vld [vmem:[%s390 + $0x168] sm:$0xff]
                  %451 = vst [vmem:[%s391 + $0xe8] sm:$0xff] %v450
                  %v452 = vld [vmem:[%s390 + $0x170] sm:$0xff]
                  %453 = vst [vmem:[%s391 + $0xf0] sm:$0xff] %v452
                  %v454 = vld [vmem:[%s390 + $0x178] sm:$0xff]
                  %455 = vst [vmem:[%s391 + $0xf8] sm:$0xff] %v454
                  %v456 = vld [vmem:[%s390 + $0x200] sm:$0xff]
                  %457 = vst [vmem:[%s391 + $0x100] sm:$0xff] %v456
                  %v458 = vld [vmem:[%s390 + $0x208] sm:$0xff]
                  %459 = vst [vmem:[%s391 + $0x108] sm:$0xff] %v458
                  %v460 = vld [vmem:[%s390 + $0x210] sm:$0xff]
                  %461 = vst [vmem:[%s391 + $0x110] sm:$0xff] %v460
                  %v462 = vld [vmem:[%s390 + $0x218] sm:$0xff]
                  %463 = vst [vmem:[%s391 + $0x118] sm:$0xff] %v462
                  %v464 = vld [vmem:[%s390 + $0x220] sm:$0xff]
                  %465 = vst [vmem:[%s391 + $0x120] sm:$0xff] %v464
                  %v466 = vld [vmem:[%s390 + $0x228] sm:$0xff]
                  %467 = vst [vmem:[%s391 + $0x128] sm:$0xff] %v466
                  %v468 = vld [vmem:[%s390 + $0x230] sm:$0xff]
                  %469 = vst [vmem:[%s391 + $0x130] sm:$0xff] %v468
                  %v470 = vld [vmem:[%s390 + $0x238] sm:$0xff]
                  %471 = vst [vmem:[%s391 + $0x138] sm:$0xff] %v470
                  %v472 = vld [vmem:[%s390 + $0x240] sm:$0xff]
                  %473 = vst [vmem:[%s391 + $0x140] sm:$0xff] %v472
                  %v474 = vld [vmem:[%s390 + $0x248] sm:$0xff]
                  %475 = vst [vmem:[%s391 + $0x148] sm:$0xff] %v474
                  %v476 = vld [vmem:[%s390 + $0x250] sm:$0xff]
                  %477 = vst [vmem:[%s391 + $0x150] sm:$0xff] %v476
                  %v478 = vld [vmem:[%s390 + $0x258] sm:$0xff]
                  %479 = vst [vmem:[%s391 + $0x158] sm:$0xff] %v478
                  %v480 = vld [vmem:[%s390 + $0x260] sm:$0xff]
                  %481 = vst [vmem:[%s391 + $0x160] sm:$0xff] %v480
                  %v482 = vld [vmem:[%s390 + $0x268] sm:$0xff]
                  %483 = vst [vmem:[%s391 + $0x168] sm:$0xff] %v482
                  %v484 = vld [vmem:[%s390 + $0x270] sm:$0xff]
                  %485 = vst [vmem:[%s391 + $0x170] sm:$0xff] %v484
                  %v486 = vld [vmem:[%s390 + $0x278] sm:$0xff]
                  %487 = vst [vmem:[%s391 + $0x178] sm:$0xff] %v486
                  %v488 = vld [vmem:[%s390 + $0x300] sm:$0xff]
                  %489 = vst [vmem:[%s391 + $0x180] sm:$0xff] %v488
                  %v490 = vld [vmem:[%s390 + $0x308] sm:$0xff]
                  %491 = vst [vmem:[%s391 + $0x188] sm:$0xff] %v490
                  %v492 = vld [vmem:[%s390 + $0x310] sm:$0xff]
                  %493 = vst [vmem:[%s391 + $0x190] sm:$0xff] %v492
                  %v494 = vld [vmem:[%s390 + $0x318] sm:$0xff]
                  %495 = vst [vmem:[%s391 + $0x198] sm:$0xff] %v494
                  %v496 = vld [vmem:[%s390 + $0x320] sm:$0xff]
                  %497 = vst [vmem:[%s391 + $0x1a0] sm:$0xff] %v496
                  %v498 = vld [vmem:[%s390 + $0x328] sm:$0xff]
                  %499 = vst [vmem:[%s391 + $0x1a8] sm:$0xff] %v498
                  %v500 = vld [vmem:[%s390 + $0x330] sm:$0xff]
                  %501 = vst [vmem:[%s391 + $0x1b0] sm:$0xff] %v500
                  %v502 = vld [vmem:[%s390 + $0x338] sm:$0xff]
                  %503 = vst [vmem:[%s391 + $0x1b8] sm:$0xff] %v502
                  %v504 = vld [vmem:[%s390 + $0x340] sm:$0xff]
                  %505 = vst [vmem:[%s391 + $0x1c0] sm:$0xff] %v504
                  %v506 = vld [vmem:[%s390 + $0x348] sm:$0xff]
                  %507 = vst [vmem:[%s391 + $0x1c8] sm:$0xff] %v506
                  %v508 = vld [vmem:[%s390 + $0x350] sm:$0xff]
                  %509 = vst [vmem:[%s391 + $0x1d0] sm:$0xff] %v508
                  %v510 = vld [vmem:[%s390 + $0x358] sm:$0xff]
                  %511 = vst [vmem:[%s391 + $0x1d8] sm:$0xff] %v510
                  %v512 = vld [vmem:[%s390 + $0x360] sm:$0xff]
                  %513 = vst [vmem:[%s391 + $0x1e0] sm:$0xff] %v512
                  %v514 = vld [vmem:[%s390 + $0x368] sm:$0xff]
                  %515 = vst [vmem:[%s391 + $0x1e8] sm:$0xff] %v514
                  %v516 = vld [vmem:[%s390 + $0x370] sm:$0xff]
                  %517 = vst [vmem:[%s391 + $0x1f0] sm:$0xff] %v516
                  %v518 = vld [vmem:[%s390 + $0x378] sm:$0xff]
                  %519 = vst [vmem:[%s391 + $0x1f8] sm:$0xff] %v518
                  %v520 = vld [vmem:[%s390 + $0x400] sm:$0xff]
                  %521 = vst [vmem:[%s391 + $0x200] sm:$0xff] %v520
                  %v522 = vld [vmem:[%s390 + $0x408] sm:$0xff]
                  %523 = vst [vmem:[%s391 + $0x208] sm:$0xff] %v522
                  %v524 = vld [vmem:[%s390 + $0x410] sm:$0xff]
                  %525 = vst [vmem:[%s391 + $0x210] sm:$0xff] %v524
                  %v526 = vld [vmem:[%s390 + $0x418] sm:$0xff]
                  %527 = vst [vmem:[%s391 + $0x218] sm:$0xff] %v526
                  %v528 = vld [vmem:[%s390 + $0x420] sm:$0xff]
                  %529 = vst [vmem:[%s391 + $0x220] sm:$0xff] %v528
                  %v530 = vld [vmem:[%s390 + $0x428] sm:$0xff]
                  %531 = vst [vmem:[%s391 + $0x228] sm:$0xff] %v530
                  %v532 = vld [vmem:[%s390 + $0x430] sm:$0xff]
                  %533 = vst [vmem:[%s391 + $0x230] sm:$0xff] %v532
                  %v534 = vld [vmem:[%s390 + $0x438] sm:$0xff]
                  %535 = vst [vmem:[%s391 + $0x238] sm:$0xff] %v534
                  %v536 = vld [vmem:[%s390 + $0x440] sm:$0xff]
                  %537 = vst [vmem:[%s391 + $0x240] sm:$0xff] %v536
                  %v538 = vld [vmem:[%s390 + $0x448] sm:$0xff]
                  %539 = vst [vmem:[%s391 + $0x248] sm:$0xff] %v538
                  %v540 = vld [vmem:[%s390 + $0x450] sm:$0xff]
                  %541 = vst [vmem:[%s391 + $0x250] sm:$0xff] %v540
                  %v542 = vld [vmem:[%s390 + $0x458] sm:$0xff]
                  %543 = vst [vmem:[%s391 + $0x258] sm:$0xff] %v542
                  %v544 = vld [vmem:[%s390 + $0x460] sm:$0xff]
                  %545 = vst [vmem:[%s391 + $0x260] sm:$0xff] %v544
                  %v546 = vld [vmem:[%s390 + $0x468] sm:$0xff]
                  %547 = vst [vmem:[%s391 + $0x268] sm:$0xff] %v546
                  %v548 = vld [vmem:[%s390 + $0x470] sm:$0xff]
                  %549 = vst [vmem:[%s391 + $0x270] sm:$0xff] %v548
                  %v550 = vld [vmem:[%s390 + $0x478] sm:$0xff]
                  %551 = vst [vmem:[%s391 + $0x278] sm:$0xff] %v550
                  %v552 = vld [vmem:[%s390 + $0x500] sm:$0xff]
                  %553 = vst [vmem:[%s391 + $0x280] sm:$0xff] %v552
                  %v554 = vld [vmem:[%s390 + $0x508] sm:$0xff]
                  %555 = vst [vmem:[%s391 + $0x288] sm:$0xff] %v554
                  %v556 = vld [vmem:[%s390 + $0x510] sm:$0xff]
                  %557 = vst [vmem:[%s391 + $0x290] sm:$0xff] %v556
                  %v558 = vld [vmem:[%s390 + $0x518] sm:$0xff]
                  %559 = vst [vmem:[%s391 + $0x298] sm:$0xff] %v558
                  %v560 = vld [vmem:[%s390 + $0x520] sm:$0xff]
                  %561 = vst [vmem:[%s391 + $0x2a0] sm:$0xff] %v560
                  %v562 = vld [vmem:[%s390 + $0x528] sm:$0xff]
                  %563 = vst [vmem:[%s391 + $0x2a8] sm:$0xff] %v562
                  %v564 = vld [vmem:[%s390 + $0x530] sm:$0xff]
                  %565 = vst [vmem:[%s391 + $0x2b0] sm:$0xff] %v564
                  %v566 = vld [vmem:[%s390 + $0x538] sm:$0xff]
                  %567 = vst [vmem:[%s391 + $0x2b8] sm:$0xff] %v566
                  %v568 = vld [vmem:[%s390 + $0x540] sm:$0xff]
                  %569 = vst [vmem:[%s391 + $0x2c0] sm:$0xff] %v568
                  %v570 = vld [vmem:[%s390 + $0x548] sm:$0xff]
                  %571 = vst [vmem:[%s391 + $0x2c8] sm:$0xff] %v570
                  %v572 = vld [vmem:[%s390 + $0x550] sm:$0xff]
                  %573 = vst [vmem:[%s391 + $0x2d0] sm:$0xff] %v572
                  %v574 = vld [vmem:[%s390 + $0x558] sm:$0xff]
                  %575 = vst [vmem:[%s391 + $0x2d8] sm:$0xff] %v574
                  %v576 = vld [vmem:[%s390 + $0x560] sm:$0xff]
                  %577 = vst [vmem:[%s391 + $0x2e0] sm:$0xff] %v576
                  %v578 = vld [vmem:[%s390 + $0x568] sm:$0xff]
                  %579 = vst [vmem:[%s391 + $0x2e8] sm:$0xff] %v578
                  %v580 = vld [vmem:[%s390 + $0x570] sm:$0xff]
                  %581 = vst [vmem:[%s391 + $0x2f0] sm:$0xff] %v580
                  %v582 = vld [vmem:[%s390 + $0x578] sm:$0xff]
                  %583 = vst [vmem:[%s391 + $0x2f8] sm:$0xff] %v582
                  %v584 = vld [vmem:[%s390 + $0x600] sm:$0xff]
                  %585 = vst [vmem:[%s391 + $0x300] sm:$0xff] %v584
                  %v586 = vld [vmem:[%s390 + $0x608] sm:$0xff]
                  %587 = vst [vmem:[%s391 + $0x308] sm:$0xff] %v586
                  %v588 = vld [vmem:[%s390 + $0x610] sm:$0xff]
                  %589 = vst [vmem:[%s391 + $0x310] sm:$0xff] %v588
                  %v590 = vld [vmem:[%s390 + $0x618] sm:$0xff]
                  %591 = vst [vmem:[%s391 + $0x318] sm:$0xff] %v590
                  %v592 = vld [vmem:[%s390 + $0x620] sm:$0xff]
                  %593 = vst [vmem:[%s391 + $0x320] sm:$0xff] %v592
                  %v594 = vld [vmem:[%s390 + $0x628] sm:$0xff]
                  %595 = vst [vmem:[%s391 + $0x328] sm:$0xff] %v594
                  %v596 = vld [vmem:[%s390 + $0x630] sm:$0xff]
                  %597 = vst [vmem:[%s391 + $0x330] sm:$0xff] %v596
                  %v598 = vld [vmem:[%s390 + $0x638] sm:$0xff]
                  %599 = vst [vmem:[%s391 + $0x338] sm:$0xff] %v598
                  %v600 = vld [vmem:[%s390 + $0x640] sm:$0xff]
                  %601 = vst [vmem:[%s391 + $0x340] sm:$0xff] %v600
                  %v602 = vld [vmem:[%s390 + $0x648] sm:$0xff]
                  %603 = vst [vmem:[%s391 + $0x348] sm:$0xff] %v602
                  %v604 = vld [vmem:[%s390 + $0x650] sm:$0xff]
                  %605 = vst [vmem:[%s391 + $0x350] sm:$0xff] %v604
                  %v606 = vld [vmem:[%s390 + $0x658] sm:$0xff]
                  %607 = vst [vmem:[%s391 + $0x358] sm:$0xff] %v606
                  %v608 = vld [vmem:[%s390 + $0x660] sm:$0xff]
                  %609 = vst [vmem:[%s391 + $0x360] sm:$0xff] %v608
                  %v610 = vld [vmem:[%s390 + $0x668] sm:$0xff]
                  %611 = vst [vmem:[%s391 + $0x368] sm:$0xff] %v610
                  %v612 = vld [vmem:[%s390 + $0x670] sm:$0xff]
                  %613 = vst [vmem:[%s391 + $0x370] sm:$0xff] %v612
                  %v614 = vld [vmem:[%s390 + $0x678] sm:$0xff]
                  %615 = vst [vmem:[%s391 + $0x378] sm:$0xff] %v614
                  %v616 = vld [vmem:[%s390 + $0x700] sm:$0xff]
                  %617 = vst [vmem:[%s391 + $0x380] sm:$0xff] %v616
                  %v618 = vld [vmem:[%s390 + $0x708] sm:$0xff]
                  %619 = vst [vmem:[%s391 + $0x388] sm:$0xff] %v618
                  %v620 = vld [vmem:[%s390 + $0x710] sm:$0xff]
                  %621 = vst [vmem:[%s391 + $0x390] sm:$0xff] %v620
                  %v622 = vld [vmem:[%s390 + $0x718] sm:$0xff]
                  %623 = vst [vmem:[%s391 + $0x398] sm:$0xff] %v622
                  %v624 = vld [vmem:[%s390 + $0x720] sm:$0xff]
                  %625 = vst [vmem:[%s391 + $0x3a0] sm:$0xff] %v624
                  %v626 = vld [vmem:[%s390 + $0x728] sm:$0xff]
                  %627 = vst [vmem:[%s391 + $0x3a8] sm:$0xff] %v626
                  %v628 = vld [vmem:[%s390 + $0x730] sm:$0xff]
                  %629 = vst [vmem:[%s391 + $0x3b0] sm:$0xff] %v628
                  %v630 = vld [vmem:[%s390 + $0x738] sm:$0xff]
                  %631 = vst [vmem:[%s391 + $0x3b8] sm:$0xff] %v630
                  %v632 = vld [vmem:[%s390 + $0x740] sm:$0xff]
                  %633 = vst [vmem:[%s391 + $0x3c0] sm:$0xff] %v632
                  %v634 = vld [vmem:[%s390 + $0x748] sm:$0xff]
                  %635 = vst [vmem:[%s391 + $0x3c8] sm:$0xff] %v634
                  %v636 = vld [vmem:[%s390 + $0x750] sm:$0xff]
                  %637 = vst [vmem:[%s391 + $0x3d0] sm:$0xff] %v636
                  %v638 = vld [vmem:[%s390 + $0x758] sm:$0xff]
                  %639 = vst [vmem:[%s391 + $0x3d8] sm:$0xff] %v638
                  %v640 = vld [vmem:[%s390 + $0x760] sm:$0xff]
                  %641 = vst [vmem:[%s391 + $0x3e0] sm:$0xff] %v640
                  %v642 = vld [vmem:[%s390 + $0x768] sm:$0xff]
                  %643 = vst [vmem:[%s391 + $0x3e8] sm:$0xff] %v642
                  %v644 = vld [vmem:[%s390 + $0x770] sm:$0xff]
                  %645 = vst [vmem:[%s391 + $0x3f0] sm:$0xff] %v644
                  %v646 = vld [vmem:[%s390 + $0x778] sm:$0xff]
                  %647 = vst [vmem:[%s391 + $0x3f8] sm:$0xff] %v646
                $region48: #{tpu_custom_call.1} parent=42 // loop_footer
                  %s389 = sadd.s32 1, %s385
                $region49: #{tpu_custom_call.1} parent=42 // loop_footer_branch
                  %384 = sbr.rel target = $region45
                $region50: #{tpu_custom_call.1} parent=42 // loop_exit
                  _
              $region43: #{tpu_custom_call.1} parent=27 // pred_fallthru
                _
              // Predicated region
              $region51: #{tpu_custom_call.1} parent=27 // pred_check
                _
              $region52: #{tpu_custom_call.1} parent=27 // pred_check_branch
                %649 = sbr.rel target = $region54
              $region53: #{tpu_custom_call.1} parent=27 // pred_region
                _
              $region54: #{tpu_custom_call.1} parent=27 // pred_fallthru
                _
            $region28: #{tpu_custom_call.1} parent=23 // pred_fallthru
              _
            // Predicated region
            $region29: #{tpu_custom_call.1} parent=23 // pred_check
              _
            $region30: #{tpu_custom_call.1} parent=23 // pred_check_branch
              %115 = sbr.rel target = $region32
            $region31: #{tpu_custom_call.1} parent=23 // pred_region
              %s117 = ssub.s32 256, 1
              loop: start=0, step=1, limit=1
              $region33: #{tpu_custom_call.1} parent=31 // loop_pre_header
                _
              $region34: #{tpu_custom_call.1} parent=31 // loop_header
                %s119 = sphi 0, %s123
                %p120 = scmp.ge.s32.totalorder %s119, 1
                %s124 = sphi %s109, %s109
                %s125 = sphi %s103, %s103
              $region35: #{tpu_custom_call.1} parent=31 // loop_header_branch
                %122 = sbr.rel (%p120) target = $region39
              $region36: #{tpu_custom_call.1} parent=31 // loop_body
                %v126 = vld [vmem:[%s124] sm:%s117]
                %127 = vst [vmem:[%s125] sm:%s117] %v126
                %v128 = vld [vmem:[%s124 + $0x8] sm:%s117]
                %129 = vst [vmem:[%s125 + $0x8] sm:%s117] %v128
                %v130 = vld [vmem:[%s124 + $0x10] sm:%s117]
                %131 = vst [vmem:[%s125 + $0x10] sm:%s117] %v130
                %v132 = vld [vmem:[%s124 + $0x18] sm:%s117]
                %133 = vst [vmem:[%s125 + $0x18] sm:%s117] %v132
                %v134 = vld [vmem:[%s124 + $0x20] sm:%s117]
                %135 = vst [vmem:[%s125 + $0x20] sm:%s117] %v134
                %v136 = vld [vmem:[%s124 + $0x28] sm:%s117]
                %137 = vst [vmem:[%s125 + $0x28] sm:%s117] %v136
                %v138 = vld [vmem:[%s124 + $0x30] sm:%s117]
                %139 = vst [vmem:[%s125 + $0x30] sm:%s117] %v138
                %v140 = vld [vmem:[%s124 + $0x38] sm:%s117]
                %141 = vst [vmem:[%s125 + $0x38] sm:%s117] %v140
                %v142 = vld [vmem:[%s124 + $0x40] sm:%s117]
                %143 = vst [vmem:[%s125 + $0x40] sm:%s117] %v142
                %v144 = vld [vmem:[%s124 + $0x48] sm:%s117]
                %145 = vst [vmem:[%s125 + $0x48] sm:%s117] %v144
                %v146 = vld [vmem:[%s124 + $0x50] sm:%s117]
                %147 = vst [vmem:[%s125 + $0x50] sm:%s117] %v146
                %v148 = vld [vmem:[%s124 + $0x58] sm:%s117]
                %149 = vst [vmem:[%s125 + $0x58] sm:%s117] %v148
                %v150 = vld [vmem:[%s124 + $0x60] sm:%s117]
                %151 = vst [vmem:[%s125 + $0x60] sm:%s117] %v150
                %v152 = vld [vmem:[%s124 + $0x68] sm:%s117]
                %153 = vst [vmem:[%s125 + $0x68] sm:%s117] %v152
                %v154 = vld [vmem:[%s124 + $0x70] sm:%s117]
                %155 = vst [vmem:[%s125 + $0x70] sm:%s117] %v154
                %v156 = vld [vmem:[%s124 + $0x78] sm:%s117]
                %157 = vst [vmem:[%s125 + $0x78] sm:%s117] %v156
                %v158 = vld [vmem:[%s124 + $0x100] sm:%s117]
                %159 = vst [vmem:[%s125 + $0x80] sm:%s117] %v158
                %v160 = vld [vmem:[%s124 + $0x108] sm:%s117]
                %161 = vst [vmem:[%s125 + $0x88] sm:%s117] %v160
                %v162 = vld [vmem:[%s124 + $0x110] sm:%s117]
                %163 = vst [vmem:[%s125 + $0x90] sm:%s117] %v162
                %v164 = vld [vmem:[%s124 + $0x118] sm:%s117]
                %165 = vst [vmem:[%s125 + $0x98] sm:%s117] %v164
                %v166 = vld [vmem:[%s124 + $0x120] sm:%s117]
                %167 = vst [vmem:[%s125 + $0xa0] sm:%s117] %v166
                %v168 = vld [vmem:[%s124 + $0x128] sm:%s117]
                %169 = vst [vmem:[%s125 + $0xa8] sm:%s117] %v168
                %v170 = vld [vmem:[%s124 + $0x130] sm:%s117]
                %171 = vst [vmem:[%s125 + $0xb0] sm:%s117] %v170
                %v172 = vld [vmem:[%s124 + $0x138] sm:%s117]
                %173 = vst [vmem:[%s125 + $0xb8] sm:%s117] %v172
                %v174 = vld [vmem:[%s124 + $0x140] sm:%s117]
                %175 = vst [vmem:[%s125 + $0xc0] sm:%s117] %v174
                %v176 = vld [vmem:[%s124 + $0x148] sm:%s117]
                %177 = vst [vmem:[%s125 + $0xc8] sm:%s117] %v176
                %v178 = vld [vmem:[%s124 + $0x150] sm:%s117]
                %179 = vst [vmem:[%s125 + $0xd0] sm:%s117] %v178
                %v180 = vld [vmem:[%s124 + $0x158] sm:%s117]
                %181 = vst [vmem:[%s125 + $0xd8] sm:%s117] %v180
                %v182 = vld [vmem:[%s124 + $0x160] sm:%s117]
                %183 = vst [vmem:[%s125 + $0xe0] sm:%s117] %v182
                %v184 = vld [vmem:[%s124 + $0x168] sm:%s117]
                %185 = vst [vmem:[%s125 + $0xe8] sm:%s117] %v184
                %v186 = vld [vmem:[%s124 + $0x170] sm:%s117]
                %187 = vst [vmem:[%s125 + $0xf0] sm:%s117] %v186
                %v188 = vld [vmem:[%s124 + $0x178] sm:%s117]
                %189 = vst [vmem:[%s125 + $0xf8] sm:%s117] %v188
                %v190 = vld [vmem:[%s124 + $0x200] sm:%s117]
                %191 = vst [vmem:[%s125 + $0x100] sm:%s117] %v190
                %v192 = vld [vmem:[%s124 + $0x208] sm:%s117]
                %193 = vst [vmem:[%s125 + $0x108] sm:%s117] %v192
                %v194 = vld [vmem:[%s124 + $0x210] sm:%s117]
                %195 = vst [vmem:[%s125 + $0x110] sm:%s117] %v194
                %v196 = vld [vmem:[%s124 + $0x218] sm:%s117]
                %197 = vst [vmem:[%s125 + $0x118] sm:%s117] %v196
                %v198 = vld [vmem:[%s124 + $0x220] sm:%s117]
                %199 = vst [vmem:[%s125 + $0x120] sm:%s117] %v198
                %v200 = vld [vmem:[%s124 + $0x228] sm:%s117]
                %201 = vst [vmem:[%s125 + $0x128] sm:%s117] %v200
                %v202 = vld [vmem:[%s124 + $0x230] sm:%s117]
                %203 = vst [vmem:[%s125 + $0x130] sm:%s117] %v202
                %v204 = vld [vmem:[%s124 + $0x238] sm:%s117]
                %205 = vst [vmem:[%s125 + $0x138] sm:%s117] %v204
                %v206 = vld [vmem:[%s124 + $0x240] sm:%s117]
                %207 = vst [vmem:[%s125 + $0x140] sm:%s117] %v206
                %v208 = vld [vmem:[%s124 + $0x248] sm:%s117]
                %209 = vst [vmem:[%s125 + $0x148] sm:%s117] %v208
                %v210 = vld [vmem:[%s124 + $0x250] sm:%s117]
                %211 = vst [vmem:[%s125 + $0x150] sm:%s117] %v210
                %v212 = vld [vmem:[%s124 + $0x258] sm:%s117]
                %213 = vst [vmem:[%s125 + $0x158] sm:%s117] %v212
                %v214 = vld [vmem:[%s124 + $0x260] sm:%s117]
                %215 = vst [vmem:[%s125 + $0x160] sm:%s117] %v214
                %v216 = vld [vmem:[%s124 + $0x268] sm:%s117]
                %217 = vst [vmem:[%s125 + $0x168] sm:%s117] %v216
                %v218 = vld [vmem:[%s124 + $0x270] sm:%s117]
                %219 = vst [vmem:[%s125 + $0x170] sm:%s117] %v218
                %v220 = vld [vmem:[%s124 + $0x278] sm:%s117]
                %221 = vst [vmem:[%s125 + $0x178] sm:%s117] %v220
                %v222 = vld [vmem:[%s124 + $0x300] sm:%s117]
                %223 = vst [vmem:[%s125 + $0x180] sm:%s117] %v222
                %v224 = vld [vmem:[%s124 + $0x308] sm:%s117]
                %225 = vst [vmem:[%s125 + $0x188] sm:%s117] %v224
                %v226 = vld [vmem:[%s124 + $0x310] sm:%s117]
                %227 = vst [vmem:[%s125 + $0x190] sm:%s117] %v226
                %v228 = vld [vmem:[%s124 + $0x318] sm:%s117]
                %229 = vst [vmem:[%s125 + $0x198] sm:%s117] %v228
                %v230 = vld [vmem:[%s124 + $0x320] sm:%s117]
                %231 = vst [vmem:[%s125 + $0x1a0] sm:%s117] %v230
                %v232 = vld [vmem:[%s124 + $0x328] sm:%s117]
                %233 = vst [vmem:[%s125 + $0x1a8] sm:%s117] %v232
                %v234 = vld [vmem:[%s124 + $0x330] sm:%s117]
                %235 = vst [vmem:[%s125 + $0x1b0] sm:%s117] %v234
                %v236 = vld [vmem:[%s124 + $0x338] sm:%s117]
                %237 = vst [vmem:[%s125 + $0x1b8] sm:%s117] %v236
                %v238 = vld [vmem:[%s124 + $0x340] sm:%s117]
                %239 = vst [vmem:[%s125 + $0x1c0] sm:%s117] %v238
                %v240 = vld [vmem:[%s124 + $0x348] sm:%s117]
                %241 = vst [vmem:[%s125 + $0x1c8] sm:%s117] %v240
                %v242 = vld [vmem:[%s124 + $0x350] sm:%s117]
                %243 = vst [vmem:[%s125 + $0x1d0] sm:%s117] %v242
                %v244 = vld [vmem:[%s124 + $0x358] sm:%s117]
                %245 = vst [vmem:[%s125 + $0x1d8] sm:%s117] %v244
                %v246 = vld [vmem:[%s124 + $0x360] sm:%s117]
                %247 = vst [vmem:[%s125 + $0x1e0] sm:%s117] %v246
                %v248 = vld [vmem:[%s124 + $0x368] sm:%s117]
                %249 = vst [vmem:[%s125 + $0x1e8] sm:%s117] %v248
                %v250 = vld [vmem:[%s124 + $0x370] sm:%s117]
                %251 = vst [vmem:[%s125 + $0x1f0] sm:%s117] %v250
                %v252 = vld [vmem:[%s124 + $0x378] sm:%s117]
                %253 = vst [vmem:[%s125 + $0x1f8] sm:%s117] %v252
                %v254 = vld [vmem:[%s124 + $0x400] sm:%s117]
                %255 = vst [vmem:[%s125 + $0x200] sm:%s117] %v254
                %v256 = vld [vmem:[%s124 + $0x408] sm:%s117]
                %257 = vst [vmem:[%s125 + $0x208] sm:%s117] %v256
                %v258 = vld [vmem:[%s124 + $0x410] sm:%s117]
                %259 = vst [vmem:[%s125 + $0x210] sm:%s117] %v258
                %v260 = vld [vmem:[%s124 + $0x418] sm:%s117]
                %261 = vst [vmem:[%s125 + $0x218] sm:%s117] %v260
                %v262 = vld [vmem:[%s124 + $0x420] sm:%s117]
                %263 = vst [vmem:[%s125 + $0x220] sm:%s117] %v262
                %v264 = vld [vmem:[%s124 + $0x428] sm:%s117]
                %265 = vst [vmem:[%s125 + $0x228] sm:%s117] %v264
                %v266 = vld [vmem:[%s124 + $0x430] sm:%s117]
                %267 = vst [vmem:[%s125 + $0x230] sm:%s117] %v266
                %v268 = vld [vmem:[%s124 + $0x438] sm:%s117]
                %269 = vst [vmem:[%s125 + $0x238] sm:%s117] %v268
                %v270 = vld [vmem:[%s124 + $0x440] sm:%s117]
                %271 = vst [vmem:[%s125 + $0x240] sm:%s117] %v270
                %v272 = vld [vmem:[%s124 + $0x448] sm:%s117]
                %273 = vst [vmem:[%s125 + $0x248] sm:%s117] %v272
                %v274 = vld [vmem:[%s124 + $0x450] sm:%s117]
                %275 = vst [vmem:[%s125 + $0x250] sm:%s117] %v274
                %v276 = vld [vmem:[%s124 + $0x458] sm:%s117]
                %277 = vst [vmem:[%s125 + $0x258] sm:%s117] %v276
                %v278 = vld [vmem:[%s124 + $0x460] sm:%s117]
                %279 = vst [vmem:[%s125 + $0x260] sm:%s117] %v278
                %v280 = vld [vmem:[%s124 + $0x468] sm:%s117]
                %281 = vst [vmem:[%s125 + $0x268] sm:%s117] %v280
                %v282 = vld [vmem:[%s124 + $0x470] sm:%s117]
                %283 = vst [vmem:[%s125 + $0x270] sm:%s117] %v282
                %v284 = vld [vmem:[%s124 + $0x478] sm:%s117]
                %285 = vst [vmem:[%s125 + $0x278] sm:%s117] %v284
                %v286 = vld [vmem:[%s124 + $0x500] sm:%s117]
                %287 = vst [vmem:[%s125 + $0x280] sm:%s117] %v286
                %v288 = vld [vmem:[%s124 + $0x508] sm:%s117]
                %289 = vst [vmem:[%s125 + $0x288] sm:%s117] %v288
                %v290 = vld [vmem:[%s124 + $0x510] sm:%s117]
                %291 = vst [vmem:[%s125 + $0x290] sm:%s117] %v290
                %v292 = vld [vmem:[%s124 + $0x518] sm:%s117]
                %293 = vst [vmem:[%s125 + $0x298] sm:%s117] %v292
                %v294 = vld [vmem:[%s124 + $0x520] sm:%s117]
                %295 = vst [vmem:[%s125 + $0x2a0] sm:%s117] %v294
                %v296 = vld [vmem:[%s124 + $0x528] sm:%s117]
                %297 = vst [vmem:[%s125 + $0x2a8] sm:%s117] %v296
                %v298 = vld [vmem:[%s124 + $0x530] sm:%s117]
                %299 = vst [vmem:[%s125 + $0x2b0] sm:%s117] %v298
                %v300 = vld [vmem:[%s124 + $0x538] sm:%s117]
                %301 = vst [vmem:[%s125 + $0x2b8] sm:%s117] %v300
                %v302 = vld [vmem:[%s124 + $0x540] sm:%s117]
                %303 = vst [vmem:[%s125 + $0x2c0] sm:%s117] %v302
                %v304 = vld [vmem:[%s124 + $0x548] sm:%s117]
                %305 = vst [vmem:[%s125 + $0x2c8] sm:%s117] %v304
                %v306 = vld [vmem:[%s124 + $0x550] sm:%s117]
                %307 = vst [vmem:[%s125 + $0x2d0] sm:%s117] %v306
                %v308 = vld [vmem:[%s124 + $0x558] sm:%s117]
                %309 = vst [vmem:[%s125 + $0x2d8] sm:%s117] %v308
                %v310 = vld [vmem:[%s124 + $0x560] sm:%s117]
                %311 = vst [vmem:[%s125 + $0x2e0] sm:%s117] %v310
                %v312 = vld [vmem:[%s124 + $0x568] sm:%s117]
                %313 = vst [vmem:[%s125 + $0x2e8] sm:%s117] %v312
                %v314 = vld [vmem:[%s124 + $0x570] sm:%s117]
                %315 = vst [vmem:[%s125 + $0x2f0] sm:%s117] %v314
                %v316 = vld [vmem:[%s124 + $0x578] sm:%s117]
                %317 = vst [vmem:[%s125 + $0x2f8] sm:%s117] %v316
                %v318 = vld [vmem:[%s124 + $0x600] sm:%s117]
                %319 = vst [vmem:[%s125 + $0x300] sm:%s117] %v318
                %v320 = vld [vmem:[%s124 + $0x608] sm:%s117]
                %321 = vst [vmem:[%s125 + $0x308] sm:%s117] %v320
                %v322 = vld [vmem:[%s124 + $0x610] sm:%s117]
                %323 = vst [vmem:[%s125 + $0x310] sm:%s117] %v322
                %v324 = vld [vmem:[%s124 + $0x618] sm:%s117]
                %325 = vst [vmem:[%s125 + $0x318] sm:%s117] %v324
                %v326 = vld [vmem:[%s124 + $0x620] sm:%s117]
                %327 = vst [vmem:[%s125 + $0x320] sm:%s117] %v326
                %v328 = vld [vmem:[%s124 + $0x628] sm:%s117]
                %329 = vst [vmem:[%s125 + $0x328] sm:%s117] %v328
                %v330 = vld [vmem:[%s124 + $0x630] sm:%s117]
                %331 = vst [vmem:[%s125 + $0x330] sm:%s117] %v330
                %v332 = vld [vmem:[%s124 + $0x638] sm:%s117]
                %333 = vst [vmem:[%s125 + $0x338] sm:%s117] %v332
                %v334 = vld [vmem:[%s124 + $0x640] sm:%s117]
                %335 = vst [vmem:[%s125 + $0x340] sm:%s117] %v334
                %v336 = vld [vmem:[%s124 + $0x648] sm:%s117]
                %337 = vst [vmem:[%s125 + $0x348] sm:%s117] %v336
                %v338 = vld [vmem:[%s124 + $0x650] sm:%s117]
                %339 = vst [vmem:[%s125 + $0x350] sm:%s117] %v338
                %v340 = vld [vmem:[%s124 + $0x658] sm:%s117]
                %341 = vst [vmem:[%s125 + $0x358] sm:%s117] %v340
                %v342 = vld [vmem:[%s124 + $0x660] sm:%s117]
                %343 = vst [vmem:[%s125 + $0x360] sm:%s117] %v342
                %v344 = vld [vmem:[%s124 + $0x668] sm:%s117]
                %345 = vst [vmem:[%s125 + $0x368] sm:%s117] %v344
                %v346 = vld [vmem:[%s124 + $0x670] sm:%s117]
                %347 = vst [vmem:[%s125 + $0x370] sm:%s117] %v346
                %v348 = vld [vmem:[%s124 + $0x678] sm:%s117]
                %349 = vst [vmem:[%s125 + $0x378] sm:%s117] %v348
                %v350 = vld [vmem:[%s124 + $0x700] sm:%s117]
                %351 = vst [vmem:[%s125 + $0x380] sm:%s117] %v350
                %v352 = vld [vmem:[%s124 + $0x708] sm:%s117]
                %353 = vst [vmem:[%s125 + $0x388] sm:%s117] %v352
                %v354 = vld [vmem:[%s124 + $0x710] sm:%s117]
                %355 = vst [vmem:[%s125 + $0x390] sm:%s117] %v354
                %v356 = vld [vmem:[%s124 + $0x718] sm:%s117]
                %357 = vst [vmem:[%s125 + $0x398] sm:%s117] %v356
                %v358 = vld [vmem:[%s124 + $0x720] sm:%s117]
                %359 = vst [vmem:[%s125 + $0x3a0] sm:%s117] %v358
                %v360 = vld [vmem:[%s124 + $0x728] sm:%s117]
                %361 = vst [vmem:[%s125 + $0x3a8] sm:%s117] %v360
                %v362 = vld [vmem:[%s124 + $0x730] sm:%s117]
                %363 = vst [vmem:[%s125 + $0x3b0] sm:%s117] %v362
                %v364 = vld [vmem:[%s124 + $0x738] sm:%s117]
                %365 = vst [vmem:[%s125 + $0x3b8] sm:%s117] %v364
                %v366 = vld [vmem:[%s124 + $0x740] sm:%s117]
                %367 = vst [vmem:[%s125 + $0x3c0] sm:%s117] %v366
                %v368 = vld [vmem:[%s124 + $0x748] sm:%s117]
                %369 = vst [vmem:[%s125 + $0x3c8] sm:%s117] %v368
                %v370 = vld [vmem:[%s124 + $0x750] sm:%s117]
                %371 = vst [vmem:[%s125 + $0x3d0] sm:%s117] %v370
                %v372 = vld [vmem:[%s124 + $0x758] sm:%s117]
                %373 = vst [vmem:[%s125 + $0x3d8] sm:%s117] %v372
                %v374 = vld [vmem:[%s124 + $0x760] sm:%s117]
                %375 = vst [vmem:[%s125 + $0x3e0] sm:%s117] %v374
                %v376 = vld [vmem:[%s124 + $0x768] sm:%s117]
                %377 = vst [vmem:[%s125 + $0x3e8] sm:%s117] %v376
                %v378 = vld [vmem:[%s124 + $0x770] sm:%s117]
                %379 = vst [vmem:[%s125 + $0x3f0] sm:%s117] %v378
                %v380 = vld [vmem:[%s124 + $0x778] sm:%s117]
                %381 = vst [vmem:[%s125 + $0x3f8] sm:%s117] %v380
              $region37: #{tpu_custom_call.1} parent=31 // loop_footer
                %s123 = sadd.s32 1, %s119
              $region38: #{tpu_custom_call.1} parent=31 // loop_footer_branch
                %118 = sbr.rel target = $region34
              $region39: #{tpu_custom_call.1} parent=31 // loop_exit
                _
            $region32: #{tpu_custom_call.1} parent=23 // pred_fallthru
              _
          $region24: #{tpu_custom_call.1} parent=19 // pred_fallthru
            _
          %650 = vnop
        $region20: #{tpu_custom_call.1} parent=15 // pred_fallthru
          _
      $region16: #{tpu_custom_call.1} parent=5 // pred_fallthru
        _
      %p651 = scmp.le.s32.totalorder 1, %s10
      %p652 = scmp.lt.s32.totalorder %s10, 3
      %p653 = pnand %p651, %p652
      %p654 = pneg %p653
      // Predicated region
      $region55: #{tpu_custom_call.1} parent=5 // pred_check
        _
      $region56: #{tpu_custom_call.1} parent=5 // pred_check_branch
        %656 = sbr.rel (%p653) target = $region58
      $region57: #{tpu_custom_call.1} parent=5 // pred_region
        %s657 = ssub.s32 %s10, 1
        %s658 = sand.u32 %s37, 1
        %s659 = sand.u32 %s37, 1
        %s660 = smul.addr %s659, 1024
        %s661 = scalar_lea.vmem [#allocation2], %s660
        // Predicated region
        $region59: #{tpu_custom_call.1} parent=57 // pred_check
          %p662 = pneg %p50
        $region60: #{tpu_custom_call.1} parent=57 // pred_check_branch
          %664 = sbr.rel (%p662) target = $region62
        $region61: #{tpu_custom_call.1} parent=57 // pred_region
          _
        $region62: #{tpu_custom_call.1} parent=57 // pred_fallthru
          _
        %s665 = sand.u32 %s37, 1
        %s666 = sand.u32 %s37, 1
        %s667 = smul.addr %s666, 1024
        %s668 = scalar_lea.vmem [#allocation2], %s667
        %p669 = pneg %p50
        %p670 = pneg %p47
        %p671 = pneg %p78
        %p672 = pneg %p75
        %s673 = sand.u32 %s65, 1
        %s674 = scalar_lea.sflag [#allocation4], %s673
        %s675 = sand.u32 %s65, 1
        %s676 = smul.addr %s675, 64
        %s677 = scalar_lea.vmem [#allocation3], %s676
        %s678 = smul.u32 8, %s20
        %s679 = smul.u32 16, %s19
        %s680 = smul.u32 8, %s20
        %v681 = vld [vmem:[%s661] sm:$0xff]
        %v682 = vld [vmem:[%s661 + $0x8] sm:$0xff]
        %v683 = vld [vmem:[%s661 + $0x10] sm:$0xff]
        %v684 = vld [vmem:[%s661 + $0x18] sm:$0xff]
        %v685 = vld [vmem:[%s661 + $0x20] sm:$0xff]
        %v686 = vld [vmem:[%s661 + $0x28] sm:$0xff]
        %v687 = vld [vmem:[%s661 + $0x30] sm:$0xff]
        %v688 = vld [vmem:[%s661 + $0x38] sm:$0xff]
        %v689 = vld [vmem:[%s661 + $0x40] sm:$0xff]
        %v690 = vld [vmem:[%s661 + $0x48] sm:$0xff]
        %v691 = vld [vmem:[%s661 + $0x50] sm:$0xff]
        %v692 = vld [vmem:[%s661 + $0x58] sm:$0xff]
        %v693 = vld [vmem:[%s661 + $0x60] sm:$0xff]
        %v694 = vld [vmem:[%s661 + $0x68] sm:$0xff]
        %v695 = vld [vmem:[%s661 + $0x70] sm:$0xff]
        %v696 = vld [vmem:[%s661 + $0x78] sm:$0xff]
        %v697 = vld [vmem:[%s661 + $0x80] sm:$0xff]
        %v698 = vld [vmem:[%s661 + $0x88] sm:$0xff]
        %v699 = vld [vmem:[%s661 + $0x90] sm:$0xff]
        %v700 = vld [vmem:[%s661 + $0x98] sm:$0xff]
        %v701 = vld [vmem:[%s661 + $0xa0] sm:$0xff]
        %v702 = vld [vmem:[%s661 + $0xa8] sm:$0xff]
        %v703 = vld [vmem:[%s661 + $0xb0] sm:$0xff]
        %v704 = vld [vmem:[%s661 + $0xb8] sm:$0xff]
        %v705 = vld [vmem:[%s661 + $0xc0] sm:$0xff]
        %v706 = vld [vmem:[%s661 + $0xc8] sm:$0xff]
        %v707 = vld [vmem:[%s661 + $0xd0] sm:$0xff]
        %v708 = vld [vmem:[%s661 + $0xd8] sm:$0xff]
        %v709 = vld [vmem:[%s661 + $0xe0] sm:$0xff]
        %v710 = vld [vmem:[%s661 + $0xe8] sm:$0xff]
        %v711 = vld [vmem:[%s661 + $0xf0] sm:$0xff]
        %v712 = vld [vmem:[%s661 + $0xf8] sm:$0xff]
        %v713 = vld [vmem:[%s661 + $0x100] sm:$0xff]
        %v714 = vld [vmem:[%s661 + $0x108] sm:$0xff]
        %v715 = vld [vmem:[%s661 + $0x110] sm:$0xff]
        %v716 = vld [vmem:[%s661 + $0x118] sm:$0xff]
        %v717 = vld [vmem:[%s661 + $0x120] sm:$0xff]
        %v718 = vld [vmem:[%s661 + $0x128] sm:$0xff]
        %v719 = vld [vmem:[%s661 + $0x130] sm:$0xff]
        %v720 = vld [vmem:[%s661 + $0x138] sm:$0xff]
        %v721 = vld [vmem:[%s661 + $0x140] sm:$0xff]
        %v722 = vld [vmem:[%s661 + $0x148] sm:$0xff]
        %v723 = vld [vmem:[%s661 + $0x150] sm:$0xff]
        %v724 = vld [vmem:[%s661 + $0x158] sm:$0xff]
        %v725 = vld [vmem:[%s661 + $0x160] sm:$0xff]
        %v726 = vld [vmem:[%s661 + $0x168] sm:$0xff]
        %v727 = vld [vmem:[%s661 + $0x170] sm:$0xff]
        %v728 = vld [vmem:[%s661 + $0x178] sm:$0xff]
        %v729 = vld [vmem:[%s661 + $0x180] sm:$0xff]
        %v730 = vld [vmem:[%s661 + $0x188] sm:$0xff]
        %v731 = vld [vmem:[%s661 + $0x190] sm:$0xff]
        %v732 = vld [vmem:[%s661 + $0x198] sm:$0xff]
        %v733 = vld [vmem:[%s661 + $0x1a0] sm:$0xff]
        %v734 = vld [vmem:[%s661 + $0x1a8] sm:$0xff]
        %v735 = vld [vmem:[%s661 + $0x1b0] sm:$0xff]
        %v736 = vld [vmem:[%s661 + $0x1b8] sm:$0xff]
        %v737 = vld [vmem:[%s661 + $0x1c0] sm:$0xff]
        %v738 = vld [vmem:[%s661 + $0x1c8] sm:$0xff]
        %v739 = vld [vmem:[%s661 + $0x1d0] sm:$0xff]
        %v740 = vld [vmem:[%s661 + $0x1d8] sm:$0xff]
        %v741 = vld [vmem:[%s661 + $0x1e0] sm:$0xff]
        %v742 = vld [vmem:[%s661 + $0x1e8] sm:$0xff]
        %v743 = vld [vmem:[%s661 + $0x1f0] sm:$0xff]
        %v744 = vld [vmem:[%s661 + $0x1f8] sm:$0xff]
        %v745 = vld [vmem:[%s661 + $0x200] sm:$0xff]
        %v746 = vld [vmem:[%s661 + $0x208] sm:$0xff]
        %v747 = vld [vmem:[%s661 + $0x210] sm:$0xff]
        %v748 = vld [vmem:[%s661 + $0x218] sm:$0xff]
        %v749 = vld [vmem:[%s661 + $0x220] sm:$0xff]
        %v750 = vld [vmem:[%s661 + $0x228] sm:$0xff]
        %v751 = vld [vmem:[%s661 + $0x230] sm:$0xff]
        %v752 = vld [vmem:[%s661 + $0x238] sm:$0xff]
        %v753 = vld [vmem:[%s661 + $0x240] sm:$0xff]
        %v754 = vld [vmem:[%s661 + $0x248] sm:$0xff]
        %v755 = vld [vmem:[%s661 + $0x250] sm:$0xff]
        %v756 = vld [vmem:[%s661 + $0x258] sm:$0xff]
        %v757 = vld [vmem:[%s661 + $0x260] sm:$0xff]
        %v758 = vld [vmem:[%s661 + $0x268] sm:$0xff]
        %v759 = vld [vmem:[%s661 + $0x270] sm:$0xff]
        %v760 = vld [vmem:[%s661 + $0x278] sm:$0xff]
        %v761 = vld [vmem:[%s661 + $0x280] sm:$0xff]
        %v762 = vld [vmem:[%s661 + $0x288] sm:$0xff]
        %v763 = vld [vmem:[%s661 + $0x290] sm:$0xff]
        %v764 = vld [vmem:[%s661 + $0x298] sm:$0xff]
        %v765 = vld [vmem:[%s661 + $0x2a0] sm:$0xff]
        %v766 = vld [vmem:[%s661 + $0x2a8] sm:$0xff]
        %v767 = vld [vmem:[%s661 + $0x2b0] sm:$0xff]
        %v768 = vld [vmem:[%s661 + $0x2b8] sm:$0xff]
        %v769 = vld [vmem:[%s661 + $0x2c0] sm:$0xff]
        %v770 = vld [vmem:[%s661 + $0x2c8] sm:$0xff]
        %v771 = vld [vmem:[%s661 + $0x2d0] sm:$0xff]
        %v772 = vld [vmem:[%s661 + $0x2d8] sm:$0xff]
        %v773 = vld [vmem:[%s661 + $0x2e0] sm:$0xff]
        %v774 = vld [vmem:[%s661 + $0x2e8] sm:$0xff]
        %v775 = vld [vmem:[%s661 + $0x2f0] sm:$0xff]
        %v776 = vld [vmem:[%s661 + $0x2f8] sm:$0xff]
        %v777 = vld [vmem:[%s661 + $0x300] sm:$0xff]
        %v778 = vld [vmem:[%s661 + $0x308] sm:$0xff]
        %v779 = vld [vmem:[%s661 + $0x310] sm:$0xff]
        %v780 = vld [vmem:[%s661 + $0x318] sm:$0xff]
        %v781 = vld [vmem:[%s661 + $0x320] sm:$0xff]
        %v782 = vld [vmem:[%s661 + $0x328] sm:$0xff]
        %v783 = vld [vmem:[%s661 + $0x330] sm:$0xff]
        %v784 = vld [vmem:[%s661 + $0x338] sm:$0xff]
        %v785 = vld [vmem:[%s661 + $0x340] sm:$0xff]
        %v786 = vld [vmem:[%s661 + $0x348] sm:$0xff]
        %v787 = vld [vmem:[%s661 + $0x350] sm:$0xff]
        %v788 = vld [vmem:[%s661 + $0x358] sm:$0xff]
        %v789 = vld [vmem:[%s661 + $0x360] sm:$0xff]
        %v790 = vld [vmem:[%s661 + $0x368] sm:$0xff]
        %v791 = vld [vmem:[%s661 + $0x370] sm:$0xff]
        %v792 = vld [vmem:[%s661 + $0x378] sm:$0xff]
        %v793 = vld [vmem:[%s661 + $0x380] sm:$0xff]
        %v794 = vld [vmem:[%s661 + $0x388] sm:$0xff]
        %v795 = vld [vmem:[%s661 + $0x390] sm:$0xff]
        %v796 = vld [vmem:[%s661 + $0x398] sm:$0xff]
        %v797 = vld [vmem:[%s661 + $0x3a0] sm:$0xff]
        %v798 = vld [vmem:[%s661 + $0x3a8] sm:$0xff]
        %v799 = vld [vmem:[%s661 + $0x3b0] sm:$0xff]
        %v800 = vld [vmem:[%s661 + $0x3b8] sm:$0xff]
        %v801 = vld [vmem:[%s661 + $0x3c0] sm:$0xff]
        %v802 = vld [vmem:[%s661 + $0x3c8] sm:$0xff]
        %v803 = vld [vmem:[%s661 + $0x3d0] sm:$0xff]
        %v804 = vld [vmem:[%s661 + $0x3d8] sm:$0xff]
        %v805 = vld [vmem:[%s661 + $0x3e0] sm:$0xff]
        %v806 = vld [vmem:[%s661 + $0x3e8] sm:$0xff]
        %v807 = vld [vmem:[%s661 + $0x3f0] sm:$0xff]
        %v808 = vld [vmem:[%s661 + $0x3f8] sm:$0xff]
        %809 = vxpose.xlu0.b32.start [1/16] %v681, 128
        %810 = vxpose.xlu0.b32.cont [2/16] %v682, 128
        %811 = vxpose.xlu0.b32.cont [3/16] %v683, 128
        %812 = vxpose.xlu0.b32.cont [4/16] %v684, 128
        %813 = vxpose.xlu0.b32.cont [5/16] %v685, 128
        %814 = vxpose.xlu0.b32.cont [6/16] %v686, 128
        %815 = vxpose.xlu0.b32.cont [7/16] %v687, 128
        %816 = vxpose.xlu0.b32.cont [8/16] %v688, 128
        %817 = vxpose.xlu0.b32.cont [9/16] %v689, 128
        %818 = vxpose.xlu0.b32.cont [10/16] %v690, 128
        %819 = vxpose.xlu0.b32.cont [11/16] %v691, 128
        %820 = vxpose.xlu0.b32.cont [12/16] %v692, 128
        %821 = vxpose.xlu0.b32.cont [13/16] %v693, 128
        %822 = vxpose.xlu0.b32.cont [14/16] %v694, 128
        %823 = vxpose.xlu0.b32.cont [15/16] %v695, 128
        %824 = vxpose.xlu0.b32.end [16/16] %v696, 128
        %v825 = vpop.trf.xlu0
        %v826 = vpop.trf.xlu0
        %v827 = vpop.trf.xlu0
        %v828 = vpop.trf.xlu0
        %v829 = vpop.trf.xlu0
        %v830 = vpop.trf.xlu0
        %v831 = vpop.trf.xlu0
        %v832 = vpop.trf.xlu0
        %v833 = vpop.trf.xlu0
        %v834 = vpop.trf.xlu0
        %v835 = vpop.trf.xlu0
        %v836 = vpop.trf.xlu0
        %v837 = vpop.trf.xlu0
        %v838 = vpop.trf.xlu0
        %v839 = vpop.trf.xlu0
        %v840 = vpop.trf.xlu0
        %841 = vxpose.xlu0.b32.start [1/16] %v697, 128
        %842 = vxpose.xlu0.b32.cont [2/16] %v698, 128
        %843 = vxpose.xlu0.b32.cont [3/16] %v699, 128
        %844 = vxpose.xlu0.b32.cont [4/16] %v700, 128
        %845 = vxpose.xlu0.b32.cont [5/16] %v701, 128
        %846 = vxpose.xlu0.b32.cont [6/16] %v702, 128
        %847 = vxpose.xlu0.b32.cont [7/16] %v703, 128
        %848 = vxpose.xlu0.b32.cont [8/16] %v704, 128
        %849 = vxpose.xlu0.b32.cont [9/16] %v705, 128
        %850 = vxpose.xlu0.b32.cont [10/16] %v706, 128
        %851 = vxpose.xlu0.b32.cont [11/16] %v707, 128
        %852 = vxpose.xlu0.b32.cont [12/16] %v708, 128
        %853 = vxpose.xlu0.b32.cont [13/16] %v709, 128
        %854 = vxpose.xlu0.b32.cont [14/16] %v710, 128
        %855 = vxpose.xlu0.b32.cont [15/16] %v711, 128
        %856 = vxpose.xlu0.b32.end [16/16] %v712, 128
        %v857 = vpop.trf.xlu0
        %v858 = vpop.trf.xlu0
        %v859 = vpop.trf.xlu0
        %v860 = vpop.trf.xlu0
        %v861 = vpop.trf.xlu0
        %v862 = vpop.trf.xlu0
        %v863 = vpop.trf.xlu0
        %v864 = vpop.trf.xlu0
        %v865 = vpop.trf.xlu0
        %v866 = vpop.trf.xlu0
        %v867 = vpop.trf.xlu0
        %v868 = vpop.trf.xlu0
        %v869 = vpop.trf.xlu0
        %v870 = vpop.trf.xlu0
        %v871 = vpop.trf.xlu0
        %v872 = vpop.trf.xlu0
        %873 = vxpose.xlu0.b32.start [1/16] %v713, 128
        %874 = vxpose.xlu0.b32.cont [2/16] %v714, 128
        %875 = vxpose.xlu0.b32.cont [3/16] %v715, 128
        %876 = vxpose.xlu0.b32.cont [4/16] %v716, 128
        %877 = vxpose.xlu0.b32.cont [5/16] %v717, 128
        %878 = vxpose.xlu0.b32.cont [6/16] %v718, 128
        %879 = vxpose.xlu0.b32.cont [7/16] %v719, 128
        %880 = vxpose.xlu0.b32.cont [8/16] %v720, 128
        %881 = vxpose.xlu0.b32.cont [9/16] %v721, 128
        %882 = vxpose.xlu0.b32.cont [10/16] %v722, 128
        %883 = vxpose.xlu0.b32.cont [11/16] %v723, 128
        %884 = vxpose.xlu0.b32.cont [12/16] %v724, 128
        %885 = vxpose.xlu0.b32.cont [13/16] %v725, 128
        %886 = vxpose.xlu0.b32.cont [14/16] %v726, 128
        %887 = vxpose.xlu0.b32.cont [15/16] %v727, 128
        %888 = vxpose.xlu0.b32.end [16/16] %v728, 128
        %v889 = vpop.trf.xlu0
        %v890 = vpop.trf.xlu0
        %v891 = vpop.trf.xlu0
        %v892 = vpop.trf.xlu0
        %v893 = vpop.trf.xlu0
        %v894 = vpop.trf.xlu0
        %v895 = vpop.trf.xlu0
        %v896 = vpop.trf.xlu0
        %v897 = vpop.trf.xlu0
        %v898 = vpop.trf.xlu0
        %v899 = vpop.trf.xlu0
        %v900 = vpop.trf.xlu0
        %v901 = vpop.trf.xlu0
        %v902 = vpop.trf.xlu0
        %v903 = vpop.trf.xlu0
        %v904 = vpop.trf.xlu0
        %905 = vxpose.xlu0.b32.start [1/16] %v729, 128
        %906 = vxpose.xlu0.b32.cont [2/16] %v730, 128
        %907 = vxpose.xlu0.b32.cont [3/16] %v731, 128
        %908 = vxpose.xlu0.b32.cont [4/16] %v732, 128
        %909 = vxpose.xlu0.b32.cont [5/16] %v733, 128
        %910 = vxpose.xlu0.b32.cont [6/16] %v734, 128
        %911 = vxpose.xlu0.b32.cont [7/16] %v735, 128
        %912 = vxpose.xlu0.b32.cont [8/16] %v736, 128
        %913 = vxpose.xlu0.b32.cont [9/16] %v737, 128
        %914 = vxpose.xlu0.b32.cont [10/16] %v738, 128
        %915 = vxpose.xlu0.b32.cont [11/16] %v739, 128
        %916 = vxpose.xlu0.b32.cont [12/16] %v740, 128
        %917 = vxpose.xlu0.b32.cont [13/16] %v741, 128
        %918 = vxpose.xlu0.b32.cont [14/16] %v742, 128
        %919 = vxpose.xlu0.b32.cont [15/16] %v743, 128
        %920 = vxpose.xlu0.b32.end [16/16] %v744, 128
        %v921 = vpop.trf.xlu0
        %v922 = vpop.trf.xlu0
        %v923 = vpop.trf.xlu0
        %v924 = vpop.trf.xlu0
        %v925 = vpop.trf.xlu0
        %v926 = vpop.trf.xlu0
        %v927 = vpop.trf.xlu0
        %v928 = vpop.trf.xlu0
        %v929 = vpop.trf.xlu0
        %v930 = vpop.trf.xlu0
        %v931 = vpop.trf.xlu0
        %v932 = vpop.trf.xlu0
        %v933 = vpop.trf.xlu0
        %v934 = vpop.trf.xlu0
        %v935 = vpop.trf.xlu0
        %v936 = vpop.trf.xlu0
        %937 = vxpose.xlu0.b32.start [1/16] %v745, 128
        %938 = vxpose.xlu0.b32.cont [2/16] %v746, 128
        %939 = vxpose.xlu0.b32.cont [3/16] %v747, 128
        %940 = vxpose.xlu0.b32.cont [4/16] %v748, 128
        %941 = vxpose.xlu0.b32.cont [5/16] %v749, 128
        %942 = vxpose.xlu0.b32.cont [6/16] %v750, 128
        %943 = vxpose.xlu0.b32.cont [7/16] %v751, 128
        %944 = vxpose.xlu0.b32.cont [8/16] %v752, 128
        %945 = vxpose.xlu0.b32.cont [9/16] %v753, 128
        %946 = vxpose.xlu0.b32.cont [10/16] %v754, 128
        %947 = vxpose.xlu0.b32.cont [11/16] %v755, 128
        %948 = vxpose.xlu0.b32.cont [12/16] %v756, 128
        %949 = vxpose.xlu0.b32.cont [13/16] %v757, 128
        %950 = vxpose.xlu0.b32.cont [14/16] %v758, 128
        %951 = vxpose.xlu0.b32.cont [15/16] %v759, 128
        %952 = vxpose.xlu0.b32.end [16/16] %v760, 128
        %v953 = vpop.trf.xlu0
        %v954 = vpop.trf.xlu0
        %v955 = vpop.trf.xlu0
        %v956 = vpop.trf.xlu0
        %v957 = vpop.trf.xlu0
        %v958 = vpop.trf.xlu0
        %v959 = vpop.trf.xlu0
        %v960 = vpop.trf.xlu0
        %v961 = vpop.trf.xlu0
        %v962 = vpop.trf.xlu0
        %v963 = vpop.trf.xlu0
        %v964 = vpop.trf.xlu0
        %v965 = vpop.trf.xlu0
        %v966 = vpop.trf.xlu0
        %v967 = vpop.trf.xlu0
        %v968 = vpop.trf.xlu0
        %969 = vxpose.xlu0.b32.start [1/16] %v761, 128
        %970 = vxpose.xlu0.b32.cont [2/16] %v762, 128
        %971 = vxpose.xlu0.b32.cont [3/16] %v763, 128
        %972 = vxpose.xlu0.b32.cont [4/16] %v764, 128
        %973 = vxpose.xlu0.b32.cont [5/16] %v765, 128
        %974 = vxpose.xlu0.b32.cont [6/16] %v766, 128
        %975 = vxpose.xlu0.b32.cont [7/16] %v767, 128
        %976 = vxpose.xlu0.b32.cont [8/16] %v768, 128
        %977 = vxpose.xlu0.b32.cont [9/16] %v769, 128
        %978 = vxpose.xlu0.b32.cont [10/16] %v770, 128
        %979 = vxpose.xlu0.b32.cont [11/16] %v771, 128
        %980 = vxpose.xlu0.b32.cont [12/16] %v772, 128
        %981 = vxpose.xlu0.b32.cont [13/16] %v773, 128
        %982 = vxpose.xlu0.b32.cont [14/16] %v774, 128
        %983 = vxpose.xlu0.b32.cont [15/16] %v775, 128
        %984 = vxpose.xlu0.b32.end [16/16] %v776, 128
        %v985 = vpop.trf.xlu0
        %v986 = vpop.trf.xlu0
        %v987 = vpop.trf.xlu0
        %v988 = vpop.trf.xlu0
        %v989 = vpop.trf.xlu0
        %v990 = vpop.trf.xlu0
        %v991 = vpop.trf.xlu0
        %v992 = vpop.trf.xlu0
        %v993 = vpop.trf.xlu0
        %v994 = vpop.trf.xlu0
        %v995 = vpop.trf.xlu0
        %v996 = vpop.trf.xlu0
        %v997 = vpop.trf.xlu0
        %v998 = vpop.trf.xlu0
        %v999 = vpop.trf.xlu0
        %v1000 = vpop.trf.xlu0
        %1001 = vxpose.xlu0.b32.start [1/16] %v777, 128
        %1002 = vxpose.xlu0.b32.cont [2/16] %v778, 128
        %1003 = vxpose.xlu0.b32.cont [3/16] %v779, 128
        %1004 = vxpose.xlu0.b32.cont [4/16] %v780, 128
        %1005 = vxpose.xlu0.b32.cont [5/16] %v781, 128
        %1006 = vxpose.xlu0.b32.cont [6/16] %v782, 128
        %1007 = vxpose.xlu0.b32.cont [7/16] %v783, 128
        %1008 = vxpose.xlu0.b32.cont [8/16] %v784, 128
        %1009 = vxpose.xlu0.b32.cont [9/16] %v785, 128
        %1010 = vxpose.xlu0.b32.cont [10/16] %v786, 128
        %1011 = vxpose.xlu0.b32.cont [11/16] %v787, 128
        %1012 = vxpose.xlu0.b32.cont [12/16] %v788, 128
        %1013 = vxpose.xlu0.b32.cont [13/16] %v789, 128
        %1014 = vxpose.xlu0.b32.cont [14/16] %v790, 128
        %1015 = vxpose.xlu0.b32.cont [15/16] %v791, 128
        %1016 = vxpose.xlu0.b32.end [16/16] %v792, 128
        %v1017 = vpop.trf.xlu0
        %v1018 = vpop.trf.xlu0
        %v1019 = vpop.trf.xlu0
        %v1020 = vpop.trf.xlu0
        %v1021 = vpop.trf.xlu0
        %v1022 = vpop.trf.xlu0
        %v1023 = vpop.trf.xlu0
        %v1024 = vpop.trf.xlu0
        %v1025 = vpop.trf.xlu0
        %v1026 = vpop.trf.xlu0
        %v1027 = vpop.trf.xlu0
        %v1028 = vpop.trf.xlu0
        %v1029 = vpop.trf.xlu0
        %v1030 = vpop.trf.xlu0
        %v1031 = vpop.trf.xlu0
        %v1032 = vpop.trf.xlu0
        %1033 = vxpose.xlu0.b32.start [1/16] %v793, 128
        %1034 = vxpose.xlu0.b32.cont [2/16] %v794, 128
        %1035 = vxpose.xlu0.b32.cont [3/16] %v795, 128
        %1036 = vxpose.xlu0.b32.cont [4/16] %v796, 128
        %1037 = vxpose.xlu0.b32.cont [5/16] %v797, 128
        %1038 = vxpose.xlu0.b32.cont [6/16] %v798, 128
        %1039 = vxpose.xlu0.b32.cont [7/16] %v799, 128
        %1040 = vxpose.xlu0.b32.cont [8/16] %v800, 128
        %1041 = vxpose.xlu0.b32.cont [9/16] %v801, 128
        %1042 = vxpose.xlu0.b32.cont [10/16] %v802, 128
        %1043 = vxpose.xlu0.b32.cont [11/16] %v803, 128
        %1044 = vxpose.xlu0.b32.cont [12/16] %v804, 128
        %1045 = vxpose.xlu0.b32.cont [13/16] %v805, 128
        %1046 = vxpose.xlu0.b32.cont [14/16] %v806, 128
        %1047 = vxpose.xlu0.b32.cont [15/16] %v807, 128
        %1048 = vxpose.xlu0.b32.end [16/16] %v808, 128
        %v1049 = vpop.trf.xlu0
        %v1050 = vpop.trf.xlu0
        %v1051 = vpop.trf.xlu0
        %v1052 = vpop.trf.xlu0
        %v1053 = vpop.trf.xlu0
        %v1054 = vpop.trf.xlu0
        %v1055 = vpop.trf.xlu0
        %v1056 = vpop.trf.xlu0
        %v1057 = vpop.trf.xlu0
        %v1058 = vpop.trf.xlu0
        %v1059 = vpop.trf.xlu0
        %v1060 = vpop.trf.xlu0
        %v1061 = vpop.trf.xlu0
        %v1062 = vpop.trf.xlu0
        %v1063 = vpop.trf.xlu0
        %v1064 = vpop.trf.xlu0
        %1065 = vst [vmem:[%s677] sm:$0xff] %v825
        %1066 = vst [vmem:[%s677 + $0x8] sm:$0xff] %v857
        %1067 = vst [vmem:[%s677 + $0x10] sm:$0xff] %v889
        %1068 = vst [vmem:[%s677 + $0x18] sm:$0xff] %v921
        %1069 = vst [vmem:[%s677 + $0x20] sm:$0xff] %v953
        %1070 = vst [vmem:[%s677 + $0x28] sm:$0xff] %v985
        %1071 = vst [vmem:[%s677 + $0x30] sm:$0xff] %v1017
        %1072 = vst [vmem:[%s677 + $0x38] sm:$0xff] %v1049
        %s1073 = sand.u32 %s65, 1
        %s1074 = scalar_lea.sflag [#allocation4], %s1073
        %s1075 = sand.u32 %s65, 1
        %s1076 = smul.addr %s1075, 64
        %s1077 = scalar_lea.vmem [#allocation3], %s1076
        // Predicated region
        $region63: #{tpu_custom_call.1} parent=57 // pred_check
          %p1078 = pneg %p75
        $region64: #{tpu_custom_call.1} parent=57 // pred_check_branch
          %1080 = sbr.rel (%p1078) target = $region66
        $region65: #{tpu_custom_call.1} parent=57 // pred_region
          %s1081 = smul.u32 8, %s20
          %1083 = vsyncadd %s1074, 0
          %s1084 = smul.addr %s1081, 2
          %s1085 = sadd.s32 %s19, %s1084
          %s1086 = smul.addr %s1085, 8
          %s1087 = scalar_lea.hbm %s1, %s1086
          %s1088 = sshll.u32 %s1077, 4
          %s1089 = int_to_ptr.vmem [resolvable:$true] %s1088
          %s1090 = sshll.u32 %s1087, 4
          %s1091 = int_to_ptr.hbm [resolvable:$true] %s1090
          %1096 = dma.vmem_to_hbm [thread:$0]  %s1089, 1024, %s1091, %s1074, 128, 256, 8
        $region66: #{tpu_custom_call.1} parent=57 // pred_fallthru
          _
      $region58: #{tpu_custom_call.1} parent=5 // pred_fallthru
        _
      %p1097 = scmp.le.s32.totalorder 2, %s10
      // Predicated region
      $region67: #{tpu_custom_call.1} parent=5 // pred_check
        %p1098 = pneg %p1097
      $region68: #{tpu_custom_call.1} parent=5 // pred_check_branch
        %1100 = sbr.rel (%p1098) target = $region70
      $region69: #{tpu_custom_call.1} parent=5 // pred_region
        %s1101 = ssub.s32 %s10, 2
        // Predicated region
        $region71: #{tpu_custom_call.1} parent=69 // pred_check
          %p1102 = pneg %p81
        $region72: #{tpu_custom_call.1} parent=69 // pred_check_branch
          %1104 = sbr.rel (%p1102) target = $region74
        $region73: #{tpu_custom_call.1} parent=69 // pred_region
          %s1105 = sand.u32 %s66, 1
          %s1106 = scalar_lea.sflag [#allocation4], %s1105
          %s1107 = sand.u32 %s66, 1
          %s1108 = smul.addr %s1107, 64
          %s1109 = scalar_lea.vmem [#allocation3], %s1108
          %1111 = dma.done %s1106, 1024
        $region74: #{tpu_custom_call.1} parent=69 // pred_fallthru
          _
      $region70: #{tpu_custom_call.1} parent=5 // pred_fallthru
        _
    $region6: #{tpu_custom_call.1} parent=1 // loop_footer
      %s14 = sadd.s32 1, %s10
    $region7: #{tpu_custom_call.1} parent=1 // loop_footer_branch
      %9 = sbr.rel target = $region3
    $region8: #{tpu_custom_call.1} parent=1 // loop_exit
      _
    %1112 = vsyncpa [#allocation4], 1
    %s1113 = scalar_lea.sflag [#allocation4], 1
    %1114 = vsyncpa %s1113, 1

</llo_original>
